<compile_context>
chip_gen: v5e
topology: v5e:2x2
jax: 0.10.0
libtpu: 0.0.40
codegen_flags: <defaults>
</compile_context>

<pallas_src>
import math

import jax
import jax.numpy as jnp
import numpy as np
from jax.experimental import pallas as pl
from jax.experimental.pallas import tpu as pltpu

HIDDEN = 32
HEADS = 8
DK = HIDDEN // HEADS

# MXU operand dtype.  Set to jnp.bfloat16 on v6e/v7x for ~2-3x MXU throughput
# (accumulation stays f32 via preferred_element_type); kept f32 here so the
# parity test against the exact reference stays tight.
MXU_OPERAND_DTYPE = jnp.float32


def mhatt_pallas(v, k, q, mask_bool, params):
    """v, k, q: [B, S, H] float32; mask_bool: [B, 1, 1, S] bool (True = masked)."""
    B, S, H = q.shape
    assert H % HEADS == 0
    dk = H // HEADS
    scale = 1.0 / math.sqrt(dk)
    f32 = jnp.float32
    H3 = 3 * H
    HW = HEADS * H          # width of the per-head (V_h @ Wm_h^T) slab

    wq, bq, wk, bk, wv, bv, wm, bm = params

    # ---- host-side (free) weight prep ---------------------------------------
    # Fused block-diagonal QKV weight, [in, out] layout, 1/sqrt(dk) folded into Q.
    wqkv = jnp.zeros((H3, H3), f32)
    wqkv = wqkv.at[0:H, 0:H].set(wq.T.astype(f32) * scale)
    wqkv = wqkv.at[H:2 * H, H:2 * H].set(wk.T.astype(f32))
    wqkv = wqkv.at[2 * H:3 * H, 2 * H:3 * H].set(wv.T.astype(f32))
    bqkv = jnp.concatenate([bq * scale, bk, bv]).reshape(1, H3).astype(f32)

    # "Expanded" merge weight: column block h holds Wm^T restricted to head h's
    # input rows, so vp @ wme yields per-head (V_h @ Wm_h^T) slabs and the
    # per-head context matmul folds the merge projection (no concatenate).
    wmT = wm.T.astype(f32)
    wme = jnp.zeros((H, HW), f32)
    for h in range(HEADS):
        wme = wme.at[h * dk:(h + 1) * dk, h * H:(h + 1) * H].set(
            wmT[h * dk:(h + 1) * dk, :])
    bm_r = bm.reshape(1, H).astype(f32)

    # ---- block geometry -------------------------------------------------------
    # tb batches form one attention chunk of tm = tb*S rows; the chunk's score
    # matrix is one dense ~[128,128] slab so each head is two large MXU matmuls
    # instead of tb tiny ones.  Up to 4 chunks are bundled per grid step (<=512
    # rows) to amortize per-step overhead, keeping >= 2 steps when possible.
    tb = max(1, 128 // S)
    while tb > 1 and (tb * S) % 8 != 0:
        tb -= 1
    tm = tb * S
    assert tm % 8 == 0, "sequence length must yield an 8-aligned row chunk"
    n_chunks = (B + tb - 1) // tb
    cps = min(4, n_chunks)
    if n_chunks > 1:
        cps = min(cps, max(1, n_chunks // 2))   # keep grid >= 2 (v7x megacore)
    grid_n = (n_chunks + cps - 1) // cps
    bp = grid_n * cps * tb                      # padded batch count

    # ---- host-side input packing ---------------------------------------------
    keym = mask_bool.reshape(B, S)
    pad_b = bp - B
    if pad_b:
        q = jnp.pad(q, ((0, pad_b), (0, 0), (0, 0)))
        k = jnp.pad(k, ((0, pad_b), (0, 0), (0, 0)))
        v = jnp.pad(v, ((0, pad_b), (0, 0), (0, 0)))
        keym = jnp.pad(keym, ((0, pad_b), (0, 0)), constant_values=True)

    # One lane-dense [rows, 3H] operand for the fused QKV projection.
    x = jnp.concatenate([q, k, v], axis=-1).reshape(bp * S, H3).astype(f32)
    # Additive key mask, keys along lanes: [grid, cps, tm] (0 valid / -1e9 masked).
    key_add = jnp.where(keym, -1e9, 0.0).astype(f32).reshape(grid_n, cps, tm)
    # Static block-diagonal batch mask for a chunk: -1e9 for cross-batch
    # (row, key) pairs, 0 within a batch (host-built once, VMEM-resident).
    bid = np.arange(tm) // S
    attn_base = jnp.asarray(
        np.where(bid[:, None] == bid[None, :], 0.0, -1e9).astype(np.float32))

    mmdt = MXU_OPERAND_DTYPE

    def kernel(x_ref, kadd_ref, base_ref, wqkv_ref, bqkv_ref, wme_ref, bm_ref,
               o_ref, vw_ref, madd_ref):
        for c in range(cps):                      # static chunk loop
            r0 = c * tm
            xin = x_ref[r0:r0 + tm, :].astype(mmdt)              # [tm, 3H]
            proj = jnp.dot(xin, wqkv_ref[...].astype(mmdt),
                           preferred_element_type=jnp.float32) + bqkv_ref[...]
            qp = proj[:, 0:H]                                    # scale folded in
            kp = proj[:, H:2 * H]
            vp = proj[:, 2 * H:3 * H]

            # Per-head (V_h @ Wm_h^T) slabs, staged in VMEM to bound vreg use.
            vw_ref[...] = jnp.dot(vp.astype(mmdt), wme_ref[...].astype(mmdt),
                                  preferred_element_type=jnp.float32)

            # Combined additive mask for this chunk (hoisted out of head loop):
            # block-diagonal batch mask + user key mask (broadcast over rows).
            madd_ref[...] = base_ref[...] + kadd_ref[c:c + 1, :]

            acc = jnp.zeros((tm, H), jnp.float32)                # merge accum
            for h in range(HEADS):                               # static unroll
                fsl = slice(h * dk, (h + 1) * dk)
                # One dense [tm, dk] x [dk, tm] MXU matmul gives every batch's
                # scores for this head; cross-batch entries are masked away.
                s = jnp.einsum('md,nd->mn',
                               qp[:, fsl].astype(mmdt), kp[:, fsl].astype(mmdt),
                               preferred_element_type=jnp.float32)
                s = s + madd_ref[...]
                s = s - jnp.max(s, axis=-1, keepdims=True)
                p = jnp.exp(s)
                p = p * pl.reciprocal(jnp.sum(p, axis=-1, keepdims=True),
                                      approx=True)
                # TODO(synk): attention-map dropout is a no-op in eval mode.
                # Context + merge projection in one [tm,tm] x [tm,H] matmul.
                acc = acc + jnp.dot(p.astype(mmdt),
                                    vw_ref[:, h * H:(h + 1) * H].astype(mmdt),
                                    preferred_element_type=jnp.float32)

            # Output kept H(=32)-lane wide: in-kernel repack to 128 lanes would
            # cost a sublane->lane relayout comparable to the store savings.
            o_ref[r0:r0 + tm, :] = (acc + bm_ref[...]).astype(o_ref.dtype)

    rows_per_step = cps * tm
    const2 = lambda i: (0, 0)
    out2 = pl.pallas_call(
        kernel,
        out_shape=jax.ShapeDtypeStruct((bp * S, H), f32),
        grid_spec=pltpu.PrefetchScalarGridSpec(
            num_scalar_prefetch=0,
            grid=(grid_n,),
            in_specs=[
                pl.BlockSpec((rows_per_step, H3), lambda i: (i, 0)),   # packed qkv
                pl.BlockSpec((None, cps, tm), lambda i: (i, 0, 0)),    # key mask
                pl.BlockSpec((tm, tm), const2),                        # batch mask
                pl.BlockSpec((H3, H3), const2),                        # fused Wqkv
                pl.BlockSpec((1, H3), const2),                         # fused bias
                pl.BlockSpec((H, HW), const2),                         # expanded Wm
                pl.BlockSpec((1, H), const2),                          # merge bias
            ],
            out_specs=pl.BlockSpec((rows_per_step, H), lambda i: (i, 0)),
            scratch_shapes=[
                pltpu.VMEM((tm, HW), jnp.float32),     # per-head V@Wm slabs
                pltpu.VMEM((tm, tm), jnp.float32),     # additive mask
            ],
        ),
        compiler_params=pltpu.CompilerParams(
            dimension_semantics=("parallel",)),
    )(x, key_add, attn_base, wqkv, bqkv, wme, bm_r)

    return out2.reshape(bp, S, H)[:B]


def mhatt_reference(v, k, q, mask_bool, params):
    """Pure-JAX reference mirroring the PyTorch forward (eval mode)."""
    wq, bq, wk, bk, wv, bv, wm, bm = params
    B, S, H = q.shape

    def proj(x, w, b):
        return x @ w.T + b

    def split(x):
        return x.reshape(B, S, HEADS, DK).transpose(0, 2, 1, 3)  # [B, h, S, DK]

    qh = split(proj(q, wq, bq))
    kh = split(proj(k, wk, bk))
    vh = split(proj(v, wv, bv))
    scores = jnp.einsum("bhqd,bhkd->bhqk", qh, kh) / math.sqrt(DK)
    scores = jnp.where(mask_bool, -1e9, scores)
    att = jax.nn.softmax(scores, axis=-1)
    out = jnp.einsum("bhqk,bhkd->bhqd", att, vh)
    out = out.transpose(0, 2, 1, 3).reshape(B, S, H)
    return out @ wm.T + bm


def init_params(key, hidden):
    ks = jax.random.split(key, 8)
    bound = 1.0 / math.sqrt(hidden)
    mk_w = lambda k: jax.random.uniform(k, (hidden, hidden), jnp.float32, -bound, bound)
    mk_b = lambda k: jax.random.uniform(k, (hidden,), jnp.float32, -bound, bound)
    return (mk_w(ks[0]), mk_b(ks[1]),   # linear_q
            mk_w(ks[2]), mk_b(ks[3]),   # linear_k
            mk_w(ks[4]), mk_b(ks[5]),   # linear_v
            mk_w(ks[6]), mk_b(ks[7]))   # linear_merge


if __name__ == "__main__":
    B, S, H = 2, 8, HIDDEN
    key = jax.random.PRNGKey(0)
    k_par, k_q, k_k, k_v = jax.random.split(key, 4)

    params = init_params(k_par, H)
    q = jax.random.normal(k_q, (B, S, H), jnp.float32)
    k = jax.random.normal(k_k, (B, S, H), jnp.float32)
    v = jax.random.normal(k_v, (B, S, H), jnp.float32)

    # mask: pad the last 2 key positions of batch 1 (True = masked)
    lengths = jnp.array([S, S - 2])
    mask_bool = (jnp.arange(S)[None, :] >= lengths[:, None]).reshape(B, 1, 1, S)

    out = mhatt_pallas(v, k, q, mask_bool, params)
    jax.block_until_ready(out)

    ref = mhatt_reference(v, k, q, mask_bool, params)
    # approx reciprocal in the softmax introduces ~1e-4-level relative error.
    np.testing.assert_allclose(np.asarray(out), np.asarray(ref), rtol=2e-3, atol=2e-3)

    print("KERNEL_OK")
</pallas_src>

<mosaic_0001>
module attributes {stable_mosaic.version = 11 : i64} {
  func.func @kernel(%arg0: i32, %arg1: memref<128x96xf32, #tpu.memory_space<vmem>>, %arg2: memref<1x1x128xf32, #tpu.memory_space<vmem>>, %arg3: memref<128x128xf32, #tpu.memory_space<vmem>>, %arg4: memref<96x96xf32, #tpu.memory_space<vmem>>, %arg5: memref<1x96xf32, #tpu.memory_space<vmem>>, %arg6: memref<32x256xf32, #tpu.memory_space<vmem>>, %arg7: memref<1x32xf32, #tpu.memory_space<vmem>>, %arg8: memref<128x32xf32, #tpu.memory_space<vmem>>, %arg9: memref<128x256xf32, #tpu.memory_space<vmem>>, %arg10: memref<128x128xf32, #tpu.memory_space<vmem>>) attributes {dimension_semantics = [#tpu.dimension_semantics<parallel>], iteration_bounds = array<i64: 1>, scalar_prefetch = 0 : i64, scratch_operands = 2 : i64, tpu.core_type = #tpu.core_type<tc>, window_params = [{transform_indices = @transform_0, window_bounds = array<i64: 128, 96>}, {transform_indices = @transform_1, window_bounds = array<i64: 1, 1, 128>}, {pipeline_mode = #tpu.pipeline_mode<synchronous>, transform_indices = @transform_2, window_bounds = array<i64: 128, 128>}, {pipeline_mode = #tpu.pipeline_mode<synchronous>, transform_indices = @transform_3, window_bounds = array<i64: 96, 96>}, {pipeline_mode = #tpu.pipeline_mode<synchronous>, transform_indices = @transform_4, window_bounds = array<i64: 1, 96>}, {pipeline_mode = #tpu.pipeline_mode<synchronous>, transform_indices = @transform_5, window_bounds = array<i64: 32, 256>}, {pipeline_mode = #tpu.pipeline_mode<synchronous>, transform_indices = @transform_6, window_bounds = array<i64: 1, 32>}, {transform_indices = @transform_7, window_bounds = array<i64: 128, 32>}]} {
    %c0 = arith.constant 0 : index
    %c0_0 = arith.constant 0 : index
    %0 = vector.load %arg1[%c0, %c0_0] : memref<128x96xf32, #tpu.memory_space<vmem>>, vector<128x96xf32>
    %c0_1 = arith.constant 0 : index
    %c0_2 = arith.constant 0 : index
    %1 = vector.load %arg4[%c0_1, %c0_2] : memref<96x96xf32, #tpu.memory_space<vmem>>, vector<96x96xf32>
    %cst = arith.constant dense<0.000000e+00> : vector<128x96xf32>
    %2 = tpu.matmul %0, %1, %cst {dimension_numbers = #tpu.dot_dimension_numbers<[1], [0], [0], [1], [0, 0, 1, 1], [], []>} : vector<128x96xf32>, vector<96x96xf32>, vector<128x96xf32> -> vector<128x96xf32>
    %c0_3 = arith.constant 0 : index
    %c0_4 = arith.constant 0 : index
    %3 = vector.load %arg5[%c0_3, %c0_4] : memref<1x96xf32, #tpu.memory_space<vmem>>, vector<1x96xf32>
    %4 = vector.broadcast %3 : vector<1x96xf32> to vector<128x96xf32>
    %5 = arith.addf %2, %4 : vector<128x96xf32>
    %6 = vector.extract_strided_slice %5 {offsets = [0, 0], sizes = [128, 32], strides = [1, 1]} : vector<128x96xf32> to vector<128x32xf32>
    %7 = vector.extract_strided_slice %5 {offsets = [0, 32], sizes = [128, 32], strides = [1, 1]} : vector<128x96xf32> to vector<128x32xf32>
    %8 = vector.extract_strided_slice %5 {offsets = [0, 64], sizes = [128, 32], strides = [1, 1]} : vector<128x96xf32> to vector<128x32xf32>
    %c0_5 = arith.constant 0 : index
    %c0_6 = arith.constant 0 : index
    %9 = vector.load %arg6[%c0_5, %c0_6] : memref<32x256xf32, #tpu.memory_space<vmem>>, vector<32x256xf32>
    %cst_7 = arith.constant dense<0.000000e+00> : vector<128x256xf32>
    %10 = tpu.matmul %8, %9, %cst_7 {dimension_numbers = #tpu.dot_dimension_numbers<[1], [0], [0], [1], [0, 0, 1, 1], [], []>} : vector<128x32xf32>, vector<32x256xf32>, vector<128x256xf32> -> vector<128x256xf32>
    %c0_8 = arith.constant 0 : index
    %c0_9 = arith.constant 0 : index
    %11 = vector.load %arg9[%c0_8, %c0_9] : memref<128x256xf32, #tpu.memory_space<vmem>>, vector<128x256xf32>
    tpu.vector_store %arg9[%c0_8, %c0_9], %10 {strides = array<i32>} : memref<128x256xf32, #tpu.memory_space<vmem>>, vector<128x256xf32>,
    %c0_10 = arith.constant 0 : index
    %c0_11 = arith.constant 0 : index
    %12 = vector.load %arg3[%c0_10, %c0_11] : memref<128x128xf32, #tpu.memory_space<vmem>>, vector<128x128xf32>
    %c0_12 = arith.constant 0 : index
    %c0_13 = arith.constant 0 : index
    %c0_14 = arith.constant 0 : index
    %13 = vector.load %arg2[%c0_12, %c0_13, %c0_14] : memref<1x1x128xf32, #tpu.memory_space<vmem>>, vector<1x1x128xf32>
    %14 = vector.shape_cast %13 : vector<1x1x128xf32> to vector<1x128xf32>
    %15 = vector.broadcast %14 : vector<1x128xf32> to vector<128x128xf32>
    %16 = arith.addf %12, %15 : vector<128x128xf32>
    %c0_15 = arith.constant 0 : index
    %c0_16 = arith.constant 0 : index
    %17 = vector.load %arg10[%c0_15, %c0_16] : memref<128x128xf32, #tpu.memory_space<vmem>>, vector<128x128xf32>
    tpu.vector_store %arg10[%c0_15, %c0_16], %16 {strides = array<i32>} : memref<128x128xf32, #tpu.memory_space<vmem>>, vector<128x128xf32>,
    %cst_17 = arith.constant 0.000000e+00 : f32
    %18 = vector.broadcast %cst_17 : f32 to vector<128x32xf32>
    %19 = vector.extract_strided_slice %6 {offsets = [0, 0], sizes = [128, 4], strides = [1, 1]} : vector<128x32xf32> to vector<128x4xf32>
    %20 = vector.extract_strided_slice %7 {offsets = [0, 0], sizes = [128, 4], strides = [1, 1]} : vector<128x32xf32> to vector<128x4xf32>
    "tpu.trace_start"() <{level = 10 : i32, message = "md,nd->mn"}> : () -> ()
    %cst_18 = arith.constant dense<0.000000e+00> : vector<128x128xf32>
    %21 = tpu.matmul %19, %20, %cst_18 {dimension_numbers = #tpu.dot_dimension_numbers<[1], [1], [0], [0], [0, 0, 1, 0], [], []>} : vector<128x4xf32>, vector<128x4xf32>, vector<128x128xf32> -> vector<128x128xf32>
    "tpu.trace_stop"() : () -> ()
    %c0_19 = arith.constant 0 : index
    %c0_20 = arith.constant 0 : index
    %22 = vector.load %arg10[%c0_19, %c0_20] : memref<128x128xf32, #tpu.memory_space<vmem>>, vector<128x128xf32>
    %23 = arith.addf %21, %22 : vector<128x128xf32>
    %cst_21 = arith.constant dense<0xFF800000> : vector<128xf32>
    %24 = vector.multi_reduction <maximumf>, %23, %cst_21 [1] : vector<128x128xf32> to vector<128xf32>
    %25 = vector.shape_cast %24 : vector<128xf32> to vector<128x1xf32>
    %26 = vector.broadcast %25 : vector<128x1xf32> to vector<128x128xf32>
    %27 = arith.subf %23, %26 : vector<128x128xf32>
    %28 = math.exp %27 : vector<128x128xf32>
    %cst_22 = arith.constant dense<0.000000e+00> : vector<128xf32>
    %29 = vector.multi_reduction <add>, %28, %cst_22 [1] : vector<128x128xf32> to vector<128xf32>
    %30 = vector.shape_cast %29 : vector<128xf32> to vector<128x1xf32>
    %31 = tpu.reciprocal %30 {approx = true} : vector<128x1xf32> -> vector<128x1xf32>
    %32 = vector.broadcast %31 : vector<128x1xf32> to vector<128x128xf32>
    %33 = arith.mulf %28, %32 : vector<128x128xf32>
    %c0_23 = arith.constant 0 : index
    %c0_24 = arith.constant 0 : index
    %34 = vector.load %arg9[%c0_23, %c0_24] : memref<128x256xf32, #tpu.memory_space<vmem>>, vector<128x32xf32>
    %cst_25 = arith.constant dense<0.000000e+00> : vector<128x32xf32>
    %35 = tpu.matmul %33, %34, %cst_25 {dimension_numbers = #tpu.dot_dimension_numbers<[1], [0], [0], [1], [0, 0, 1, 1], [], []>} : vector<128x128xf32>, vector<128x32xf32>, vector<128x32xf32> -> vector<128x32xf32>
    %36 = arith.addf %18, %35 : vector<128x32xf32>
    %37 = vector.extract_strided_slice %6 {offsets = [0, 4], sizes = [128, 4], strides = [1, 1]} : vector<128x32xf32> to vector<128x4xf32>
    %38 = vector.extract_strided_slice %7 {offsets = [0, 4], sizes = [128, 4], strides = [1, 1]} : vector<128x32xf32> to vector<128x4xf32>
    "tpu.trace_start"() <{level = 10 : i32, message = "md,nd->mn"}> : () -> ()
    %cst_26 = arith.constant dense<0.000000e+00> : vector<128x128xf32>
    %39 = tpu.matmul %37, %38, %cst_26 {dimension_numbers = #tpu.dot_dimension_numbers<[1], [1], [0], [0], [0, 0, 1, 0], [], []>} : vector<128x4xf32>, vector<128x4xf32>, vector<128x128xf32> -> vector<128x128xf32>
    "tpu.trace_stop"() : () -> ()
    %c0_27 = arith.constant 0 : index
    %c0_28 = arith.constant 0 : index
    %40 = vector.load %arg10[%c0_27, %c0_28] : memref<128x128xf32, #tpu.memory_space<vmem>>, vector<128x128xf32>
    %41 = arith.addf %39, %40 : vector<128x128xf32>
    %cst_29 = arith.constant dense<0xFF800000> : vector<128xf32>
    %42 = vector.multi_reduction <maximumf>, %41, %cst_29 [1] : vector<128x128xf32> to vector<128xf32>
    %43 = vector.shape_cast %42 : vector<128xf32> to vector<128x1xf32>
    %44 = vector.broadcast %43 : vector<128x1xf32> to vector<128x128xf32>
    %45 = arith.subf %41, %44 : vector<128x128xf32>
    %46 = math.exp %45 : vector<128x128xf32>
    %cst_30 = arith.constant dense<0.000000e+00> : vector<128xf32>
    %47 = vector.multi_reduction <add>, %46, %cst_30 [1] : vector<128x128xf32> to vector<128xf32>
    %48 = vector.shape_cast %47 : vector<128xf32> to vector<128x1xf32>
    %49 = tpu.reciprocal %48 {approx = true} : vector<128x1xf32> -> vector<128x1xf32>
    %50 = vector.broadcast %49 : vector<128x1xf32> to vector<128x128xf32>
    %51 = arith.mulf %46, %50 : vector<128x128xf32>
    %c0_31 = arith.constant 0 : index
    %c32 = arith.constant 32 : index
    %52 = vector.load %arg9[%c0_31, %c32] : memref<128x256xf32, #tpu.memory_space<vmem>>, vector<128x32xf32>
    %cst_32 = arith.constant dense<0.000000e+00> : vector<128x32xf32>
    %53 = tpu.matmul %51, %52, %cst_32 {dimension_numbers = #tpu.dot_dimension_numbers<[1], [0], [0], [1], [0, 0, 1, 1], [], []>} : vector<128x128xf32>, vector<128x32xf32>, vector<128x32xf32> -> vector<128x32xf32>
    %54 = arith.addf %36, %53 : vector<128x32xf32>
    %55 = vector.extract_strided_slice %6 {offsets = [0, 8], sizes = [128, 4], strides = [1, 1]} : vector<128x32xf32> to vector<128x4xf32>
    %56 = vector.extract_strided_slice %7 {offsets = [0, 8], sizes = [128, 4], strides = [1, 1]} : vector<128x32xf32> to vector<128x4xf32>
    "tpu.trace_start"() <{level = 10 : i32, message = "md,nd->mn"}> : () -> ()
    %cst_33 = arith.constant dense<0.000000e+00> : vector<128x128xf32>
    %57 = tpu.matmul %55, %56, %cst_33 {dimension_numbers = #tpu.dot_dimension_numbers<[1], [1], [0], [0], [0, 0, 1, 0], [], []>} : vector<128x4xf32>, vector<128x4xf32>, vector<128x128xf32> -> vector<128x128xf32>
    "tpu.trace_stop"() : () -> ()
    %c0_34 = arith.constant 0 : index
    %c0_35 = arith.constant 0 : index
    %58 = vector.load %arg10[%c0_34, %c0_35] : memref<128x128xf32, #tpu.memory_space<vmem>>, vector<128x128xf32>
    %59 = arith.addf %57, %58 : vector<128x128xf32>
    %cst_36 = arith.constant dense<0xFF800000> : vector<128xf32>
    %60 = vector.multi_reduction <maximumf>, %59, %cst_36 [1] : vector<128x128xf32> to vector<128xf32>
    %61 = vector.shape_cast %60 : vector<128xf32> to vector<128x1xf32>
    %62 = vector.broadcast %61 : vector<128x1xf32> to vector<128x128xf32>
    %63 = arith.subf %59, %62 : vector<128x128xf32>
    %64 = math.exp %63 : vector<128x128xf32>
    %cst_37 = arith.constant dense<0.000000e+00> : vector<128xf32>
    %65 = vector.multi_reduction <add>, %64, %cst_37 [1] : vector<128x128xf32> to vector<128xf32>
    %66 = vector.shape_cast %65 : vector<128xf32> to vector<128x1xf32>
    %67 = tpu.reciprocal %66 {approx = true} : vector<128x1xf32> -> vector<128x1xf32>
    %68 = vector.broadcast %67 : vector<128x1xf32> to vector<128x128xf32>
    %69 = arith.mulf %64, %68 : vector<128x128xf32>
    %c0_38 = arith.constant 0 : index
    %c64 = arith.constant 64 : index
    %70 = vector.load %arg9[%c0_38, %c64] : memref<128x256xf32, #tpu.memory_space<vmem>>, vector<128x32xf32>
    %cst_39 = arith.constant dense<0.000000e+00> : vector<128x32xf32>
    %71 = tpu.matmul %69, %70, %cst_39 {dimension_numbers = #tpu.dot_dimension_numbers<[1], [0], [0], [1], [0, 0, 1, 1], [], []>} : vector<128x128xf32>, vector<128x32xf32>, vector<128x32xf32> -> vector<128x32xf32>
    %72 = arith.addf %54, %71 : vector<128x32xf32>
    %73 = vector.extract_strided_slice %6 {offsets = [0, 12], sizes = [128, 4], strides = [1, 1]} : vector<128x32xf32> to vector<128x4xf32>
    %74 = vector.extract_strided_slice %7 {offsets = [0, 12], sizes = [128, 4], strides = [1, 1]} : vector<128x32xf32> to vector<128x4xf32>
    "tpu.trace_start"() <{level = 10 : i32, message = "md,nd->mn"}> : () -> ()
    %cst_40 = arith.constant dense<0.000000e+00> : vector<128x128xf32>
    %75 = tpu.matmul %73, %74, %cst_40 {dimension_numbers = #tpu.dot_dimension_numbers<[1], [1], [0], [0], [0, 0, 1, 0], [], []>} : vector<128x4xf32>, vector<128x4xf32>, vector<128x128xf32> -> vector<128x128xf32>
    "tpu.trace_stop"() : () -> ()
    %c0_41 = arith.constant 0 : index
    %c0_42 = arith.constant 0 : index
    %76 = vector.load %arg10[%c0_41, %c0_42] : memref<128x128xf32, #tpu.memory_space<vmem>>, vector<128x128xf32>
    %77 = arith.addf %75, %76 : vector<128x128xf32>
    %cst_43 = arith.constant dense<0xFF800000> : vector<128xf32>
    %78 = vector.multi_reduction <maximumf>, %77, %cst_43 [1] : vector<128x128xf32> to vector<128xf32>
    %79 = vector.shape_cast %78 : vector<128xf32> to vector<128x1xf32>
    %80 = vector.broadcast %79 : vector<128x1xf32> to vector<128x128xf32>
    %81 = arith.subf %77, %80 : vector<128x128xf32>
    %82 = math.exp %81 : vector<128x128xf32>
    %cst_44 = arith.constant dense<0.000000e+00> : vector<128xf32>
    %83 = vector.multi_reduction <add>, %82, %cst_44 [1] : vector<128x128xf32> to vector<128xf32>
    %84 = vector.shape_cast %83 : vector<128xf32> to vector<128x1xf32>
    %85 = tpu.reciprocal %84 {approx = true} : vector<128x1xf32> -> vector<128x1xf32>
    %86 = vector.broadcast %85 : vector<128x1xf32> to vector<128x128xf32>
    %87 = arith.mulf %82, %86 : vector<128x128xf32>
    %c0_45 = arith.constant 0 : index
    %c96 = arith.constant 96 : index
    %88 = vector.load %arg9[%c0_45, %c96] : memref<128x256xf32, #tpu.memory_space<vmem>>, vector<128x32xf32>
    %cst_46 = arith.constant dense<0.000000e+00> : vector<128x32xf32>
    %89 = tpu.matmul %87, %88, %cst_46 {dimension_numbers = #tpu.dot_dimension_numbers<[1], [0], [0], [1], [0, 0, 1, 1], [], []>} : vector<128x128xf32>, vector<128x32xf32>, vector<128x32xf32> -> vector<128x32xf32>
    %90 = arith.addf %72, %89 : vector<128x32xf32>
    %91 = vector.extract_strided_slice %6 {offsets = [0, 16], sizes = [128, 4], strides = [1, 1]} : vector<128x32xf32> to vector<128x4xf32>
    %92 = vector.extract_strided_slice %7 {offsets = [0, 16], sizes = [128, 4], strides = [1, 1]} : vector<128x32xf32> to vector<128x4xf32>
    "tpu.trace_start"() <{level = 10 : i32, message = "md,nd->mn"}> : () -> ()
    %cst_47 = arith.constant dense<0.000000e+00> : vector<128x128xf32>
    %93 = tpu.matmul %91, %92, %cst_47 {dimension_numbers = #tpu.dot_dimension_numbers<[1], [1], [0], [0], [0, 0, 1, 0], [], []>} : vector<128x4xf32>, vector<128x4xf32>, vector<128x128xf32> -> vector<128x128xf32>
    "tpu.trace_stop"() : () -> ()
    %c0_48 = arith.constant 0 : index
    %c0_49 = arith.constant 0 : index
    %94 = vector.load %arg10[%c0_48, %c0_49] : memref<128x128xf32, #tpu.memory_space<vmem>>, vector<128x128xf32>
    %95 = arith.addf %93, %94 : vector<128x128xf32>
    %cst_50 = arith.constant dense<0xFF800000> : vector<128xf32>
    %96 = vector.multi_reduction <maximumf>, %95, %cst_50 [1] : vector<128x128xf32> to vector<128xf32>
    %97 = vector.shape_cast %96 : vector<128xf32> to vector<128x1xf32>
    %98 = vector.broadcast %97 : vector<128x1xf32> to vector<128x128xf32>
    %99 = arith.subf %95, %98 : vector<128x128xf32>
    %100 = math.exp %99 : vector<128x128xf32>
    %cst_51 = arith.constant dense<0.000000e+00> : vector<128xf32>
    %101 = vector.multi_reduction <add>, %100, %cst_51 [1] : vector<128x128xf32> to vector<128xf32>
    %102 = vector.shape_cast %101 : vector<128xf32> to vector<128x1xf32>
    %103 = tpu.reciprocal %102 {approx = true} : vector<128x1xf32> -> vector<128x1xf32>
    %104 = vector.broadcast %103 : vector<128x1xf32> to vector<128x128xf32>
    %105 = arith.mulf %100, %104 : vector<128x128xf32>
    %c0_52 = arith.constant 0 : index
    %c128 = arith.constant 128 : index
    %106 = vector.load %arg9[%c0_52, %c128] : memref<128x256xf32, #tpu.memory_space<vmem>>, vector<128x32xf32>
    %cst_53 = arith.constant dense<0.000000e+00> : vector<128x32xf32>
    %107 = tpu.matmul %105, %106, %cst_53 {dimension_numbers = #tpu.dot_dimension_numbers<[1], [0], [0], [1], [0, 0, 1, 1], [], []>} : vector<128x128xf32>, vector<128x32xf32>, vector<128x32xf32> -> vector<128x32xf32>
    %108 = arith.addf %90, %107 : vector<128x32xf32>
    %109 = vector.extract_strided_slice %6 {offsets = [0, 20], sizes = [128, 4], strides = [1, 1]} : vector<128x32xf32> to vector<128x4xf32>
    %110 = vector.extract_strided_slice %7 {offsets = [0, 20], sizes = [128, 4], strides = [1, 1]} : vector<128x32xf32> to vector<128x4xf32>
    "tpu.trace_start"() <{level = 10 : i32, message = "md,nd->mn"}> : () -> ()
    %cst_54 = arith.constant dense<0.000000e+00> : vector<128x128xf32>
    %111 = tpu.matmul %109, %110, %cst_54 {dimension_numbers = #tpu.dot_dimension_numbers<[1], [1], [0], [0], [0, 0, 1, 0], [], []>} : vector<128x4xf32>, vector<128x4xf32>, vector<128x128xf32> -> vector<128x128xf32>
    "tpu.trace_stop"() : () -> ()
    %c0_55 = arith.constant 0 : index
    %c0_56 = arith.constant 0 : index
    %112 = vector.load %arg10[%c0_55, %c0_56] : memref<128x128xf32, #tpu.memory_space<vmem>>, vector<128x128xf32>
    %113 = arith.addf %111, %112 : vector<128x128xf32>
    %cst_57 = arith.constant dense<0xFF800000> : vector<128xf32>
    %114 = vector.multi_reduction <maximumf>, %113, %cst_57 [1] : vector<128x128xf32> to vector<128xf32>
    %115 = vector.shape_cast %114 : vector<128xf32> to vector<128x1xf32>
    %116 = vector.broadcast %115 : vector<128x1xf32> to vector<128x128xf32>
    %117 = arith.subf %113, %116 : vector<128x128xf32>
    %118 = math.exp %117 : vector<128x128xf32>
    %cst_58 = arith.constant dense<0.000000e+00> : vector<128xf32>
    %119 = vector.multi_reduction <add>, %118, %cst_58 [1] : vector<128x128xf32> to vector<128xf32>
    %120 = vector.shape_cast %119 : vector<128xf32> to vector<128x1xf32>
    %121 = tpu.reciprocal %120 {approx = true} : vector<128x1xf32> -> vector<128x1xf32>
    %122 = vector.broadcast %121 : vector<128x1xf32> to vector<128x128xf32>
    %123 = arith.mulf %118, %122 : vector<128x128xf32>
    %c0_59 = arith.constant 0 : index
    %c160 = arith.constant 160 : index
    %124 = vector.load %arg9[%c0_59, %c160] : memref<128x256xf32, #tpu.memory_space<vmem>>, vector<128x32xf32>
    %cst_60 = arith.constant dense<0.000000e+00> : vector<128x32xf32>
    %125 = tpu.matmul %123, %124, %cst_60 {dimension_numbers = #tpu.dot_dimension_numbers<[1], [0], [0], [1], [0, 0, 1, 1], [], []>} : vector<128x128xf32>, vector<128x32xf32>, vector<128x32xf32> -> vector<128x32xf32>
    %126 = arith.addf %108, %125 : vector<128x32xf32>
    %127 = vector.extract_strided_slice %6 {offsets = [0, 24], sizes = [128, 4], strides = [1, 1]} : vector<128x32xf32> to vector<128x4xf32>
    %128 = vector.extract_strided_slice %7 {offsets = [0, 24], sizes = [128, 4], strides = [1, 1]} : vector<128x32xf32> to vector<128x4xf32>
    "tpu.trace_start"() <{level = 10 : i32, message = "md,nd->mn"}> : () -> ()
    %cst_61 = arith.constant dense<0.000000e+00> : vector<128x128xf32>
    %129 = tpu.matmul %127, %128, %cst_61 {dimension_numbers = #tpu.dot_dimension_numbers<[1], [1], [0], [0], [0, 0, 1, 0], [], []>} : vector<128x4xf32>, vector<128x4xf32>, vector<128x128xf32> -> vector<128x128xf32>
    "tpu.trace_stop"() : () -> ()
    %c0_62 = arith.constant 0 : index
    %c0_63 = arith.constant 0 : index
    %130 = vector.load %arg10[%c0_62, %c0_63] : memref<128x128xf32, #tpu.memory_space<vmem>>, vector<128x128xf32>
    %131 = arith.addf %129, %130 : vector<128x128xf32>
    %cst_64 = arith.constant dense<0xFF800000> : vector<128xf32>
    %132 = vector.multi_reduction <maximumf>, %131, %cst_64 [1] : vector<128x128xf32> to vector<128xf32>
    %133 = vector.shape_cast %132 : vector<128xf32> to vector<128x1xf32>
    %134 = vector.broadcast %133 : vector<128x1xf32> to vector<128x128xf32>
    %135 = arith.subf %131, %134 : vector<128x128xf32>
    %136 = math.exp %135 : vector<128x128xf32>
    %cst_65 = arith.constant dense<0.000000e+00> : vector<128xf32>
    %137 = vector.multi_reduction <add>, %136, %cst_65 [1] : vector<128x128xf32> to vector<128xf32>
    %138 = vector.shape_cast %137 : vector<128xf32> to vector<128x1xf32>
    %139 = tpu.reciprocal %138 {approx = true} : vector<128x1xf32> -> vector<128x1xf32>
    %140 = vector.broadcast %139 : vector<128x1xf32> to vector<128x128xf32>
    %141 = arith.mulf %136, %140 : vector<128x128xf32>
    %c0_66 = arith.constant 0 : index
    %c192 = arith.constant 192 : index
    %142 = vector.load %arg9[%c0_66, %c192] : memref<128x256xf32, #tpu.memory_space<vmem>>, vector<128x32xf32>
    %cst_67 = arith.constant dense<0.000000e+00> : vector<128x32xf32>
    %143 = tpu.matmul %141, %142, %cst_67 {dimension_numbers = #tpu.dot_dimension_numbers<[1], [0], [0], [1], [0, 0, 1, 1], [], []>} : vector<128x128xf32>, vector<128x32xf32>, vector<128x32xf32> -> vector<128x32xf32>
    %144 = arith.addf %126, %143 : vector<128x32xf32>
    %145 = vector.extract_strided_slice %6 {offsets = [0, 28], sizes = [128, 4], strides = [1, 1]} : vector<128x32xf32> to vector<128x4xf32>
    %146 = vector.extract_strided_slice %7 {offsets = [0, 28], sizes = [128, 4], strides = [1, 1]} : vector<128x32xf32> to vector<128x4xf32>
    "tpu.trace_start"() <{level = 10 : i32, message = "md,nd->mn"}> : () -> ()
    %cst_68 = arith.constant dense<0.000000e+00> : vector<128x128xf32>
    %147 = tpu.matmul %145, %146, %cst_68 {dimension_numbers = #tpu.dot_dimension_numbers<[1], [1], [0], [0], [0, 0, 1, 0], [], []>} : vector<128x4xf32>, vector<128x4xf32>, vector<128x128xf32> -> vector<128x128xf32>
    "tpu.trace_stop"() : () -> ()
    %c0_69 = arith.constant 0 : index
    %c0_70 = arith.constant 0 : index
    %148 = vector.load %arg10[%c0_69, %c0_70] : memref<128x128xf32, #tpu.memory_space<vmem>>, vector<128x128xf32>
    %149 = arith.addf %147, %148 : vector<128x128xf32>
    %cst_71 = arith.constant dense<0xFF800000> : vector<128xf32>
    %150 = vector.multi_reduction <maximumf>, %149, %cst_71 [1] : vector<128x128xf32> to vector<128xf32>
    %151 = vector.shape_cast %150 : vector<128xf32> to vector<128x1xf32>
    %152 = vector.broadcast %151 : vector<128x1xf32> to vector<128x128xf32>
    %153 = arith.subf %149, %152 : vector<128x128xf32>
    %154 = math.exp %153 : vector<128x128xf32>
    %cst_72 = arith.constant dense<0.000000e+00> : vector<128xf32>
    %155 = vector.multi_reduction <add>, %154, %cst_72 [1] : vector<128x128xf32> to vector<128xf32>
    %156 = vector.shape_cast %155 : vector<128xf32> to vector<128x1xf32>
    %157 = tpu.reciprocal %156 {approx = true} : vector<128x1xf32> -> vector<128x1xf32>
    %158 = vector.broadcast %157 : vector<128x1xf32> to vector<128x128xf32>
    %159 = arith.mulf %154, %158 : vector<128x128xf32>
    %c0_73 = arith.constant 0 : index
    %c224 = arith.constant 224 : index
    %160 = vector.load %arg9[%c0_73, %c224] : memref<128x256xf32, #tpu.memory_space<vmem>>, vector<128x32xf32>
    %cst_74 = arith.constant dense<0.000000e+00> : vector<128x32xf32>
    %161 = tpu.matmul %159, %160, %cst_74 {dimension_numbers = #tpu.dot_dimension_numbers<[1], [0], [0], [1], [0, 0, 1, 1], [], []>} : vector<128x128xf32>, vector<128x32xf32>, vector<128x32xf32> -> vector<128x32xf32>
    %162 = arith.addf %144, %161 : vector<128x32xf32>
    %c0_75 = arith.constant 0 : index
    %c0_76 = arith.constant 0 : index
    %163 = vector.load %arg7[%c0_75, %c0_76] : memref<1x32xf32, #tpu.memory_space<vmem>>, vector<1x32xf32>
    %164 = vector.broadcast %163 : vector<1x32xf32> to vector<128x32xf32>
    %165 = arith.addf %162, %164 : vector<128x32xf32>
    %c0_77 = arith.constant 0 : index
    %c0_78 = arith.constant 0 : index
    %166 = vector.load %arg8[%c0_77, %c0_78] : memref<128x32xf32, #tpu.memory_space<vmem>>, vector<128x32xf32>
    tpu.vector_store %arg8[%c0_77, %c0_78], %165 {strides = array<i32>} : memref<128x32xf32, #tpu.memory_space<vmem>>, vector<128x32xf32>,
    return
  }
  func.func @transform_0(%arg0: i32) -> (i32, i32) {
    %c0_i32 = arith.constant 0 : i32
    %c0_i32_0 = arith.constant 0 : i32
    return %arg0, %c0_i32 : i32, i32
  }
  func.func @transform_1(%arg0: i32) -> (i32, i32, i32) {
    %c0_i32 = arith.constant 0 : i32
    %c0_i32_0 = arith.constant 0 : i32
    %c0_i32_1 = arith.constant 0 : i32
    return %arg0, %c0_i32, %c0_i32_0 : i32, i32, i32
  }
  func.func @transform_2(%arg0: i32) -> (i32, i32) {
    %c0_i32 = arith.constant 0 : i32
    %c0_i32_0 = arith.constant 0 : i32
    %c0_i32_1 = arith.constant 0 : i32
    return %c0_i32, %c0_i32_0 : i32, i32
  }
  func.func @transform_3(%arg0: i32) -> (i32, i32) {
    %c0_i32 = arith.constant 0 : i32
    %c0_i32_0 = arith.constant 0 : i32
    %c0_i32_1 = arith.constant 0 : i32
    return %c0_i32, %c0_i32_0 : i32, i32
  }
  func.func @transform_4(%arg0: i32) -> (i32, i32) {
    %c0_i32 = arith.constant 0 : i32
    %c0_i32_0 = arith.constant 0 : i32
    %c0_i32_1 = arith.constant 0 : i32
    return %c0_i32, %c0_i32_0 : i32, i32
  }
  func.func @transform_5(%arg0: i32) -> (i32, i32) {
    %c0_i32 = arith.constant 0 : i32
    %c0_i32_0 = arith.constant 0 : i32
    %c0_i32_1 = arith.constant 0 : i32
    return %c0_i32, %c0_i32_0 : i32, i32
  }
  func.func @transform_6(%arg0: i32) -> (i32, i32) {
    %c0_i32 = arith.constant 0 : i32
    %c0_i32_0 = arith.constant 0 : i32
    %c0_i32_1 = arith.constant 0 : i32
    return %c0_i32, %c0_i32_0 : i32, i32
  }
  func.func @transform_7(%arg0: i32) -> (i32, i32) {
    %c0_i32 = arith.constant 0 : i32
    %c0_i32_0 = arith.constant 0 : i32
    return %arg0, %c0_i32 : i32, i32
  }
}

</mosaic_0001>

<llo_original>
// kernel: tpu_custom_call.1
$region0: #{tpu_custom_call.1}
  #allocation0 [shape = 'u32[]', space=smem, size = 0x4, offset = 0x4, fixed_abs, tag = 'smem constant byte address 0x4 - core index']
  #allocation1 [shape = 'u32[72,128]{1,0:T(1,128)}', space=vmem, size = 0x9000, scoped, tag = 'internal scratch']
  #allocation2 [shape = 'f32[128,256]{1,0:T(8,128)}', space=vmem, size = 0x20000, scoped, tag = 'scratch operand']
  #allocation3 [shape = 'f32[128,128]{1,0:T(8,128)}', space=vmem, size = 0x10000, scoped, tag = 'scratch operand']
  %s0 = inlined_call_operand.vmem [shape: f32[128,96], index: 0, kind: input, shape index: {}]
  %s1 = inlined_call_operand.vmem [shape: f32[1,1,128], index: 1, kind: input, shape index: {}]
  %s2 = inlined_call_operand.vmem [shape: f32[128,128], index: 2, kind: input, shape index: {}]
  %s3 = inlined_call_operand.vmem [shape: f32[96,96], index: 3, kind: input, shape index: {}]
  %s4 = inlined_call_operand.vmem [shape: f32[1,96], index: 4, kind: input, shape index: {}]
  %s5 = inlined_call_operand.hbm [shape: f32[32,256], index: 5, kind: input, shape index: {}]
  %s6 = inlined_call_operand.vmem [shape: f32[1,32], index: 6, kind: input, shape index: {}]
  %s7 = inlined_call_operand.vmem [shape: f32[128,32], index: 7, kind: output, shape index: {}]
  %s8 = sld [smem:[#allocation0]]
  $region42: #{tpu_custom_call.1} parent=0
    _
  %s10 = ssub.s32 1, %s8
  %s11 = scalar_select 0, %s10, %s8
  $region1: #{tpu_custom_call.1} parent=0
    #allocation4 [shape = 'u8[32768]{0}', space=vmem, size = 0x8000, scoped, tag = 'input window, operand 5, single buffered']
    #allocation5 [shape = 's32[1]{0}', space=sflag, size = 0x4, scoped, tag = 'scoped memory for tpu_custom_call.1']
    %12 = vsyncpa [#allocation5], 0
    // Predicated region
    $region2: #{tpu_custom_call.1} parent=1 // pred_check
      _
    $region3: #{tpu_custom_call.1} parent=1 // pred_check_branch
      %14 = sbr.rel (0) target = $region5
    $region4: #{tpu_custom_call.1} parent=1 // pred_region
      _
    $region5: #{tpu_custom_call.1} parent=1 // pred_fallthru
      _
    // Predicated region
    $region6: #{tpu_custom_call.1} parent=1 // pred_check
      _
    $region7: #{tpu_custom_call.1} parent=1 // pred_check_branch
      %16 = sbr.rel (0) target = $region9
    $region8: #{tpu_custom_call.1} parent=1 // pred_region
      _
    $region9: #{tpu_custom_call.1} parent=1 // pred_fallthru
      _
    // Predicated region
    $region10: #{tpu_custom_call.1} parent=1 // pred_check
      _
    $region11: #{tpu_custom_call.1} parent=1 // pred_check_branch
      %18 = sbr.rel (0) target = $region13
    $region12: #{tpu_custom_call.1} parent=1 // pred_region
      _
    $region13: #{tpu_custom_call.1} parent=1 // pred_fallthru
      _
    // Predicated region
    $region14: #{tpu_custom_call.1} parent=1 // pred_check
      _
    $region15: #{tpu_custom_call.1} parent=1 // pred_check_branch
      %20 = sbr.rel (0) target = $region17
    $region16: #{tpu_custom_call.1} parent=1 // pred_region
      _
    $region17: #{tpu_custom_call.1} parent=1 // pred_fallthru
      _
    // Predicated region
    $region18: #{tpu_custom_call.1} parent=1 // pred_check
      _
    $region19: #{tpu_custom_call.1} parent=1 // pred_check_branch
      %22 = sbr.rel (0) target = $region21
    $region20: #{tpu_custom_call.1} parent=1 // pred_region
      _
    $region21: #{tpu_custom_call.1} parent=1 // pred_fallthru
      _
    // Predicated region
    $region22: #{tpu_custom_call.1} parent=1 // pred_check
      _
    $region23: #{tpu_custom_call.1} parent=1 // pred_check_branch
      %24 = sbr.rel (0) target = $region25
    $region24: #{tpu_custom_call.1} parent=1 // pred_region
      %26 = vsyncadd [#allocation5], 0
      %s27 = sshll.u32 %s5, 4
      %s28 = int_to_ptr.hbm [resolvable:$true] %s27
      %s29 = sshll.u32 [#allocation4], 4
      %s30 = int_to_ptr.vmem [resolvable:$true] %s29
      %35 = dma.hbm_to_vmem [thread:$0]  %s28, 1024, %s30, [#allocation5], 256, 256, 16
    $region25: #{tpu_custom_call.1} parent=1 // pred_fallthru
      _
    // Predicated region
    $region26: #{tpu_custom_call.1} parent=1 // pred_check
      _
    $region27: #{tpu_custom_call.1} parent=1 // pred_check_branch
      %37 = sbr.rel (0) target = $region29
    $region28: #{tpu_custom_call.1} parent=1 // pred_region
      _
    $region29: #{tpu_custom_call.1} parent=1 // pred_fallthru
      _
    // Predicated region
    $region30: #{tpu_custom_call.1} parent=1 // pred_check
      _
    $region31: #{tpu_custom_call.1} parent=1 // pred_check_branch
      %39 = sbr.rel (0) target = $region33
    $region32: #{tpu_custom_call.1} parent=1 // pred_region
      %41 = dma.done [#allocation5], 1024
    $region33: #{tpu_custom_call.1} parent=1 // pred_fallthru
      _
    %v42 = vld [vmem:[%s0] sm:$0xff]
    %v43 = vld [vmem:[%s0 + $0x8] sm:$0xff]
    %v44 = vld [vmem:[%s0 + $0x10] sm:$0xff]
    %v45 = vld [vmem:[%s0 + $0x18] sm:$0xff]
    %v46 = vld [vmem:[%s0 + $0x20] sm:$0xff]
    %v47 = vld [vmem:[%s0 + $0x28] sm:$0xff]
    %v48 = vld [vmem:[%s0 + $0x30] sm:$0xff]
    %v49 = vld [vmem:[%s0 + $0x38] sm:$0xff]
    %v50 = vld [vmem:[%s0 + $0x40] sm:$0xff]
    %v51 = vld [vmem:[%s0 + $0x48] sm:$0xff]
    %v52 = vld [vmem:[%s0 + $0x50] sm:$0xff]
    %v53 = vld [vmem:[%s0 + $0x58] sm:$0xff]
    %v54 = vld [vmem:[%s0 + $0x60] sm:$0xff]
    %v55 = vld [vmem:[%s0 + $0x68] sm:$0xff]
    %v56 = vld [vmem:[%s0 + $0x70] sm:$0xff]
    %v57 = vld [vmem:[%s0 + $0x78] sm:$0xff]
    %v58 = vld [vmem:[%s3] sm:$0xff]
    %v59 = vld [vmem:[%s3 + $0x8] sm:$0xff]
    %v60 = vld [vmem:[%s3 + $0x10] sm:$0xff]
    %v61 = vld [vmem:[%s3 + $0x18] sm:$0xff]
    %v62 = vld [vmem:[%s3 + $0x20] sm:$0xff]
    %v63 = vld [vmem:[%s3 + $0x28] sm:$0xff]
    %v64 = vld [vmem:[%s3 + $0x30] sm:$0xff]
    %v65 = vld [vmem:[%s3 + $0x38] sm:$0xff]
    %v66 = vld [vmem:[%s3 + $0x40] sm:$0xff]
    %v67 = vld [vmem:[%s3 + $0x48] sm:$0xff]
    %v68 = vld [vmem:[%s3 + $0x50] sm:$0xff]
    %v69 = vld [vmem:[%s3 + $0x58] sm:$0xff]
    %v70 = vld [vmem:[%s4] sm:$0x1]
    %v72 = vperm.slane %v70, 0
    %vm74 = vcmask 785408
    %v76 = vsel %vm74, %v42, 0
    %v79 = vsel %vm74, %v43, 0
    %v82 = vsel %vm74, %v44, 0
    %v85 = vsel %vm74, %v45, 0
    %v88 = vsel %vm74, %v46, 0
    %v91 = vsel %vm74, %v47, 0
    %v94 = vsel %vm74, %v48, 0
    %v97 = vsel %vm74, %v49, 0
    %v100 = vsel %vm74, %v50, 0
    %v103 = vsel %vm74, %v51, 0
    %v106 = vsel %vm74, %v52, 0
    %v109 = vsel %vm74, %v53, 0
    %v112 = vsel %vm74, %v54, 0
    %v115 = vsel %vm74, %v55, 0
    %v118 = vsel %vm74, %v56, 0
    %v121 = vsel %vm74, %v57, 0
    %123 = vmatpush.msra.mxu0 0.0
    %124 = vmatpush.msra.mxu0 0.0
    %125 = vmatpush.msra.mxu0 0.0
    %126 = vmatpush.msra.mxu0 0.0
    %127 = vmatpush.msra.mxu0 %v69
    %128 = vmatpush.msra.mxu0 %v68
    %129 = vmatpush.msra.mxu0 %v67
    %130 = vmatpush.msra.mxu0 %v66
    %131 = vmatpush.msra.mxu0 %v65
    %132 = vmatpush.msra.mxu0 %v64
    %133 = vmatpush.msra.mxu0 %v63
    %134 = vmatpush.msra.mxu0 %v62
    %135 = vmatpush.msra.mxu0 %v61
    %136 = vmatpush.msra.mxu0 %v60
    %137 = vmatpush.msra.mxu0 %v59
    %138 = vmatpush.msra.mxu0 %v58
    %139 = vmatmul.f32.gmra.mxu0 %v76
    %v140 = vpop.f32.mrf.mxu0
    %v141 = vadd.f32 %v72, %v140
    %142 = vmatmul.f32.gmra.mxu0 %v79
    %v143 = vpop.f32.mrf.mxu0
    %v144 = vadd.f32 %v72, %v143
    %145 = vmatmul.f32.gmra.mxu0 %v82
    %v146 = vpop.f32.mrf.mxu0
    %v147 = vadd.f32 %v72, %v146
    %148 = vmatmul.f32.gmra.mxu0 %v85
    %v149 = vpop.f32.mrf.mxu0
    %v150 = vadd.f32 %v72, %v149
    %151 = vmatmul.f32.gmra.mxu0 %v88
    %v152 = vpop.f32.mrf.mxu0
    %v153 = vadd.f32 %v72, %v152
    %154 = vmatmul.f32.gmra.mxu0 %v91
    %v155 = vpop.f32.mrf.mxu0
    %v156 = vadd.f32 %v72, %v155
    %157 = vmatmul.f32.gmra.mxu0 %v94
    %v158 = vpop.f32.mrf.mxu0
    %v159 = vadd.f32 %v72, %v158
    %160 = vmatmul.f32.gmra.mxu0 %v97
    %v161 = vpop.f32.mrf.mxu0
    %v162 = vadd.f32 %v72, %v161
    %163 = vmatmul.f32.gmra.mxu0 %v100
    %v164 = vpop.f32.mrf.mxu0
    %v165 = vadd.f32 %v72, %v164
    %166 = vmatmul.f32.gmra.mxu0 %v103
    %v167 = vpop.f32.mrf.mxu0
    %v168 = vadd.f32 %v72, %v167
    %169 = vmatmul.f32.gmra.mxu0 %v106
    %v170 = vpop.f32.mrf.mxu0
    %v171 = vadd.f32 %v72, %v170
    %172 = vmatmul.f32.gmra.mxu0 %v109
    %v173 = vpop.f32.mrf.mxu0
    %v174 = vadd.f32 %v72, %v173
    %175 = vmatmul.f32.gmra.mxu0 %v112
    %v176 = vpop.f32.mrf.mxu0
    %v177 = vadd.f32 %v72, %v176
    %178 = vmatmul.f32.gmra.mxu0 %v115
    %v179 = vpop.f32.mrf.mxu0
    %v180 = vadd.f32 %v72, %v179
    %181 = vmatmul.f32.gmra.mxu0 %v118
    %v182 = vpop.f32.mrf.mxu0
    %v183 = vadd.f32 %v72, %v182
    %184 = vmatmul.f32.gmra.mxu0 %v121
    %v185 = vpop.f32.mrf.mxu0
    %v186 = vadd.f32 %v72, %v185
    %187 = vdwg.mxu0
    %v188 = vld [vmem:[#allocation4] sm:$0xff]
    %v189 = vld [vmem:[#allocation4 + $0x8] sm:$0xff]
    %v190 = vld [vmem:[#allocation4 + $0x10] sm:$0xff]
    %v191 = vld [vmem:[#allocation4 + $0x18] sm:$0xff]
    %v192 = vld [vmem:[#allocation4 + $0x20] sm:$0xff]
    %v193 = vld [vmem:[#allocation4 + $0x28] sm:$0xff]
    %v194 = vld [vmem:[#allocation4 + $0x30] sm:$0xff]
    %v195 = vld [vmem:[#allocation4 + $0x38] sm:$0xff]
    %212 = vrot.lane.b32.xlu0 %v141, 64
    %v213 = vpop.permute.xlu0 %212
    %214 = vrot.lane.b32.xlu0 %v144, 64
    %v215 = vpop.permute.xlu0 %214
    %216 = vrot.lane.b32.xlu0 %v147, 64
    %v217 = vpop.permute.xlu0 %216
    %218 = vrot.lane.b32.xlu0 %v150, 64
    %v219 = vpop.permute.xlu0 %218
    %220 = vrot.lane.b32.xlu0 %v153, 64
    %v221 = vpop.permute.xlu0 %220
    %222 = vrot.lane.b32.xlu0 %v156, 64
    %v223 = vpop.permute.xlu0 %222
    %224 = vrot.lane.b32.xlu0 %v159, 64
    %v225 = vpop.permute.xlu0 %224
    %226 = vrot.lane.b32.xlu0 %v162, 64
    %v227 = vpop.permute.xlu0 %226
    %228 = vrot.lane.b32.xlu0 %v165, 64
    %v229 = vpop.permute.xlu0 %228
    %230 = vrot.lane.b32.xlu0 %v168, 64
    %v231 = vpop.permute.xlu0 %230
    %232 = vrot.lane.b32.xlu0 %v171, 64
    %v233 = vpop.permute.xlu0 %232
    %234 = vrot.lane.b32.xlu0 %v174, 64
    %v235 = vpop.permute.xlu0 %234
    %236 = vrot.lane.b32.xlu0 %v177, 64
    %v237 = vpop.permute.xlu0 %236
    %238 = vrot.lane.b32.xlu0 %v180, 64
    %v239 = vpop.permute.xlu0 %238
    %240 = vrot.lane.b32.xlu0 %v183, 64
    %v241 = vpop.permute.xlu0 %240
    %242 = vrot.lane.b32.xlu0 %v186, 64
    %v243 = vpop.permute.xlu0 %242
    %vm244 = vcmask 261120
    %v245 = vsel %vm244, %v213, 0
    %v247 = vsel %vm244, %v215, 0
    %v249 = vsel %vm244, %v217, 0
    %v251 = vsel %vm244, %v219, 0
    %v253 = vsel %vm244, %v221, 0
    %v255 = vsel %vm244, %v223, 0
    %v257 = vsel %vm244, %v225, 0
    %v259 = vsel %vm244, %v227, 0
    %v261 = vsel %vm244, %v229, 0
    %v263 = vsel %vm244, %v231, 0
    %v265 = vsel %vm244, %v233, 0
    %v267 = vsel %vm244, %v235, 0
    %v269 = vsel %vm244, %v237, 0
    %v271 = vsel %vm244, %v239, 0
    %v273 = vsel %vm244, %v241, 0
    %v275 = vsel %vm244, %v243, 0
    %277 = vmatpush.msra.mxu0 0.0
    %278 = vmatpush.msra.mxu0 0.0
    %279 = vmatpush.msra.mxu0 0.0
    %280 = vmatpush.msra.mxu0 0.0
    %281 = vmatpush.msra.mxu0 0.0
    %282 = vmatpush.msra.mxu0 0.0
    %283 = vmatpush.msra.mxu0 0.0
    %284 = vmatpush.msra.mxu0 0.0
    %285 = vmatpush.msra.mxu0 0.0
    %286 = vmatpush.msra.mxu0 0.0
    %287 = vmatpush.msra.mxu0 0.0
    %288 = vmatpush.msra.mxu0 0.0
    %289 = vmatpush.msra.mxu0 %v194
    %290 = vmatpush.msra.mxu0 %v192
    %291 = vmatpush.msra.mxu0 %v190
    %292 = vmatpush.msra.mxu0 %v188
    %293 = vmatmul.f32.gmra.mxu0 %v245
    %v294 = vpop.f32.mrf.mxu0
    %v295 = vadd.f32 0.0, %v294
    %296 = vmatmul.f32.gmra.mxu0 %v247
    %v297 = vpop.f32.mrf.mxu0
    %v298 = vadd.f32 0.0, %v297
    %299 = vmatmul.f32.gmra.mxu0 %v249
    %v300 = vpop.f32.mrf.mxu0
    %v301 = vadd.f32 0.0, %v300
    %302 = vmatmul.f32.gmra.mxu0 %v251
    %v303 = vpop.f32.mrf.mxu0
    %v304 = vadd.f32 0.0, %v303
    %305 = vmatmul.f32.gmra.mxu0 %v253
    %v306 = vpop.f32.mrf.mxu0
    %v307 = vadd.f32 0.0, %v306
    %308 = vmatmul.f32.gmra.mxu0 %v255
    %v309 = vpop.f32.mrf.mxu0
    %v310 = vadd.f32 0.0, %v309
    %311 = vmatmul.f32.gmra.mxu0 %v257
    %v312 = vpop.f32.mrf.mxu0
    %v313 = vadd.f32 0.0, %v312
    %314 = vmatmul.f32.gmra.mxu0 %v259
    %v315 = vpop.f32.mrf.mxu0
    %v316 = vadd.f32 0.0, %v315
    %317 = vmatmul.f32.gmra.mxu0 %v261
    %v318 = vpop.f32.mrf.mxu0
    %v319 = vadd.f32 0.0, %v318
    %320 = vmatmul.f32.gmra.mxu0 %v263
    %v321 = vpop.f32.mrf.mxu0
    %v322 = vadd.f32 0.0, %v321
    %323 = vmatmul.f32.gmra.mxu0 %v265
    %v324 = vpop.f32.mrf.mxu0
    %v325 = vadd.f32 0.0, %v324
    %326 = vmatmul.f32.gmra.mxu0 %v267
    %v327 = vpop.f32.mrf.mxu0
    %v328 = vadd.f32 0.0, %v327
    %329 = vmatmul.f32.gmra.mxu0 %v269
    %v330 = vpop.f32.mrf.mxu0
    %v331 = vadd.f32 0.0, %v330
    %332 = vmatmul.f32.gmra.mxu0 %v271
    %v333 = vpop.f32.mrf.mxu0
    %v334 = vadd.f32 0.0, %v333
    %335 = vmatmul.f32.gmra.mxu0 %v273
    %v336 = vpop.f32.mrf.mxu0
    %v337 = vadd.f32 0.0, %v336
    %338 = vmatmul.f32.gmra.mxu0 %v275
    %v339 = vpop.f32.mrf.mxu0
    %v340 = vadd.f32 0.0, %v339
    %341 = vdwg.mxu0
    %342 = vmatpush.msra.mxu0 0.0
    %343 = vmatpush.msra.mxu0 0.0
    %344 = vmatpush.msra.mxu0 0.0
    %345 = vmatpush.msra.mxu0 0.0
    %346 = vmatpush.msra.mxu0 0.0
    %347 = vmatpush.msra.mxu0 0.0
    %348 = vmatpush.msra.mxu0 0.0
    %349 = vmatpush.msra.mxu0 0.0
    %350 = vmatpush.msra.mxu0 0.0
    %351 = vmatpush.msra.mxu0 0.0
    %352 = vmatpush.msra.mxu0 0.0
    %353 = vmatpush.msra.mxu0 0.0
    %354 = vmatpush.msra.mxu0 %v195
    %355 = vmatpush.msra.mxu0 %v193
    %356 = vmatpush.msra.mxu0 %v191
    %357 = vmatpush.msra.mxu0 %v189
    %358 = vmatmul.f32.gmra.mxu0 %v245
    %v359 = vpop.f32.mrf.mxu0
    %v360 = vadd.f32 0.0, %v359
    %361 = vmatmul.f32.gmra.mxu0 %v247
    %v362 = vpop.f32.mrf.mxu0
    %v363 = vadd.f32 0.0, %v362
    %364 = vmatmul.f32.gmra.mxu0 %v249
    %v365 = vpop.f32.mrf.mxu0
    %v366 = vadd.f32 0.0, %v365
    %367 = vmatmul.f32.gmra.mxu0 %v251
    %v368 = vpop.f32.mrf.mxu0
    %v369 = vadd.f32 0.0, %v368
    %370 = vmatmul.f32.gmra.mxu0 %v253
    %v371 = vpop.f32.mrf.mxu0
    %v372 = vadd.f32 0.0, %v371
    %373 = vmatmul.f32.gmra.mxu0 %v255
    %v374 = vpop.f32.mrf.mxu0
    %v375 = vadd.f32 0.0, %v374
    %376 = vmatmul.f32.gmra.mxu0 %v257
    %v377 = vpop.f32.mrf.mxu0
    %v378 = vadd.f32 0.0, %v377
    %379 = vmatmul.f32.gmra.mxu0 %v259
    %v380 = vpop.f32.mrf.mxu0
    %v381 = vadd.f32 0.0, %v380
    %382 = vmatmul.f32.gmra.mxu0 %v261
    %v383 = vpop.f32.mrf.mxu0
    %v384 = vadd.f32 0.0, %v383
    %385 = vmatmul.f32.gmra.mxu0 %v263
    %v386 = vpop.f32.mrf.mxu0
    %v387 = vadd.f32 0.0, %v386
    %388 = vmatmul.f32.gmra.mxu0 %v265
    %v389 = vpop.f32.mrf.mxu0
    %v390 = vadd.f32 0.0, %v389
    %391 = vmatmul.f32.gmra.mxu0 %v267
    %v392 = vpop.f32.mrf.mxu0
    %v393 = vadd.f32 0.0, %v392
    %394 = vmatmul.f32.gmra.mxu0 %v269
    %v395 = vpop.f32.mrf.mxu0
    %v396 = vadd.f32 0.0, %v395
    %397 = vmatmul.f32.gmra.mxu0 %v271
    %v398 = vpop.f32.mrf.mxu0
    %v399 = vadd.f32 0.0, %v398
    %400 = vmatmul.f32.gmra.mxu0 %v273
    %v401 = vpop.f32.mrf.mxu0
    %v402 = vadd.f32 0.0, %v401
    %403 = vmatmul.f32.gmra.mxu0 %v275
    %v404 = vpop.f32.mrf.mxu0
    %v405 = vadd.f32 0.0, %v404
    %406 = vdwg.mxu0
    %407 = vst [vmem:[#allocation2] sm:$0xff] %v295
    %408 = vst [vmem:[#allocation2 + $0x8] sm:$0xff] %v360
    %409 = vst [vmem:[#allocation2 + $0x10] sm:$0xff] %v298
    %410 = vst [vmem:[#allocation2 + $0x18] sm:$0xff] %v363
    %411 = vst [vmem:[#allocation2 + $0x20] sm:$0xff] %v301
    %412 = vst [vmem:[#allocation2 + $0x28] sm:$0xff] %v366
    %413 = vst [vmem:[#allocation2 + $0x30] sm:$0xff] %v304
    %414 = vst [vmem:[#allocation2 + $0x38] sm:$0xff] %v369
    %415 = vst [vmem:[#allocation2 + $0x40] sm:$0xff] %v307
    %416 = vst [vmem:[#allocation2 + $0x48] sm:$0xff] %v372
    %417 = vst [vmem:[#allocation2 + $0x50] sm:$0xff] %v310
    %418 = vst [vmem:[#allocation2 + $0x58] sm:$0xff] %v375
    %419 = vst [vmem:[#allocation2 + $0x60] sm:$0xff] %v313
    %420 = vst [vmem:[#allocation2 + $0x68] sm:$0xff] %v378
    %421 = vst [vmem:[#allocation2 + $0x70] sm:$0xff] %v316
    %422 = vst [vmem:[#allocation2 + $0x78] sm:$0xff] %v381
    %423 = vst [vmem:[#allocation2 + $0x80] sm:$0xff] %v319
    %424 = vst [vmem:[#allocation2 + $0x88] sm:$0xff] %v384
    %425 = vst [vmem:[#allocation2 + $0x90] sm:$0xff] %v322
    %426 = vst [vmem:[#allocation2 + $0x98] sm:$0xff] %v387
    %427 = vst [vmem:[#allocation2 + $0xa0] sm:$0xff] %v325
    %428 = vst [vmem:[#allocation2 + $0xa8] sm:$0xff] %v390
    %429 = vst [vmem:[#allocation2 + $0xb0] sm:$0xff] %v328
    %430 = vst [vmem:[#allocation2 + $0xb8] sm:$0xff] %v393
    %431 = vst [vmem:[#allocation2 + $0xc0] sm:$0xff] %v331
    %432 = vst [vmem:[#allocation2 + $0xc8] sm:$0xff] %v396
    %433 = vst [vmem:[#allocation2 + $0xd0] sm:$0xff] %v334
    %434 = vst [vmem:[#allocation2 + $0xd8] sm:$0xff] %v399
    %435 = vst [vmem:[#allocation2 + $0xe0] sm:$0xff] %v337
    %436 = vst [vmem:[#allocation2 + $0xe8] sm:$0xff] %v402
    %437 = vst [vmem:[#allocation2 + $0xf0] sm:$0xff] %v340
    %438 = vst [vmem:[#allocation2 + $0xf8] sm:$0xff] %v405
    %v439 = vld [vmem:[%s2] sm:$0xff]
    %v440 = vld [vmem:[%s2 + $0x8] sm:$0xff]
    %v441 = vld [vmem:[%s2 + $0x10] sm:$0xff]
    %v442 = vld [vmem:[%s2 + $0x18] sm:$0xff]
    %v443 = vld [vmem:[%s2 + $0x20] sm:$0xff]
    %v444 = vld [vmem:[%s2 + $0x28] sm:$0xff]
    %v445 = vld [vmem:[%s2 + $0x30] sm:$0xff]
    %v446 = vld [vmem:[%s2 + $0x38] sm:$0xff]
    %v447 = vld [vmem:[%s2 + $0x40] sm:$0xff]
    %v448 = vld [vmem:[%s2 + $0x48] sm:$0xff]
    %v449 = vld [vmem:[%s2 + $0x50] sm:$0xff]
    %v450 = vld [vmem:[%s2 + $0x58] sm:$0xff]
    %v451 = vld [vmem:[%s2 + $0x60] sm:$0xff]
    %v452 = vld [vmem:[%s2 + $0x68] sm:$0xff]
    %v453 = vld [vmem:[%s2 + $0x70] sm:$0xff]
    %v454 = vld [vmem:[%s2 + $0x78] sm:$0xff]
    %v455 = vld [vmem:[%s1] sm:$0x1]
    %v457 = vperm.slane %v455, 0
    %v459 = vadd.f32 %v439, %v457
    %v460 = vadd.f32 %v440, %v457
    %v461 = vadd.f32 %v441, %v457
    %v462 = vadd.f32 %v442, %v457
    %v463 = vadd.f32 %v443, %v457
    %v464 = vadd.f32 %v444, %v457
    %v465 = vadd.f32 %v445, %v457
    %v466 = vadd.f32 %v446, %v457
    %v467 = vadd.f32 %v447, %v457
    %v468 = vadd.f32 %v448, %v457
    %v469 = vadd.f32 %v449, %v457
    %v470 = vadd.f32 %v450, %v457
    %v471 = vadd.f32 %v451, %v457
    %v472 = vadd.f32 %v452, %v457
    %v473 = vadd.f32 %v453, %v457
    %v474 = vadd.f32 %v454, %v457
    %475 = vst [vmem:[#allocation3] sm:$0xff] %v459
    %476 = vst [vmem:[#allocation3 + $0x8] sm:$0xff] %v460
    %477 = vst [vmem:[#allocation3 + $0x10] sm:$0xff] %v461
    %478 = vst [vmem:[#allocation3 + $0x18] sm:$0xff] %v462
    %479 = vst [vmem:[#allocation3 + $0x20] sm:$0xff] %v463
    %480 = vst [vmem:[#allocation3 + $0x28] sm:$0xff] %v464
    %481 = vst [vmem:[#allocation3 + $0x30] sm:$0xff] %v465
    %482 = vst [vmem:[#allocation3 + $0x38] sm:$0xff] %v466
    %483 = vst [vmem:[#allocation3 + $0x40] sm:$0xff] %v467
    %484 = vst [vmem:[#allocation3 + $0x48] sm:$0xff] %v468
    %485 = vst [vmem:[#allocation3 + $0x50] sm:$0xff] %v469
    %486 = vst [vmem:[#allocation3 + $0x58] sm:$0xff] %v470
    %487 = vst [vmem:[#allocation3 + $0x60] sm:$0xff] %v471
    %488 = vst [vmem:[#allocation3 + $0x68] sm:$0xff] %v472
    %489 = vst [vmem:[#allocation3 + $0x70] sm:$0xff] %v473
    %490 = vst [vmem:[#allocation3 + $0x78] sm:$0xff] %v474
    %v491 = vld [vmem:[#allocation3] sm:$0xff]
    %v492 = vld [vmem:[#allocation3 + $0x8] sm:$0xff]
    %v493 = vld [vmem:[#allocation3 + $0x10] sm:$0xff]
    %v494 = vld [vmem:[#allocation3 + $0x18] sm:$0xff]
    %v495 = vld [vmem:[#allocation3 + $0x20] sm:$0xff]
    %v496 = vld [vmem:[#allocation3 + $0x28] sm:$0xff]
    %v497 = vld [vmem:[#allocation3 + $0x30] sm:$0xff]
    %v498 = vld [vmem:[#allocation3 + $0x38] sm:$0xff]
    %v499 = vld [vmem:[#allocation3 + $0x40] sm:$0xff]
    %v500 = vld [vmem:[#allocation3 + $0x48] sm:$0xff]
    %v501 = vld [vmem:[#allocation3 + $0x50] sm:$0xff]
    %v502 = vld [vmem:[#allocation3 + $0x58] sm:$0xff]
    %v503 = vld [vmem:[#allocation3 + $0x60] sm:$0xff]
    %v504 = vld [vmem:[#allocation3 + $0x68] sm:$0xff]
    %v505 = vld [vmem:[#allocation3 + $0x70] sm:$0xff]
    %v506 = vld [vmem:[#allocation3 + $0x78] sm:$0xff]
    %507 = vrot.lane.b32.xlu0 %v141, 96
    %v508 = vpop.permute.xlu0 %507
    %509 = vrot.lane.b32.xlu0 %v144, 96
    %v510 = vpop.permute.xlu0 %509
    %511 = vrot.lane.b32.xlu0 %v147, 96
    %v512 = vpop.permute.xlu0 %511
    %513 = vrot.lane.b32.xlu0 %v150, 96
    %v514 = vpop.permute.xlu0 %513
    %515 = vrot.lane.b32.xlu0 %v153, 96
    %v516 = vpop.permute.xlu0 %515
    %517 = vrot.lane.b32.xlu0 %v156, 96
    %v518 = vpop.permute.xlu0 %517
    %519 = vrot.lane.b32.xlu0 %v159, 96
    %v520 = vpop.permute.xlu0 %519
    %521 = vrot.lane.b32.xlu0 %v162, 96
    %v522 = vpop.permute.xlu0 %521
    %523 = vrot.lane.b32.xlu0 %v165, 96
    %v524 = vpop.permute.xlu0 %523
    %525 = vrot.lane.b32.xlu0 %v168, 96
    %v526 = vpop.permute.xlu0 %525
    %527 = vrot.lane.b32.xlu0 %v171, 96
    %v528 = vpop.permute.xlu0 %527
    %529 = vrot.lane.b32.xlu0 %v174, 96
    %v530 = vpop.permute.xlu0 %529
    %531 = vrot.lane.b32.xlu0 %v177, 96
    %v532 = vpop.permute.xlu0 %531
    %533 = vrot.lane.b32.xlu0 %v180, 96
    %v534 = vpop.permute.xlu0 %533
    %535 = vrot.lane.b32.xlu0 %v183, 96
    %v536 = vpop.permute.xlu0 %535
    %537 = vrot.lane.b32.xlu0 %v186, 96
    %v538 = vpop.permute.xlu0 %537
    %vm539 = vcmask 31744
    %v540 = vsel %vm539, %v141, 0
    %v542 = vsel %vm539, %v144, 0
    %v544 = vsel %vm539, %v147, 0
    %v546 = vsel %vm539, %v150, 0
    %v548 = vsel %vm539, %v153, 0
    %v550 = vsel %vm539, %v156, 0
    %v552 = vsel %vm539, %v159, 0
    %v554 = vsel %vm539, %v162, 0
    %v556 = vsel %vm539, %v165, 0
    %v558 = vsel %vm539, %v168, 0
    %v560 = vsel %vm539, %v171, 0
    %v562 = vsel %vm539, %v174, 0
    %v564 = vsel %vm539, %v177, 0
    %v566 = vsel %vm539, %v180, 0
    %v568 = vsel %vm539, %v183, 0
    %v570 = vsel %vm539, %v186, 0
    %v572 = vsel %vm539, %v508, 0
    %v574 = vsel %vm539, %v510, 0
    %v576 = vsel %vm539, %v512, 0
    %v578 = vsel %vm539, %v514, 0
    %v580 = vsel %vm539, %v516, 0
    %v582 = vsel %vm539, %v518, 0
    %v584 = vsel %vm539, %v520, 0
    %v586 = vsel %vm539, %v522, 0
    %v588 = vsel %vm539, %v524, 0
    %v590 = vsel %vm539, %v526, 0
    %v592 = vsel %vm539, %v528, 0
    %v594 = vsel %vm539, %v530, 0
    %v596 = vsel %vm539, %v532, 0
    %v598 = vsel %vm539, %v534, 0
    %v600 = vsel %vm539, %v536, 0
    %v602 = vsel %vm539, %v538, 0
    %604 = vmatpush.xpose.msra.mxu0 %v602
    %605 = vmatpush.xpose.msra.mxu0 %v600
    %606 = vmatpush.xpose.msra.mxu0 %v598
    %607 = vmatpush.xpose.msra.mxu0 %v596
    %608 = vmatpush.xpose.msra.mxu0 %v594
    %609 = vmatpush.xpose.msra.mxu0 %v592
    %610 = vmatpush.xpose.msra.mxu0 %v590
    %611 = vmatpush.xpose.msra.mxu0 %v588
    %612 = vmatpush.xpose.msra.mxu0 %v586
    %613 = vmatpush.xpose.msra.mxu0 %v584
    %614 = vmatpush.xpose.msra.mxu0 %v582
    %615 = vmatpush.xpose.msra.mxu0 %v580
    %616 = vmatpush.xpose.msra.mxu0 %v578
    %617 = vmatpush.xpose.msra.mxu0 %v576
    %618 = vmatpush.xpose.msra.mxu0 %v574
    %619 = vmatpush.xpose.msra.mxu0 %v572
    %620 = vmatmul.f32.gmra.mxu0 %v540
    %v621 = vpop.f32.mrf.mxu0
    %v622 = vadd.f32 %v491, %v621
    %623 = vmatmul.f32.gmra.mxu0 %v542
    %v624 = vpop.f32.mrf.mxu0
    %v625 = vadd.f32 %v492, %v624
    %626 = vmatmul.f32.gmra.mxu0 %v544
    %v627 = vpop.f32.mrf.mxu0
    %v628 = vadd.f32 %v493, %v627
    %629 = vmatmul.f32.gmra.mxu0 %v546
    %v630 = vpop.f32.mrf.mxu0
    %v631 = vadd.f32 %v494, %v630
    %632 = vmatmul.f32.gmra.mxu0 %v548
    %v633 = vpop.f32.mrf.mxu0
    %v634 = vadd.f32 %v495, %v633
    %635 = vmatmul.f32.gmra.mxu0 %v550
    %v636 = vpop.f32.mrf.mxu0
    %v637 = vadd.f32 %v496, %v636
    %638 = vmatmul.f32.gmra.mxu0 %v552
    %v639 = vpop.f32.mrf.mxu0
    %v640 = vadd.f32 %v497, %v639
    %641 = vmatmul.f32.gmra.mxu0 %v554
    %v642 = vpop.f32.mrf.mxu0
    %v643 = vadd.f32 %v498, %v642
    %644 = vmatmul.f32.gmra.mxu0 %v556
    %v645 = vpop.f32.mrf.mxu0
    %v646 = vadd.f32 %v499, %v645
    %647 = vmatmul.f32.gmra.mxu0 %v558
    %v648 = vpop.f32.mrf.mxu0
    %v649 = vadd.f32 %v500, %v648
    %650 = vmatmul.f32.gmra.mxu0 %v560
    %v651 = vpop.f32.mrf.mxu0
    %v652 = vadd.f32 %v501, %v651
    %653 = vmatmul.f32.gmra.mxu0 %v562
    %v654 = vpop.f32.mrf.mxu0
    %v655 = vadd.f32 %v502, %v654
    %656 = vmatmul.f32.gmra.mxu0 %v564
    %v657 = vpop.f32.mrf.mxu0
    %v658 = vadd.f32 %v503, %v657
    %659 = vmatmul.f32.gmra.mxu0 %v566
    %v660 = vpop.f32.mrf.mxu0
    %v661 = vadd.f32 %v504, %v660
    %662 = vmatmul.f32.gmra.mxu0 %v568
    %v663 = vpop.f32.mrf.mxu0
    %v664 = vadd.f32 %v505, %v663
    %665 = vmatmul.f32.gmra.mxu0 %v570
    %v666 = vpop.f32.mrf.mxu0
    %v667 = vadd.f32 %v506, %v666
    %668 = vdwg.mxu0
    %669 = vmax.xlane.f32.xlu0 %v622
    %v670 = vpop.xlane.xlu0 %669
    %671 = vmax.xlane.f32.xlu0 %v625
    %v672 = vpop.xlane.xlu0 %671
    %673 = vmax.xlane.f32.xlu0 %v628
    %v674 = vpop.xlane.xlu0 %673
    %675 = vmax.xlane.f32.xlu0 %v631
    %v676 = vpop.xlane.xlu0 %675
    %677 = vmax.xlane.f32.xlu0 %v634
    %v678 = vpop.xlane.xlu0 %677
    %679 = vmax.xlane.f32.xlu0 %v637
    %v680 = vpop.xlane.xlu0 %679
    %681 = vmax.xlane.f32.xlu0 %v640
    %v682 = vpop.xlane.xlu0 %681
    %683 = vmax.xlane.f32.xlu0 %v643
    %v684 = vpop.xlane.xlu0 %683
    %685 = vmax.xlane.f32.xlu0 %v646
    %v686 = vpop.xlane.xlu0 %685
    %687 = vmax.xlane.f32.xlu0 %v649
    %v688 = vpop.xlane.xlu0 %687
    %689 = vmax.xlane.f32.xlu0 %v652
    %v690 = vpop.xlane.xlu0 %689
    %691 = vmax.xlane.f32.xlu0 %v655
    %v692 = vpop.xlane.xlu0 %691
    %693 = vmax.xlane.f32.xlu0 %v658
    %v694 = vpop.xlane.xlu0 %693
    %695 = vmax.xlane.f32.xlu0 %v661
    %v696 = vpop.xlane.xlu0 %695
    %697 = vmax.xlane.f32.xlu0 %v664
    %v698 = vpop.xlane.xlu0 %697
    %699 = vmax.xlane.f32.xlu0 %v667
    %v700 = vpop.xlane.xlu0 %699
    %v701 = vsub.f32 %v622, %v670
    %v702 = vsub.f32 %v625, %v672
    %v703 = vsub.f32 %v628, %v674
    %v704 = vsub.f32 %v631, %v676
    %v705 = vsub.f32 %v634, %v678
    %v706 = vsub.f32 %v637, %v680
    %v707 = vsub.f32 %v640, %v682
    %v708 = vsub.f32 %v643, %v684
    %v709 = vsub.f32 %v646, %v686
    %v710 = vsub.f32 %v649, %v688
    %v711 = vsub.f32 %v652, %v690
    %v712 = vsub.f32 %v655, %v692
    %v713 = vsub.f32 %v658, %v694
    %v714 = vsub.f32 %v661, %v696
    %v715 = vsub.f32 %v664, %v698
    %v716 = vsub.f32 %v667, %v700
    %v717 = vmul.f32 %v701, 1.442695
    %v718 = vpow.pop %v717
    %v719 = vmul.f32 %v702, 1.442695
    %v720 = vpow.pop %v719
    %v721 = vmul.f32 %v703, 1.442695
    %v722 = vpow.pop %v721
    %v723 = vmul.f32 %v704, 1.442695
    %v724 = vpow.pop %v723
    %v725 = vmul.f32 %v705, 1.442695
    %v726 = vpow.pop %v725
    %v727 = vmul.f32 %v706, 1.442695
    %v728 = vpow.pop %v727
    %v729 = vmul.f32 %v707, 1.442695
    %v730 = vpow.pop %v729
    %v731 = vmul.f32 %v708, 1.442695
    %v732 = vpow.pop %v731
    %v733 = vmul.f32 %v709, 1.442695
    %v734 = vpow.pop %v733
    %v735 = vmul.f32 %v710, 1.442695
    %v736 = vpow.pop %v735
    %v737 = vmul.f32 %v711, 1.442695
    %v738 = vpow.pop %v737
    %v739 = vmul.f32 %v712, 1.442695
    %v740 = vpow.pop %v739
    %v741 = vmul.f32 %v713, 1.442695
    %v742 = vpow.pop %v741
    %v743 = vmul.f32 %v714, 1.442695
    %v744 = vpow.pop %v743
    %v745 = vmul.f32 %v715, 1.442695
    %v746 = vpow.pop %v745
    %v747 = vmul.f32 %v716, 1.442695
    %v748 = vpow.pop %v747
    %749 = vadd.xlane.f32.xlu0 %v718
    %v750 = vpop.xlane.xlu0 %749
    %751 = vadd.xlane.f32.xlu0 %v720
    %v752 = vpop.xlane.xlu0 %751
    %753 = vadd.xlane.f32.xlu0 %v722
    %v754 = vpop.xlane.xlu0 %753
    %755 = vadd.xlane.f32.xlu0 %v724
    %v756 = vpop.xlane.xlu0 %755
    %757 = vadd.xlane.f32.xlu0 %v726
    %v758 = vpop.xlane.xlu0 %757
    %759 = vadd.xlane.f32.xlu0 %v728
    %v760 = vpop.xlane.xlu0 %759
    %761 = vadd.xlane.f32.xlu0 %v730
    %v762 = vpop.xlane.xlu0 %761
    %763 = vadd.xlane.f32.xlu0 %v732
    %v764 = vpop.xlane.xlu0 %763
    %765 = vadd.xlane.f32.xlu0 %v734
    %v766 = vpop.xlane.xlu0 %765
    %767 = vadd.xlane.f32.xlu0 %v736
    %v768 = vpop.xlane.xlu0 %767
    %769 = vadd.xlane.f32.xlu0 %v738
    %v770 = vpop.xlane.xlu0 %769
    %771 = vadd.xlane.f32.xlu0 %v740
    %v772 = vpop.xlane.xlu0 %771
    %773 = vadd.xlane.f32.xlu0 %v742
    %v774 = vpop.xlane.xlu0 %773
    %775 = vadd.xlane.f32.xlu0 %v744
    %v776 = vpop.xlane.xlu0 %775
    %777 = vadd.xlane.f32.xlu0 %v746
    %v778 = vpop.xlane.xlu0 %777
    %779 = vadd.xlane.f32.xlu0 %v748
    %v780 = vpop.xlane.xlu0 %779
    %v781 = vrcp.pop %v750
    %v782 = vrcp.pop %v752
    %v783 = vrcp.pop %v754
    %v784 = vrcp.pop %v756
    %v785 = vrcp.pop %v758
    %v786 = vrcp.pop %v760
    %v787 = vrcp.pop %v762
    %v788 = vrcp.pop %v764
    %v789 = vrcp.pop %v766
    %v790 = vrcp.pop %v768
    %v791 = vrcp.pop %v770
    %v792 = vrcp.pop %v772
    %v793 = vrcp.pop %v774
    %v794 = vrcp.pop %v776
    %v795 = vrcp.pop %v778
    %v796 = vrcp.pop %v780
    %v797 = vmul.f32 %v718, %v781
    %v798 = vmul.f32 %v720, %v782
    %v799 = vmul.f32 %v722, %v783
    %v800 = vmul.f32 %v724, %v784
    %v801 = vmul.f32 %v726, %v785
    %v802 = vmul.f32 %v728, %v786
    %v803 = vmul.f32 %v730, %v787
    %v804 = vmul.f32 %v732, %v788
    %v805 = vmul.f32 %v734, %v789
    %v806 = vmul.f32 %v736, %v790
    %v807 = vmul.f32 %v738, %v791
    %v808 = vmul.f32 %v740, %v792
    %v809 = vmul.f32 %v742, %v793
    %v810 = vmul.f32 %v744, %v794
    %v811 = vmul.f32 %v746, %v795
    %v812 = vmul.f32 %v748, %v796
    %v813 = vld [vmem:[#allocation2] sm:$0xff]
    %v814 = vld [vmem:[#allocation2 + $0x10] sm:$0xff]
    %v815 = vld [vmem:[#allocation2 + $0x20] sm:$0xff]
    %v816 = vld [vmem:[#allocation2 + $0x30] sm:$0xff]
    %v817 = vld [vmem:[#allocation2 + $0x40] sm:$0xff]
    %v818 = vld [vmem:[#allocation2 + $0x50] sm:$0xff]
    %v819 = vld [vmem:[#allocation2 + $0x60] sm:$0xff]
    %v820 = vld [vmem:[#allocation2 + $0x70] sm:$0xff]
    %v821 = vld [vmem:[#allocation2 + $0x80] sm:$0xff]
    %v822 = vld [vmem:[#allocation2 + $0x90] sm:$0xff]
    %v823 = vld [vmem:[#allocation2 + $0xa0] sm:$0xff]
    %v824 = vld [vmem:[#allocation2 + $0xb0] sm:$0xff]
    %v825 = vld [vmem:[#allocation2 + $0xc0] sm:$0xff]
    %v826 = vld [vmem:[#allocation2 + $0xd0] sm:$0xff]
    %v827 = vld [vmem:[#allocation2 + $0xe0] sm:$0xff]
    %v828 = vld [vmem:[#allocation2 + $0xf0] sm:$0xff]
    %v829 = vld [vmem:[#allocation3] sm:$0xff]
    %v830 = vld [vmem:[#allocation3 + $0x8] sm:$0xff]
    %v831 = vld [vmem:[#allocation3 + $0x10] sm:$0xff]
    %v832 = vld [vmem:[#allocation3 + $0x18] sm:$0xff]
    %v833 = vld [vmem:[#allocation3 + $0x20] sm:$0xff]
    %v834 = vld [vmem:[#allocation3 + $0x28] sm:$0xff]
    %v835 = vld [vmem:[#allocation3 + $0x30] sm:$0xff]
    %v836 = vld [vmem:[#allocation3 + $0x38] sm:$0xff]
    %v837 = vld [vmem:[#allocation3 + $0x40] sm:$0xff]
    %v838 = vld [vmem:[#allocation3 + $0x48] sm:$0xff]
    %v839 = vld [vmem:[#allocation3 + $0x50] sm:$0xff]
    %v840 = vld [vmem:[#allocation3 + $0x58] sm:$0xff]
    %v841 = vld [vmem:[#allocation3 + $0x60] sm:$0xff]
    %v842 = vld [vmem:[#allocation3 + $0x68] sm:$0xff]
    %v843 = vld [vmem:[#allocation3 + $0x70] sm:$0xff]
    %v844 = vld [vmem:[#allocation3 + $0x78] sm:$0xff]
    %845 = vrot.lane.b32.xlu0 %v141, 124
    %v846 = vpop.permute.xlu0 %845
    %847 = vrot.lane.b32.xlu0 %v144, 124
    %v848 = vpop.permute.xlu0 %847
    %849 = vrot.lane.b32.xlu0 %v147, 124
    %v850 = vpop.permute.xlu0 %849
    %851 = vrot.lane.b32.xlu0 %v150, 124
    %v852 = vpop.permute.xlu0 %851
    %853 = vrot.lane.b32.xlu0 %v153, 124
    %v854 = vpop.permute.xlu0 %853
    %855 = vrot.lane.b32.xlu0 %v156, 124
    %v856 = vpop.permute.xlu0 %855
    %857 = vrot.lane.b32.xlu0 %v159, 124
    %v858 = vpop.permute.xlu0 %857
    %859 = vrot.lane.b32.xlu0 %v162, 124
    %v860 = vpop.permute.xlu0 %859
    %861 = vrot.lane.b32.xlu0 %v165, 124
    %v862 = vpop.permute.xlu0 %861
    %863 = vrot.lane.b32.xlu0 %v168, 124
    %v864 = vpop.permute.xlu0 %863
    %865 = vrot.lane.b32.xlu0 %v171, 124
    %v866 = vpop.permute.xlu0 %865
    %867 = vrot.lane.b32.xlu0 %v174, 124
    %v868 = vpop.permute.xlu0 %867
    %869 = vrot.lane.b32.xlu0 %v177, 124
    %v870 = vpop.permute.xlu0 %869
    %871 = vrot.lane.b32.xlu0 %v180, 124
    %v872 = vpop.permute.xlu0 %871
    %873 = vrot.lane.b32.xlu0 %v183, 124
    %v874 = vpop.permute.xlu0 %873
    %875 = vrot.lane.b32.xlu0 %v186, 124
    %v876 = vpop.permute.xlu0 %875
    %877 = vrot.lane.b32.xlu0 %v141, 92
    %v878 = vpop.permute.xlu0 %877
    %879 = vrot.lane.b32.xlu0 %v144, 92
    %v880 = vpop.permute.xlu0 %879
    %881 = vrot.lane.b32.xlu0 %v147, 92
    %v882 = vpop.permute.xlu0 %881
    %883 = vrot.lane.b32.xlu0 %v150, 92
    %v884 = vpop.permute.xlu0 %883
    %885 = vrot.lane.b32.xlu0 %v153, 92
    %v886 = vpop.permute.xlu0 %885
    %887 = vrot.lane.b32.xlu0 %v156, 92
    %v888 = vpop.permute.xlu0 %887
    %889 = vrot.lane.b32.xlu0 %v159, 92
    %v890 = vpop.permute.xlu0 %889
    %891 = vrot.lane.b32.xlu0 %v162, 92
    %v892 = vpop.permute.xlu0 %891
    %893 = vrot.lane.b32.xlu0 %v165, 92
    %v894 = vpop.permute.xlu0 %893
    %895 = vrot.lane.b32.xlu0 %v168, 92
    %v896 = vpop.permute.xlu0 %895
    %897 = vrot.lane.b32.xlu0 %v171, 92
    %v898 = vpop.permute.xlu0 %897
    %899 = vrot.lane.b32.xlu0 %v174, 92
    %v900 = vpop.permute.xlu0 %899
    %901 = vrot.lane.b32.xlu0 %v177, 92
    %v902 = vpop.permute.xlu0 %901
    %903 = vrot.lane.b32.xlu0 %v180, 92
    %v904 = vpop.permute.xlu0 %903
    %905 = vrot.lane.b32.xlu0 %v183, 92
    %v906 = vpop.permute.xlu0 %905
    %907 = vrot.lane.b32.xlu0 %v186, 92
    %v908 = vpop.permute.xlu0 %907
    %v909 = vsel %vm539, %v846, 0
    %v911 = vsel %vm539, %v848, 0
    %v913 = vsel %vm539, %v850, 0
    %v915 = vsel %vm539, %v852, 0
    %v917 = vsel %vm539, %v854, 0
    %v919 = vsel %vm539, %v856, 0
    %v921 = vsel %vm539, %v858, 0
    %v923 = vsel %vm539, %v860, 0
    %v925 = vsel %vm539, %v862, 0
    %v927 = vsel %vm539, %v864, 0
    %v929 = vsel %vm539, %v866, 0
    %v931 = vsel %vm539, %v868, 0
    %v933 = vsel %vm539, %v870, 0
    %v935 = vsel %vm539, %v872, 0
    %v937 = vsel %vm539, %v874, 0
    %v939 = vsel %vm539, %v876, 0
    %v941 = vsel %vm539, %v878, 0
    %v943 = vsel %vm539, %v880, 0
    %v945 = vsel %vm539, %v882, 0
    %v947 = vsel %vm539, %v884, 0
    %v949 = vsel %vm539, %v886, 0
    %v951 = vsel %vm539, %v888, 0
    %v953 = vsel %vm539, %v890, 0
    %v955 = vsel %vm539, %v892, 0
    %v957 = vsel %vm539, %v894, 0
    %v959 = vsel %vm539, %v896, 0
    %v961 = vsel %vm539, %v898, 0
    %v963 = vsel %vm539, %v900, 0
    %v965 = vsel %vm539, %v902, 0
    %v967 = vsel %vm539, %v904, 0
    %v969 = vsel %vm539, %v906, 0
    %v971 = vsel %vm539, %v908, 0
    %973 = vmatpush.xpose.msra.mxu0 %v971
    %974 = vmatpush.xpose.msra.mxu0 %v969
    %975 = vmatpush.xpose.msra.mxu0 %v967
    %976 = vmatpush.xpose.msra.mxu0 %v965
    %977 = vmatpush.xpose.msra.mxu0 %v963
    %978 = vmatpush.xpose.msra.mxu0 %v961
    %979 = vmatpush.xpose.msra.mxu0 %v959
    %980 = vmatpush.xpose.msra.mxu0 %v957
    %981 = vmatpush.xpose.msra.mxu0 %v955
    %982 = vmatpush.xpose.msra.mxu0 %v953
    %983 = vmatpush.xpose.msra.mxu0 %v951
    %984 = vmatpush.xpose.msra.mxu0 %v949
    %985 = vmatpush.xpose.msra.mxu0 %v947
    %986 = vmatpush.xpose.msra.mxu0 %v945
    %987 = vmatpush.xpose.msra.mxu0 %v943
    %988 = vmatpush.xpose.msra.mxu0 %v941
    %989 = vmatmul.f32.gmra.mxu0 %v909
    %v990 = vpop.f32.mrf.mxu0
    %v991 = vadd.f32 %v829, %v990
    %992 = vmatmul.f32.gmra.mxu0 %v911
    %v993 = vpop.f32.mrf.mxu0
    %v994 = vadd.f32 %v830, %v993
    %995 = vmatmul.f32.gmra.mxu0 %v913
    %v996 = vpop.f32.mrf.mxu0
    %v997 = vadd.f32 %v831, %v996
    %998 = vmatmul.f32.gmra.mxu0 %v915
    %v999 = vpop.f32.mrf.mxu0
    %v1000 = vadd.f32 %v832, %v999
    %1001 = vmatmul.f32.gmra.mxu0 %v917
    %v1002 = vpop.f32.mrf.mxu0
    %v1003 = vadd.f32 %v833, %v1002
    %1004 = vmatmul.f32.gmra.mxu0 %v919
    %v1005 = vpop.f32.mrf.mxu0
    %v1006 = vadd.f32 %v834, %v1005
    %1007 = vmatmul.f32.gmra.mxu0 %v921
    %v1008 = vpop.f32.mrf.mxu0
    %v1009 = vadd.f32 %v835, %v1008
    %1010 = vmatmul.f32.gmra.mxu0 %v923
    %v1011 = vpop.f32.mrf.mxu0
    %v1012 = vadd.f32 %v836, %v1011
    %1013 = vmatmul.f32.gmra.mxu0 %v925
    %v1014 = vpop.f32.mrf.mxu0
    %v1015 = vadd.f32 %v837, %v1014
    %1016 = vmatmul.f32.gmra.mxu0 %v927
    %v1017 = vpop.f32.mrf.mxu0
    %v1018 = vadd.f32 %v838, %v1017
    %1019 = vmatmul.f32.gmra.mxu0 %v929
    %v1020 = vpop.f32.mrf.mxu0
    %v1021 = vadd.f32 %v839, %v1020
    %1022 = vmatmul.f32.gmra.mxu0 %v931
    %v1023 = vpop.f32.mrf.mxu0
    %v1024 = vadd.f32 %v840, %v1023
    %1025 = vmatmul.f32.gmra.mxu0 %v933
    %v1026 = vpop.f32.mrf.mxu0
    %v1027 = vadd.f32 %v841, %v1026
    %1028 = vmatmul.f32.gmra.mxu0 %v935
    %v1029 = vpop.f32.mrf.mxu0
    %v1030 = vadd.f32 %v842, %v1029
    %1031 = vmatmul.f32.gmra.mxu0 %v937
    %v1032 = vpop.f32.mrf.mxu0
    %v1033 = vadd.f32 %v843, %v1032
    %1034 = vmatmul.f32.gmra.mxu0 %v939
    %v1035 = vpop.f32.mrf.mxu0
    %v1036 = vadd.f32 %v844, %v1035
    %1037 = vdwg.mxu0
    %1038 = vmax.xlane.f32.xlu0 %v991
    %v1039 = vpop.xlane.xlu0 %1038
    %1040 = vmax.xlane.f32.xlu0 %v994
    %v1041 = vpop.xlane.xlu0 %1040
    %1042 = vmax.xlane.f32.xlu0 %v997
    %v1043 = vpop.xlane.xlu0 %1042
    %1044 = vmax.xlane.f32.xlu0 %v1000
    %v1045 = vpop.xlane.xlu0 %1044
    %1046 = vmax.xlane.f32.xlu0 %v1003
    %v1047 = vpop.xlane.xlu0 %1046
    %1048 = vmax.xlane.f32.xlu0 %v1006
    %v1049 = vpop.xlane.xlu0 %1048
    %1050 = vmax.xlane.f32.xlu0 %v1009
    %v1051 = vpop.xlane.xlu0 %1050
    %1052 = vmax.xlane.f32.xlu0 %v1012
    %v1053 = vpop.xlane.xlu0 %1052
    %1054 = vmax.xlane.f32.xlu0 %v1015
    %v1055 = vpop.xlane.xlu0 %1054
    %1056 = vmax.xlane.f32.xlu0 %v1018
    %v1057 = vpop.xlane.xlu0 %1056
    %1058 = vmax.xlane.f32.xlu0 %v1021
    %v1059 = vpop.xlane.xlu0 %1058
    %1060 = vmax.xlane.f32.xlu0 %v1024
    %v1061 = vpop.xlane.xlu0 %1060
    %1062 = vmax.xlane.f32.xlu0 %v1027
    %v1063 = vpop.xlane.xlu0 %1062
    %1064 = vmax.xlane.f32.xlu0 %v1030
    %v1065 = vpop.xlane.xlu0 %1064
    %1066 = vmax.xlane.f32.xlu0 %v1033
    %v1067 = vpop.xlane.xlu0 %1066
    %1068 = vmax.xlane.f32.xlu0 %v1036
    %v1069 = vpop.xlane.xlu0 %1068
    %v1070 = vsub.f32 %v991, %v1039
    %v1071 = vsub.f32 %v994, %v1041
    %v1072 = vsub.f32 %v997, %v1043
    %v1073 = vsub.f32 %v1000, %v1045
    %v1074 = vsub.f32 %v1003, %v1047
    %v1075 = vsub.f32 %v1006, %v1049
    %v1076 = vsub.f32 %v1009, %v1051
    %v1077 = vsub.f32 %v1012, %v1053
    %v1078 = vsub.f32 %v1015, %v1055
    %v1079 = vsub.f32 %v1018, %v1057
    %v1080 = vsub.f32 %v1021, %v1059
    %v1081 = vsub.f32 %v1024, %v1061
    %v1082 = vsub.f32 %v1027, %v1063
    %v1083 = vsub.f32 %v1030, %v1065
    %v1084 = vsub.f32 %v1033, %v1067
    %v1085 = vsub.f32 %v1036, %v1069
    %v1086 = vmul.f32 %v1070, 1.442695
    %v1087 = vpow.pop %v1086
    %v1088 = vmul.f32 %v1071, 1.442695
    %v1089 = vpow.pop %v1088
    %v1090 = vmul.f32 %v1072, 1.442695
    %v1091 = vpow.pop %v1090
    %v1092 = vmul.f32 %v1073, 1.442695
    %v1093 = vpow.pop %v1092
    %v1094 = vmul.f32 %v1074, 1.442695
    %v1095 = vpow.pop %v1094
    %v1096 = vmul.f32 %v1075, 1.442695
    %v1097 = vpow.pop %v1096
    %v1098 = vmul.f32 %v1076, 1.442695
    %v1099 = vpow.pop %v1098
    %v1100 = vmul.f32 %v1077, 1.442695
    %v1101 = vpow.pop %v1100
    %v1102 = vmul.f32 %v1078, 1.442695
    %v1103 = vpow.pop %v1102
    %v1104 = vmul.f32 %v1079, 1.442695
    %v1105 = vpow.pop %v1104
    %v1106 = vmul.f32 %v1080, 1.442695
    %v1107 = vpow.pop %v1106
    %v1108 = vmul.f32 %v1081, 1.442695
    %v1109 = vpow.pop %v1108
    %v1110 = vmul.f32 %v1082, 1.442695
    %v1111 = vpow.pop %v1110
    %v1112 = vmul.f32 %v1083, 1.442695
    %v1113 = vpow.pop %v1112
    %v1114 = vmul.f32 %v1084, 1.442695
    %v1115 = vpow.pop %v1114
    %v1116 = vmul.f32 %v1085, 1.442695
    %v1117 = vpow.pop %v1116
    %1118 = vadd.xlane.f32.xlu0 %v1087
    %v1119 = vpop.xlane.xlu0 %1118
    %1120 = vadd.xlane.f32.xlu0 %v1089
    %v1121 = vpop.xlane.xlu0 %1120
    %1122 = vadd.xlane.f32.xlu0 %v1091
    %v1123 = vpop.xlane.xlu0 %1122
    %1124 = vadd.xlane.f32.xlu0 %v1093
    %v1125 = vpop.xlane.xlu0 %1124
    %1126 = vadd.xlane.f32.xlu0 %v1095
    %v1127 = vpop.xlane.xlu0 %1126
    %1128 = vadd.xlane.f32.xlu0 %v1097
    %v1129 = vpop.xlane.xlu0 %1128
    %1130 = vadd.xlane.f32.xlu0 %v1099
    %v1131 = vpop.xlane.xlu0 %1130
    %1132 = vadd.xlane.f32.xlu0 %v1101
    %v1133 = vpop.xlane.xlu0 %1132
    %1134 = vadd.xlane.f32.xlu0 %v1103
    %v1135 = vpop.xlane.xlu0 %1134
    %1136 = vadd.xlane.f32.xlu0 %v1105
    %v1137 = vpop.xlane.xlu0 %1136
    %1138 = vadd.xlane.f32.xlu0 %v1107
    %v1139 = vpop.xlane.xlu0 %1138
    %1140 = vadd.xlane.f32.xlu0 %v1109
    %v1141 = vpop.xlane.xlu0 %1140
    %1142 = vadd.xlane.f32.xlu0 %v1111
    %v1143 = vpop.xlane.xlu0 %1142
    %1144 = vadd.xlane.f32.xlu0 %v1113
    %v1145 = vpop.xlane.xlu0 %1144
    %1146 = vadd.xlane.f32.xlu0 %v1115
    %v1147 = vpop.xlane.xlu0 %1146
    %1148 = vadd.xlane.f32.xlu0 %v1117
    %v1149 = vpop.xlane.xlu0 %1148
    %v1150 = vrcp.pop %v1119
    %v1151 = vrcp.pop %v1121
    %v1152 = vrcp.pop %v1123
    %v1153 = vrcp.pop %v1125
    %v1154 = vrcp.pop %v1127
    %v1155 = vrcp.pop %v1129
    %v1156 = vrcp.pop %v1131
    %v1157 = vrcp.pop %v1133
    %v1158 = vrcp.pop %v1135
    %v1159 = vrcp.pop %v1137
    %v1160 = vrcp.pop %v1139
    %v1161 = vrcp.pop %v1141
    %v1162 = vrcp.pop %v1143
    %v1163 = vrcp.pop %v1145
    %v1164 = vrcp.pop %v1147
    %v1165 = vrcp.pop %v1149
    %v1166 = vmul.f32 %v1087, %v1150
    %v1167 = vmul.f32 %v1089, %v1151
    %v1168 = vmul.f32 %v1091, %v1152
    %v1169 = vmul.f32 %v1093, %v1153
    %v1170 = vmul.f32 %v1095, %v1154
    %v1171 = vmul.f32 %v1097, %v1155
    %v1172 = vmul.f32 %v1099, %v1156
    %v1173 = vmul.f32 %v1101, %v1157
    %v1174 = vmul.f32 %v1103, %v1158
    %v1175 = vmul.f32 %v1105, %v1159
    %v1176 = vmul.f32 %v1107, %v1160
    %v1177 = vmul.f32 %v1109, %v1161
    %v1178 = vmul.f32 %v1111, %v1162
    %v1179 = vmul.f32 %v1113, %v1163
    %v1180 = vmul.f32 %v1115, %v1164
    %v1181 = vmul.f32 %v1117, %v1165
    %v1182 = vld [vmem:[#allocation2] sm:$0xff]
    %v1183 = vld [vmem:[#allocation2 + $0x10] sm:$0xff]
    %v1184 = vld [vmem:[#allocation2 + $0x20] sm:$0xff]
    %v1185 = vld [vmem:[#allocation2 + $0x30] sm:$0xff]
    %v1186 = vld [vmem:[#allocation2 + $0x40] sm:$0xff]
    %v1187 = vld [vmem:[#allocation2 + $0x50] sm:$0xff]
    %v1188 = vld [vmem:[#allocation2 + $0x60] sm:$0xff]
    %v1189 = vld [vmem:[#allocation2 + $0x70] sm:$0xff]
    %v1190 = vld [vmem:[#allocation2 + $0x80] sm:$0xff]
    %v1191 = vld [vmem:[#allocation2 + $0x90] sm:$0xff]
    %v1192 = vld [vmem:[#allocation2 + $0xa0] sm:$0xff]
    %v1193 = vld [vmem:[#allocation2 + $0xb0] sm:$0xff]
    %v1194 = vld [vmem:[#allocation2 + $0xc0] sm:$0xff]
    %v1195 = vld [vmem:[#allocation2 + $0xd0] sm:$0xff]
    %v1196 = vld [vmem:[#allocation2 + $0xe0] sm:$0xff]
    %v1197 = vld [vmem:[#allocation2 + $0xf0] sm:$0xff]
    %1214 = vrot.lane.b32.xlu0 %v1182, 96
    %v1215 = vpop.permute.xlu0 %1214
    %1216 = vrot.lane.b32.xlu0 %v1183, 96
    %v1217 = vpop.permute.xlu0 %1216
    %1218 = vrot.lane.b32.xlu0 %v1184, 96
    %v1219 = vpop.permute.xlu0 %1218
    %1220 = vrot.lane.b32.xlu0 %v1185, 96
    %v1221 = vpop.permute.xlu0 %1220
    %1222 = vrot.lane.b32.xlu0 %v1186, 96
    %v1223 = vpop.permute.xlu0 %1222
    %1224 = vrot.lane.b32.xlu0 %v1187, 96
    %v1225 = vpop.permute.xlu0 %1224
    %1226 = vrot.lane.b32.xlu0 %v1188, 96
    %v1227 = vpop.permute.xlu0 %1226
    %1228 = vrot.lane.b32.xlu0 %v1189, 96
    %v1229 = vpop.permute.xlu0 %1228
    %1230 = vrot.lane.b32.xlu0 %v1190, 96
    %v1231 = vpop.permute.xlu0 %1230
    %1232 = vrot.lane.b32.xlu0 %v1191, 96
    %v1233 = vpop.permute.xlu0 %1232
    %1234 = vrot.lane.b32.xlu0 %v1192, 96
    %v1235 = vpop.permute.xlu0 %1234
    %1236 = vrot.lane.b32.xlu0 %v1193, 96
    %v1237 = vpop.permute.xlu0 %1236
    %1238 = vrot.lane.b32.xlu0 %v1194, 96
    %v1239 = vpop.permute.xlu0 %1238
    %1240 = vrot.lane.b32.xlu0 %v1195, 96
    %v1241 = vpop.permute.xlu0 %1240
    %1242 = vrot.lane.b32.xlu0 %v1196, 96
    %v1243 = vpop.permute.xlu0 %1242
    %1244 = vrot.lane.b32.xlu0 %v1197, 96
    %v1245 = vpop.permute.xlu0 %1244
    %1262 = vmatpush.msra.mxu0 %v1245
    %1263 = vmatpush.msra.mxu0 %v1243
    %1264 = vmatpush.msra.mxu0 %v1241
    %1265 = vmatpush.msra.mxu0 %v1239
    %1266 = vmatpush.msra.mxu0 %v1237
    %1267 = vmatpush.msra.mxu0 %v1235
    %1268 = vmatpush.msra.mxu0 %v1233
    %1269 = vmatpush.msra.mxu0 %v1231
    %1270 = vmatpush.msra.mxu0 %v1229
    %1271 = vmatpush.msra.mxu0 %v1227
    %1272 = vmatpush.msra.mxu0 %v1225
    %1273 = vmatpush.msra.mxu0 %v1223
    %1274 = vmatpush.msra.mxu0 %v1221
    %1275 = vmatpush.msra.mxu0 %v1219
    %1276 = vmatpush.msra.mxu0 %v1217
    %1277 = vmatpush.msra.mxu0 %v1215
    %1278 = vmatmul.f32.gmra.mxu0 %v1166
    %v1279 = vpop.f32.mrf.mxu0
    %v1280 = vadd.f32 0.0, %v1279
    %1281 = vmatmul.f32.gmra.mxu0 %v1167
    %v1282 = vpop.f32.mrf.mxu0
    %v1283 = vadd.f32 0.0, %v1282
    %1284 = vmatmul.f32.gmra.mxu0 %v1168
    %v1285 = vpop.f32.mrf.mxu0
    %v1286 = vadd.f32 0.0, %v1285
    %1287 = vmatmul.f32.gmra.mxu0 %v1169
    %v1288 = vpop.f32.mrf.mxu0
    %v1289 = vadd.f32 0.0, %v1288
    %1290 = vmatmul.f32.gmra.mxu0 %v1170
    %v1291 = vpop.f32.mrf.mxu0
    %v1292 = vadd.f32 0.0, %v1291
    %1293 = vmatmul.f32.gmra.mxu0 %v1171
    %v1294 = vpop.f32.mrf.mxu0
    %v1295 = vadd.f32 0.0, %v1294
    %1296 = vmatmul.f32.gmra.mxu0 %v1172
    %v1297 = vpop.f32.mrf.mxu0
    %v1298 = vadd.f32 0.0, %v1297
    %1299 = vmatmul.f32.gmra.mxu0 %v1173
    %v1300 = vpop.f32.mrf.mxu0
    %v1301 = vadd.f32 0.0, %v1300
    %1302 = vmatmul.f32.gmra.mxu0 %v1174
    %v1303 = vpop.f32.mrf.mxu0
    %v1304 = vadd.f32 0.0, %v1303
    %1305 = vmatmul.f32.gmra.mxu0 %v1175
    %v1306 = vpop.f32.mrf.mxu0
    %v1307 = vadd.f32 0.0, %v1306
    %1308 = vmatmul.f32.gmra.mxu0 %v1176
    %v1309 = vpop.f32.mrf.mxu0
    %v1310 = vadd.f32 0.0, %v1309
    %1311 = vmatmul.f32.gmra.mxu0 %v1177
    %v1312 = vpop.f32.mrf.mxu0
    %v1313 = vadd.f32 0.0, %v1312
    %1314 = vmatmul.f32.gmra.mxu0 %v1178
    %v1315 = vpop.f32.mrf.mxu0
    %v1316 = vadd.f32 0.0, %v1315
    %1317 = vmatmul.f32.gmra.mxu0 %v1179
    %v1318 = vpop.f32.mrf.mxu0
    %v1319 = vadd.f32 0.0, %v1318
    %1320 = vmatmul.f32.gmra.mxu0 %v1180
    %v1321 = vpop.f32.mrf.mxu0
    %v1322 = vadd.f32 0.0, %v1321
    %1323 = vmatmul.f32.gmra.mxu0 %v1181
    %v1324 = vpop.f32.mrf.mxu0
    %v1325 = vadd.f32 0.0, %v1324
    %1326 = vdwg.mxu0
    %1327 = vmatpush.msra.mxu0 %v828
    %1328 = vmatpush.msra.mxu0 %v827
    %1329 = vmatpush.msra.mxu0 %v826
    %1330 = vmatpush.msra.mxu0 %v825
    %1331 = vmatpush.msra.mxu0 %v824
    %1332 = vmatpush.msra.mxu0 %v823
    %1333 = vmatpush.msra.mxu0 %v822
    %1334 = vmatpush.msra.mxu0 %v821
    %1335 = vmatpush.msra.mxu0 %v820
    %1336 = vmatpush.msra.mxu0 %v819
    %1337 = vmatpush.msra.mxu0 %v818
    %1338 = vmatpush.msra.mxu0 %v817
    %1339 = vmatpush.msra.mxu0 %v816
    %1340 = vmatpush.msra.mxu0 %v815
    %1341 = vmatpush.msra.mxu0 %v814
    %1342 = vmatpush.msra.mxu0 %v813
    %1343 = vmatmul.f32.gmra.mxu0 %v797
    %v1344 = vpop.f32.mrf.mxu0
    %v1345 = vadd.f32 %v1280, %v1344
    %1346 = vmatmul.f32.gmra.mxu0 %v798
    %v1347 = vpop.f32.mrf.mxu0
    %v1348 = vadd.f32 %v1283, %v1347
    %1349 = vmatmul.f32.gmra.mxu0 %v799
    %v1350 = vpop.f32.mrf.mxu0
    %v1351 = vadd.f32 %v1286, %v1350
    %1352 = vmatmul.f32.gmra.mxu0 %v800
    %v1353 = vpop.f32.mrf.mxu0
    %v1354 = vadd.f32 %v1289, %v1353
    %1355 = vmatmul.f32.gmra.mxu0 %v801
    %v1356 = vpop.f32.mrf.mxu0
    %v1357 = vadd.f32 %v1292, %v1356
    %1358 = vmatmul.f32.gmra.mxu0 %v802
    %v1359 = vpop.f32.mrf.mxu0
    %v1360 = vadd.f32 %v1295, %v1359
    %1361 = vmatmul.f32.gmra.mxu0 %v803
    %v1362 = vpop.f32.mrf.mxu0
    %v1363 = vadd.f32 %v1298, %v1362
    %1364 = vmatmul.f32.gmra.mxu0 %v804
    %v1365 = vpop.f32.mrf.mxu0
    %v1366 = vadd.f32 %v1301, %v1365
    %1367 = vmatmul.f32.gmra.mxu0 %v805
    %v1368 = vpop.f32.mrf.mxu0
    %v1369 = vadd.f32 %v1304, %v1368
    %1370 = vmatmul.f32.gmra.mxu0 %v806
    %v1371 = vpop.f32.mrf.mxu0
    %v1372 = vadd.f32 %v1307, %v1371
    %1373 = vmatmul.f32.gmra.mxu0 %v807
    %v1374 = vpop.f32.mrf.mxu0
    %v1375 = vadd.f32 %v1310, %v1374
    %1376 = vmatmul.f32.gmra.mxu0 %v808
    %v1377 = vpop.f32.mrf.mxu0
    %v1378 = vadd.f32 %v1313, %v1377
    %1379 = vmatmul.f32.gmra.mxu0 %v809
    %v1380 = vpop.f32.mrf.mxu0
    %v1381 = vadd.f32 %v1316, %v1380
    %1382 = vmatmul.f32.gmra.mxu0 %v810
    %v1383 = vpop.f32.mrf.mxu0
    %v1384 = vadd.f32 %v1319, %v1383
    %1385 = vmatmul.f32.gmra.mxu0 %v811
    %v1386 = vpop.f32.mrf.mxu0
    %v1387 = vadd.f32 %v1322, %v1386
    %1388 = vmatmul.f32.gmra.mxu0 %v812
    %v1389 = vpop.f32.mrf.mxu0
    %v1390 = vadd.f32 %v1325, %v1389
    %1391 = vdwg.mxu0
    %v1392 = vld [vmem:[#allocation3] sm:$0xff]
    %v1393 = vld [vmem:[#allocation3 + $0x8] sm:$0xff]
    %v1394 = vld [vmem:[#allocation3 + $0x10] sm:$0xff]
    %v1395 = vld [vmem:[#allocation3 + $0x18] sm:$0xff]
    %v1396 = vld [vmem:[#allocation3 + $0x20] sm:$0xff]
    %v1397 = vld [vmem:[#allocation3 + $0x28] sm:$0xff]
    %v1398 = vld [vmem:[#allocation3 + $0x30] sm:$0xff]
    %v1399 = vld [vmem:[#allocation3 + $0x38] sm:$0xff]
    %v1400 = vld [vmem:[#allocation3 + $0x40] sm:$0xff]
    %v1401 = vld [vmem:[#allocation3 + $0x48] sm:$0xff]
    %v1402 = vld [vmem:[#allocation3 + $0x50] sm:$0xff]
    %v1403 = vld [vmem:[#allocation3 + $0x58] sm:$0xff]
    %v1404 = vld [vmem:[#allocation3 + $0x60] sm:$0xff]
    %v1405 = vld [vmem:[#allocation3 + $0x68] sm:$0xff]
    %v1406 = vld [vmem:[#allocation3 + $0x70] sm:$0xff]
    %v1407 = vld [vmem:[#allocation3 + $0x78] sm:$0xff]
    %1408 = vrot.lane.b32.xlu0 %v141, 120
    %v1409 = vpop.permute.xlu0 %1408
    %1410 = vrot.lane.b32.xlu0 %v144, 120
    %v1411 = vpop.permute.xlu0 %1410
    %1412 = vrot.lane.b32.xlu0 %v147, 120
    %v1413 = vpop.permute.xlu0 %1412
    %1414 = vrot.lane.b32.xlu0 %v150, 120
    %v1415 = vpop.permute.xlu0 %1414
    %1416 = vrot.lane.b32.xlu0 %v153, 120
    %v1417 = vpop.permute.xlu0 %1416
    %1418 = vrot.lane.b32.xlu0 %v156, 120
    %v1419 = vpop.permute.xlu0 %1418
    %1420 = vrot.lane.b32.xlu0 %v159, 120
    %v1421 = vpop.permute.xlu0 %1420
    %1422 = vrot.lane.b32.xlu0 %v162, 120
    %v1423 = vpop.permute.xlu0 %1422
    %1424 = vrot.lane.b32.xlu0 %v165, 120
    %v1425 = vpop.permute.xlu0 %1424
    %1426 = vrot.lane.b32.xlu0 %v168, 120
    %v1427 = vpop.permute.xlu0 %1426
    %1428 = vrot.lane.b32.xlu0 %v171, 120
    %v1429 = vpop.permute.xlu0 %1428
    %1430 = vrot.lane.b32.xlu0 %v174, 120
    %v1431 = vpop.permute.xlu0 %1430
    %1432 = vrot.lane.b32.xlu0 %v177, 120
    %v1433 = vpop.permute.xlu0 %1432
    %1434 = vrot.lane.b32.xlu0 %v180, 120
    %v1435 = vpop.permute.xlu0 %1434
    %1436 = vrot.lane.b32.xlu0 %v183, 120
    %v1437 = vpop.permute.xlu0 %1436
    %1438 = vrot.lane.b32.xlu0 %v186, 120
    %v1439 = vpop.permute.xlu0 %1438
    %1440 = vrot.lane.b32.xlu0 %v141, 88
    %v1441 = vpop.permute.xlu0 %1440
    %1442 = vrot.lane.b32.xlu0 %v144, 88
    %v1443 = vpop.permute.xlu0 %1442
    %1444 = vrot.lane.b32.xlu0 %v147, 88
    %v1445 = vpop.permute.xlu0 %1444
    %1446 = vrot.lane.b32.xlu0 %v150, 88
    %v1447 = vpop.permute.xlu0 %1446
    %1448 = vrot.lane.b32.xlu0 %v153, 88
    %v1449 = vpop.permute.xlu0 %1448
    %1450 = vrot.lane.b32.xlu0 %v156, 88
    %v1451 = vpop.permute.xlu0 %1450
    %1452 = vrot.lane.b32.xlu0 %v159, 88
    %v1453 = vpop.permute.xlu0 %1452
    %1454 = vrot.lane.b32.xlu0 %v162, 88
    %v1455 = vpop.permute.xlu0 %1454
    %1456 = vrot.lane.b32.xlu0 %v165, 88
    %v1457 = vpop.permute.xlu0 %1456
    %1458 = vrot.lane.b32.xlu0 %v168, 88
    %v1459 = vpop.permute.xlu0 %1458
    %1460 = vrot.lane.b32.xlu0 %v171, 88
    %v1461 = vpop.permute.xlu0 %1460
    %1462 = vrot.lane.b32.xlu0 %v174, 88
    %v1463 = vpop.permute.xlu0 %1462
    %1464 = vrot.lane.b32.xlu0 %v177, 88
    %v1465 = vpop.permute.xlu0 %1464
    %1466 = vrot.lane.b32.xlu0 %v180, 88
    %v1467 = vpop.permute.xlu0 %1466
    %1468 = vrot.lane.b32.xlu0 %v183, 88
    %v1469 = vpop.permute.xlu0 %1468
    %1470 = vrot.lane.b32.xlu0 %v186, 88
    %v1471 = vpop.permute.xlu0 %1470
    %v1472 = vsel %vm539, %v1409, 0
    %v1474 = vsel %vm539, %v1411, 0
    %v1476 = vsel %vm539, %v1413, 0
    %v1478 = vsel %vm539, %v1415, 0
    %v1480 = vsel %vm539, %v1417, 0
    %v1482 = vsel %vm539, %v1419, 0
    %v1484 = vsel %vm539, %v1421, 0
    %v1486 = vsel %vm539, %v1423, 0
    %v1488 = vsel %vm539, %v1425, 0
    %v1490 = vsel %vm539, %v1427, 0
    %v1492 = vsel %vm539, %v1429, 0
    %v1494 = vsel %vm539, %v1431, 0
    %v1496 = vsel %vm539, %v1433, 0
    %v1498 = vsel %vm539, %v1435, 0
    %v1500 = vsel %vm539, %v1437, 0
    %v1502 = vsel %vm539, %v1439, 0
    %v1504 = vsel %vm539, %v1441, 0
    %v1506 = vsel %vm539, %v1443, 0
    %v1508 = vsel %vm539, %v1445, 0
    %v1510 = vsel %vm539, %v1447, 0
    %v1512 = vsel %vm539, %v1449, 0
    %v1514 = vsel %vm539, %v1451, 0
    %v1516 = vsel %vm539, %v1453, 0
    %v1518 = vsel %vm539, %v1455, 0
    %v1520 = vsel %vm539, %v1457, 0
    %v1522 = vsel %vm539, %v1459, 0
    %v1524 = vsel %vm539, %v1461, 0
    %v1526 = vsel %vm539, %v1463, 0
    %v1528 = vsel %vm539, %v1465, 0
    %v1530 = vsel %vm539, %v1467, 0
    %v1532 = vsel %vm539, %v1469, 0
    %v1534 = vsel %vm539, %v1471, 0
    %1536 = vmatpush.xpose.msra.mxu0 %v1534
    %1537 = vmatpush.xpose.msra.mxu0 %v1532
    %1538 = vmatpush.xpose.msra.mxu0 %v1530
    %1539 = vmatpush.xpose.msra.mxu0 %v1528
    %1540 = vmatpush.xpose.msra.mxu0 %v1526
    %1541 = vmatpush.xpose.msra.mxu0 %v1524
    %1542 = vmatpush.xpose.msra.mxu0 %v1522
    %1543 = vmatpush.xpose.msra.mxu0 %v1520
    %1544 = vmatpush.xpose.msra.mxu0 %v1518
    %1545 = vmatpush.xpose.msra.mxu0 %v1516
    %1546 = vmatpush.xpose.msra.mxu0 %v1514
    %1547 = vmatpush.xpose.msra.mxu0 %v1512
    %1548 = vmatpush.xpose.msra.mxu0 %v1510
    %1549 = vmatpush.xpose.msra.mxu0 %v1508
    %1550 = vmatpush.xpose.msra.mxu0 %v1506
    %1551 = vmatpush.xpose.msra.mxu0 %v1504
    %1552 = vmatmul.f32.gmra.mxu0 %v1472
    %v1553 = vpop.f32.mrf.mxu0
    %v1554 = vadd.f32 %v1392, %v1553
    %1555 = vmatmul.f32.gmra.mxu0 %v1474
    %v1556 = vpop.f32.mrf.mxu0
    %v1557 = vadd.f32 %v1393, %v1556
    %1558 = vmatmul.f32.gmra.mxu0 %v1476
    %v1559 = vpop.f32.mrf.mxu0
    %v1560 = vadd.f32 %v1394, %v1559
    %1561 = vmatmul.f32.gmra.mxu0 %v1478
    %v1562 = vpop.f32.mrf.mxu0
    %v1563 = vadd.f32 %v1395, %v1562
    %1564 = vmatmul.f32.gmra.mxu0 %v1480
    %v1565 = vpop.f32.mrf.mxu0
    %v1566 = vadd.f32 %v1396, %v1565
    %1567 = vmatmul.f32.gmra.mxu0 %v1482
    %v1568 = vpop.f32.mrf.mxu0
    %v1569 = vadd.f32 %v1397, %v1568
    %1570 = vmatmul.f32.gmra.mxu0 %v1484
    %v1571 = vpop.f32.mrf.mxu0
    %v1572 = vadd.f32 %v1398, %v1571
    %1573 = vmatmul.f32.gmra.mxu0 %v1486
    %v1574 = vpop.f32.mrf.mxu0
    %v1575 = vadd.f32 %v1399, %v1574
    %1576 = vmatmul.f32.gmra.mxu0 %v1488
    %v1577 = vpop.f32.mrf.mxu0
    %v1578 = vadd.f32 %v1400, %v1577
    %1579 = vmatmul.f32.gmra.mxu0 %v1490
    %v1580 = vpop.f32.mrf.mxu0
    %v1581 = vadd.f32 %v1401, %v1580
    %1582 = vmatmul.f32.gmra.mxu0 %v1492
    %v1583 = vpop.f32.mrf.mxu0
    %v1584 = vadd.f32 %v1402, %v1583
    %1585 = vmatmul.f32.gmra.mxu0 %v1494
    %v1586 = vpop.f32.mrf.mxu0
    %v1587 = vadd.f32 %v1403, %v1586
    %1588 = vmatmul.f32.gmra.mxu0 %v1496
    %v1589 = vpop.f32.mrf.mxu0
    %v1590 = vadd.f32 %v1404, %v1589
    %1591 = vmatmul.f32.gmra.mxu0 %v1498
    %v1592 = vpop.f32.mrf.mxu0
    %v1593 = vadd.f32 %v1405, %v1592
    %1594 = vmatmul.f32.gmra.mxu0 %v1500
    %v1595 = vpop.f32.mrf.mxu0
    %v1596 = vadd.f32 %v1406, %v1595
    %1597 = vmatmul.f32.gmra.mxu0 %v1502
    %v1598 = vpop.f32.mrf.mxu0
    %v1599 = vadd.f32 %v1407, %v1598
    %1600 = vdwg.mxu0
    %1601 = vmax.xlane.f32.xlu0 %v1554
    %v1602 = vpop.xlane.xlu0 %1601
    %1603 = vmax.xlane.f32.xlu0 %v1557
    %v1604 = vpop.xlane.xlu0 %1603
    %1605 = vmax.xlane.f32.xlu0 %v1560
    %v1606 = vpop.xlane.xlu0 %1605
    %1607 = vmax.xlane.f32.xlu0 %v1563
    %v1608 = vpop.xlane.xlu0 %1607
    %1609 = vmax.xlane.f32.xlu0 %v1566
    %v1610 = vpop.xlane.xlu0 %1609
    %1611 = vmax.xlane.f32.xlu0 %v1569
    %v1612 = vpop.xlane.xlu0 %1611
    %1613 = vmax.xlane.f32.xlu0 %v1572
    %v1614 = vpop.xlane.xlu0 %1613
    %1615 = vmax.xlane.f32.xlu0 %v1575
    %v1616 = vpop.xlane.xlu0 %1615
    %1617 = vmax.xlane.f32.xlu0 %v1578
    %v1618 = vpop.xlane.xlu0 %1617
    %1619 = vmax.xlane.f32.xlu0 %v1581
    %v1620 = vpop.xlane.xlu0 %1619
    %1621 = vmax.xlane.f32.xlu0 %v1584
    %v1622 = vpop.xlane.xlu0 %1621
    %1623 = vmax.xlane.f32.xlu0 %v1587
    %v1624 = vpop.xlane.xlu0 %1623
    %1625 = vmax.xlane.f32.xlu0 %v1590
    %v1626 = vpop.xlane.xlu0 %1625
    %1627 = vmax.xlane.f32.xlu0 %v1593
    %v1628 = vpop.xlane.xlu0 %1627
    %1629 = vmax.xlane.f32.xlu0 %v1596
    %v1630 = vpop.xlane.xlu0 %1629
    %1631 = vmax.xlane.f32.xlu0 %v1599
    %v1632 = vpop.xlane.xlu0 %1631
    %v1633 = vsub.f32 %v1554, %v1602
    %v1634 = vsub.f32 %v1557, %v1604
    %v1635 = vsub.f32 %v1560, %v1606
    %v1636 = vsub.f32 %v1563, %v1608
    %v1637 = vsub.f32 %v1566, %v1610
    %v1638 = vsub.f32 %v1569, %v1612
    %v1639 = vsub.f32 %v1572, %v1614
    %v1640 = vsub.f32 %v1575, %v1616
    %v1641 = vsub.f32 %v1578, %v1618
    %v1642 = vsub.f32 %v1581, %v1620
    %v1643 = vsub.f32 %v1584, %v1622
    %v1644 = vsub.f32 %v1587, %v1624
    %v1645 = vsub.f32 %v1590, %v1626
    %v1646 = vsub.f32 %v1593, %v1628
    %v1647 = vsub.f32 %v1596, %v1630
    %v1648 = vsub.f32 %v1599, %v1632
    %v1649 = vmul.f32 %v1633, 1.442695
    %v1650 = vpow.pop %v1649
    %v1651 = vmul.f32 %v1634, 1.442695
    %v1652 = vpow.pop %v1651
    %v1653 = vmul.f32 %v1635, 1.442695
    %v1654 = vpow.pop %v1653
    %v1655 = vmul.f32 %v1636, 1.442695
    %v1656 = vpow.pop %v1655
    %v1657 = vmul.f32 %v1637, 1.442695
    %v1658 = vpow.pop %v1657
    %v1659 = vmul.f32 %v1638, 1.442695
    %v1660 = vpow.pop %v1659
    %v1661 = vmul.f32 %v1639, 1.442695
    %v1662 = vpow.pop %v1661
    %v1663 = vmul.f32 %v1640, 1.442695
    %v1664 = vpow.pop %v1663
    %v1665 = vmul.f32 %v1641, 1.442695
    %v1666 = vpow.pop %v1665
    %v1667 = vmul.f32 %v1642, 1.442695
    %v1668 = vpow.pop %v1667
    %v1669 = vmul.f32 %v1643, 1.442695
    %v1670 = vpow.pop %v1669
    %v1671 = vmul.f32 %v1644, 1.442695
    %v1672 = vpow.pop %v1671
    %v1673 = vmul.f32 %v1645, 1.442695
    %v1674 = vpow.pop %v1673
    %v1675 = vmul.f32 %v1646, 1.442695
    %v1676 = vpow.pop %v1675
    %v1677 = vmul.f32 %v1647, 1.442695
    %v1678 = vpow.pop %v1677
    %v1679 = vmul.f32 %v1648, 1.442695
    %v1680 = vpow.pop %v1679
    %1681 = vadd.xlane.f32.xlu0 %v1650
    %v1682 = vpop.xlane.xlu0 %1681
    %1683 = vadd.xlane.f32.xlu0 %v1652
    %v1684 = vpop.xlane.xlu0 %1683
    %1685 = vadd.xlane.f32.xlu0 %v1654
    %v1686 = vpop.xlane.xlu0 %1685
    %1687 = vadd.xlane.f32.xlu0 %v1656
    %v1688 = vpop.xlane.xlu0 %1687
    %1689 = vadd.xlane.f32.xlu0 %v1658
    %v1690 = vpop.xlane.xlu0 %1689
    %1691 = vadd.xlane.f32.xlu0 %v1660
    %v1692 = vpop.xlane.xlu0 %1691
    %1693 = vadd.xlane.f32.xlu0 %v1662
    %v1694 = vpop.xlane.xlu0 %1693
    %1695 = vadd.xlane.f32.xlu0 %v1664
    %v1696 = vpop.xlane.xlu0 %1695
    %1697 = vadd.xlane.f32.xlu0 %v1666
    %v1698 = vpop.xlane.xlu0 %1697
    %1699 = vadd.xlane.f32.xlu0 %v1668
    %v1700 = vpop.xlane.xlu0 %1699
    %1701 = vadd.xlane.f32.xlu0 %v1670
    %v1702 = vpop.xlane.xlu0 %1701
    %1703 = vadd.xlane.f32.xlu0 %v1672
    %v1704 = vpop.xlane.xlu0 %1703
    %1705 = vadd.xlane.f32.xlu0 %v1674
    %v1706 = vpop.xlane.xlu0 %1705
    %1707 = vadd.xlane.f32.xlu0 %v1676
    %v1708 = vpop.xlane.xlu0 %1707
    %1709 = vadd.xlane.f32.xlu0 %v1678
    %v1710 = vpop.xlane.xlu0 %1709
    %1711 = vadd.xlane.f32.xlu0 %v1680
    %v1712 = vpop.xlane.xlu0 %1711
    %v1713 = vrcp.pop %v1682
    %v1714 = vrcp.pop %v1684
    %v1715 = vrcp.pop %v1686
    %v1716 = vrcp.pop %v1688
    %v1717 = vrcp.pop %v1690
    %v1718 = vrcp.pop %v1692
    %v1719 = vrcp.pop %v1694
    %v1720 = vrcp.pop %v1696
    %v1721 = vrcp.pop %v1698
    %v1722 = vrcp.pop %v1700
    %v1723 = vrcp.pop %v1702
    %v1724 = vrcp.pop %v1704
    %v1725 = vrcp.pop %v1706
    %v1726 = vrcp.pop %v1708
    %v1727 = vrcp.pop %v1710
    %v1728 = vrcp.pop %v1712
    %v1729 = vmul.f32 %v1650, %v1713
    %v1730 = vmul.f32 %v1652, %v1714
    %v1731 = vmul.f32 %v1654, %v1715
    %v1732 = vmul.f32 %v1656, %v1716
    %v1733 = vmul.f32 %v1658, %v1717
    %v1734 = vmul.f32 %v1660, %v1718
    %v1735 = vmul.f32 %v1662, %v1719
    %v1736 = vmul.f32 %v1664, %v1720
    %v1737 = vmul.f32 %v1666, %v1721
    %v1738 = vmul.f32 %v1668, %v1722
    %v1739 = vmul.f32 %v1670, %v1723
    %v1740 = vmul.f32 %v1672, %v1724
    %v1741 = vmul.f32 %v1674, %v1725
    %v1742 = vmul.f32 %v1676, %v1726
    %v1743 = vmul.f32 %v1678, %v1727
    %v1744 = vmul.f32 %v1680, %v1728
    %v1745 = vld [vmem:[#allocation2] sm:$0xff]
    %v1746 = vld [vmem:[#allocation2 + $0x10] sm:$0xff]
    %v1747 = vld [vmem:[#allocation2 + $0x20] sm:$0xff]
    %v1748 = vld [vmem:[#allocation2 + $0x30] sm:$0xff]
    %v1749 = vld [vmem:[#allocation2 + $0x40] sm:$0xff]
    %v1750 = vld [vmem:[#allocation2 + $0x50] sm:$0xff]
    %v1751 = vld [vmem:[#allocation2 + $0x60] sm:$0xff]
    %v1752 = vld [vmem:[#allocation2 + $0x70] sm:$0xff]
    %v1753 = vld [vmem:[#allocation2 + $0x80] sm:$0xff]
    %v1754 = vld [vmem:[#allocation2 + $0x90] sm:$0xff]
    %v1755 = vld [vmem:[#allocation2 + $0xa0] sm:$0xff]
    %v1756 = vld [vmem:[#allocation2 + $0xb0] sm:$0xff]
    %v1757 = vld [vmem:[#allocation2 + $0xc0] sm:$0xff]
    %v1758 = vld [vmem:[#allocation2 + $0xd0] sm:$0xff]
    %v1759 = vld [vmem:[#allocation2 + $0xe0] sm:$0xff]
    %v1760 = vld [vmem:[#allocation2 + $0xf0] sm:$0xff]
    %1777 = vrot.lane.b32.xlu0 %v1745, 64
    %v1778 = vpop.permute.xlu0 %1777
    %1779 = vrot.lane.b32.xlu0 %v1746, 64
    %v1780 = vpop.permute.xlu0 %1779
    %1781 = vrot.lane.b32.xlu0 %v1747, 64
    %v1782 = vpop.permute.xlu0 %1781
    %1783 = vrot.lane.b32.xlu0 %v1748, 64
    %v1784 = vpop.permute.xlu0 %1783
    %1785 = vrot.lane.b32.xlu0 %v1749, 64
    %v1786 = vpop.permute.xlu0 %1785
    %1787 = vrot.lane.b32.xlu0 %v1750, 64
    %v1788 = vpop.permute.xlu0 %1787
    %1789 = vrot.lane.b32.xlu0 %v1751, 64
    %v1790 = vpop.permute.xlu0 %1789
    %1791 = vrot.lane.b32.xlu0 %v1752, 64
    %v1792 = vpop.permute.xlu0 %1791
    %1793 = vrot.lane.b32.xlu0 %v1753, 64
    %v1794 = vpop.permute.xlu0 %1793
    %1795 = vrot.lane.b32.xlu0 %v1754, 64
    %v1796 = vpop.permute.xlu0 %1795
    %1797 = vrot.lane.b32.xlu0 %v1755, 64
    %v1798 = vpop.permute.xlu0 %1797
    %1799 = vrot.lane.b32.xlu0 %v1756, 64
    %v1800 = vpop.permute.xlu0 %1799
    %1801 = vrot.lane.b32.xlu0 %v1757, 64
    %v1802 = vpop.permute.xlu0 %1801
    %1803 = vrot.lane.b32.xlu0 %v1758, 64
    %v1804 = vpop.permute.xlu0 %1803
    %1805 = vrot.lane.b32.xlu0 %v1759, 64
    %v1806 = vpop.permute.xlu0 %1805
    %1807 = vrot.lane.b32.xlu0 %v1760, 64
    %v1808 = vpop.permute.xlu0 %1807
    %1825 = vmatpush.msra.mxu0 %v1808
    %1826 = vmatpush.msra.mxu0 %v1806
    %1827 = vmatpush.msra.mxu0 %v1804
    %1828 = vmatpush.msra.mxu0 %v1802
    %1829 = vmatpush.msra.mxu0 %v1800
    %1830 = vmatpush.msra.mxu0 %v1798
    %1831 = vmatpush.msra.mxu0 %v1796
    %1832 = vmatpush.msra.mxu0 %v1794
    %1833 = vmatpush.msra.mxu0 %v1792
    %1834 = vmatpush.msra.mxu0 %v1790
    %1835 = vmatpush.msra.mxu0 %v1788
    %1836 = vmatpush.msra.mxu0 %v1786
    %1837 = vmatpush.msra.mxu0 %v1784
    %1838 = vmatpush.msra.mxu0 %v1782
    %1839 = vmatpush.msra.mxu0 %v1780
    %1840 = vmatpush.msra.mxu0 %v1778
    %1841 = vmatmul.f32.gmra.mxu0 %v1729
    %v1842 = vpop.f32.mrf.mxu0
    %v1843 = vadd.f32 0.0, %v1842
    %1844 = vmatmul.f32.gmra.mxu0 %v1730
    %v1845 = vpop.f32.mrf.mxu0
    %v1846 = vadd.f32 0.0, %v1845
    %1847 = vmatmul.f32.gmra.mxu0 %v1731
    %v1848 = vpop.f32.mrf.mxu0
    %v1849 = vadd.f32 0.0, %v1848
    %1850 = vmatmul.f32.gmra.mxu0 %v1732
    %v1851 = vpop.f32.mrf.mxu0
    %v1852 = vadd.f32 0.0, %v1851
    %1853 = vmatmul.f32.gmra.mxu0 %v1733
    %v1854 = vpop.f32.mrf.mxu0
    %v1855 = vadd.f32 0.0, %v1854
    %1856 = vmatmul.f32.gmra.mxu0 %v1734
    %v1857 = vpop.f32.mrf.mxu0
    %v1858 = vadd.f32 0.0, %v1857
    %1859 = vmatmul.f32.gmra.mxu0 %v1735
    %v1860 = vpop.f32.mrf.mxu0
    %v1861 = vadd.f32 0.0, %v1860
    %1862 = vmatmul.f32.gmra.mxu0 %v1736
    %v1863 = vpop.f32.mrf.mxu0
    %v1864 = vadd.f32 0.0, %v1863
    %1865 = vmatmul.f32.gmra.mxu0 %v1737
    %v1866 = vpop.f32.mrf.mxu0
    %v1867 = vadd.f32 0.0, %v1866
    %1868 = vmatmul.f32.gmra.mxu0 %v1738
    %v1869 = vpop.f32.mrf.mxu0
    %v1870 = vadd.f32 0.0, %v1869
    %1871 = vmatmul.f32.gmra.mxu0 %v1739
    %v1872 = vpop.f32.mrf.mxu0
    %v1873 = vadd.f32 0.0, %v1872
    %1874 = vmatmul.f32.gmra.mxu0 %v1740
    %v1875 = vpop.f32.mrf.mxu0
    %v1876 = vadd.f32 0.0, %v1875
    %1877 = vmatmul.f32.gmra.mxu0 %v1741
    %v1878 = vpop.f32.mrf.mxu0
    %v1879 = vadd.f32 0.0, %v1878
    %1880 = vmatmul.f32.gmra.mxu0 %v1742
    %v1881 = vpop.f32.mrf.mxu0
    %v1882 = vadd.f32 0.0, %v1881
    %1883 = vmatmul.f32.gmra.mxu0 %v1743
    %v1884 = vpop.f32.mrf.mxu0
    %v1885 = vadd.f32 0.0, %v1884
    %1886 = vmatmul.f32.gmra.mxu0 %v1744
    %v1887 = vpop.f32.mrf.mxu0
    %v1888 = vadd.f32 0.0, %v1887
    %1889 = vdwg.mxu0
    %v1890 = vadd.f32 %v1345, %v1843
    %v1891 = vadd.f32 %v1348, %v1846
    %v1892 = vadd.f32 %v1351, %v1849
    %v1893 = vadd.f32 %v1354, %v1852
    %v1894 = vadd.f32 %v1357, %v1855
    %v1895 = vadd.f32 %v1360, %v1858
    %v1896 = vadd.f32 %v1363, %v1861
    %v1897 = vadd.f32 %v1366, %v1864
    %v1898 = vadd.f32 %v1369, %v1867
    %v1899 = vadd.f32 %v1372, %v1870
    %v1900 = vadd.f32 %v1375, %v1873
    %v1901 = vadd.f32 %v1378, %v1876
    %v1902 = vadd.f32 %v1381, %v1879
    %v1903 = vadd.f32 %v1384, %v1882
    %v1904 = vadd.f32 %v1387, %v1885
    %v1905 = vadd.f32 %v1390, %v1888
    %v1906 = vld [vmem:[#allocation3] sm:$0xff]
    %v1907 = vld [vmem:[#allocation3 + $0x8] sm:$0xff]
    %v1908 = vld [vmem:[#allocation3 + $0x10] sm:$0xff]
    %v1909 = vld [vmem:[#allocation3 + $0x18] sm:$0xff]
    %v1910 = vld [vmem:[#allocation3 + $0x20] sm:$0xff]
    %v1911 = vld [vmem:[#allocation3 + $0x28] sm:$0xff]
    %v1912 = vld [vmem:[#allocation3 + $0x30] sm:$0xff]
    %v1913 = vld [vmem:[#allocation3 + $0x38] sm:$0xff]
    %v1914 = vld [vmem:[#allocation3 + $0x40] sm:$0xff]
    %v1915 = vld [vmem:[#allocation3 + $0x48] sm:$0xff]
    %v1916 = vld [vmem:[#allocation3 + $0x50] sm:$0xff]
    %v1917 = vld [vmem:[#allocation3 + $0x58] sm:$0xff]
    %v1918 = vld [vmem:[#allocation3 + $0x60] sm:$0xff]
    %v1919 = vld [vmem:[#allocation3 + $0x68] sm:$0xff]
    %v1920 = vld [vmem:[#allocation3 + $0x70] sm:$0xff]
    %v1921 = vld [vmem:[#allocation3 + $0x78] sm:$0xff]
    %1922 = vrot.lane.b32.xlu0 %v141, 116
    %v1923 = vpop.permute.xlu0 %1922
    %1924 = vrot.lane.b32.xlu0 %v144, 116
    %v1925 = vpop.permute.xlu0 %1924
    %1926 = vrot.lane.b32.xlu0 %v147, 116
    %v1927 = vpop.permute.xlu0 %1926
    %1928 = vrot.lane.b32.xlu0 %v150, 116
    %v1929 = vpop.permute.xlu0 %1928
    %1930 = vrot.lane.b32.xlu0 %v153, 116
    %v1931 = vpop.permute.xlu0 %1930
    %1932 = vrot.lane.b32.xlu0 %v156, 116
    %v1933 = vpop.permute.xlu0 %1932
    %1934 = vrot.lane.b32.xlu0 %v159, 116
    %v1935 = vpop.permute.xlu0 %1934
    %1936 = vrot.lane.b32.xlu0 %v162, 116
    %v1937 = vpop.permute.xlu0 %1936
    %1938 = vrot.lane.b32.xlu0 %v165, 116
    %v1939 = vpop.permute.xlu0 %1938
    %1940 = vrot.lane.b32.xlu0 %v168, 116
    %v1941 = vpop.permute.xlu0 %1940
    %1942 = vrot.lane.b32.xlu0 %v171, 116
    %v1943 = vpop.permute.xlu0 %1942
    %1944 = vrot.lane.b32.xlu0 %v174, 116
    %v1945 = vpop.permute.xlu0 %1944
    %1946 = vrot.lane.b32.xlu0 %v177, 116
    %v1947 = vpop.permute.xlu0 %1946
    %1948 = vrot.lane.b32.xlu0 %v180, 116
    %v1949 = vpop.permute.xlu0 %1948
    %1950 = vrot.lane.b32.xlu0 %v183, 116
    %v1951 = vpop.permute.xlu0 %1950
    %1952 = vrot.lane.b32.xlu0 %v186, 116
    %v1953 = vpop.permute.xlu0 %1952
    %1954 = vrot.lane.b32.xlu0 %v141, 84
    %v1955 = vpop.permute.xlu0 %1954
    %1956 = vrot.lane.b32.xlu0 %v144, 84
    %v1957 = vpop.permute.xlu0 %1956
    %1958 = vrot.lane.b32.xlu0 %v147, 84
    %v1959 = vpop.permute.xlu0 %1958
    %1960 = vrot.lane.b32.xlu0 %v150, 84
    %v1961 = vpop.permute.xlu0 %1960
    %1962 = vrot.lane.b32.xlu0 %v153, 84
    %v1963 = vpop.permute.xlu0 %1962
    %1964 = vrot.lane.b32.xlu0 %v156, 84
    %v1965 = vpop.permute.xlu0 %1964
    %1966 = vrot.lane.b32.xlu0 %v159, 84
    %v1967 = vpop.permute.xlu0 %1966
    %1968 = vrot.lane.b32.xlu0 %v162, 84
    %v1969 = vpop.permute.xlu0 %1968
    %1970 = vrot.lane.b32.xlu0 %v165, 84
    %v1971 = vpop.permute.xlu0 %1970
    %1972 = vrot.lane.b32.xlu0 %v168, 84
    %v1973 = vpop.permute.xlu0 %1972
    %1974 = vrot.lane.b32.xlu0 %v171, 84
    %v1975 = vpop.permute.xlu0 %1974
    %1976 = vrot.lane.b32.xlu0 %v174, 84
    %v1977 = vpop.permute.xlu0 %1976
    %1978 = vrot.lane.b32.xlu0 %v177, 84
    %v1979 = vpop.permute.xlu0 %1978
    %1980 = vrot.lane.b32.xlu0 %v180, 84
    %v1981 = vpop.permute.xlu0 %1980
    %1982 = vrot.lane.b32.xlu0 %v183, 84
    %v1983 = vpop.permute.xlu0 %1982
    %1984 = vrot.lane.b32.xlu0 %v186, 84
    %v1985 = vpop.permute.xlu0 %1984
    %v1986 = vsel %vm539, %v1923, 0
    %v1988 = vsel %vm539, %v1925, 0
    %v1990 = vsel %vm539, %v1927, 0
    %v1992 = vsel %vm539, %v1929, 0
    %v1994 = vsel %vm539, %v1931, 0
    %v1996 = vsel %vm539, %v1933, 0
    %v1998 = vsel %vm539, %v1935, 0
    %v2000 = vsel %vm539, %v1937, 0
    %v2002 = vsel %vm539, %v1939, 0
    %v2004 = vsel %vm539, %v1941, 0
    %v2006 = vsel %vm539, %v1943, 0
    %v2008 = vsel %vm539, %v1945, 0
    %v2010 = vsel %vm539, %v1947, 0
    %v2012 = vsel %vm539, %v1949, 0
    %v2014 = vsel %vm539, %v1951, 0
    %v2016 = vsel %vm539, %v1953, 0
    %v2018 = vsel %vm539, %v1955, 0
    %v2020 = vsel %vm539, %v1957, 0
    %v2022 = vsel %vm539, %v1959, 0
    %v2024 = vsel %vm539, %v1961, 0
    %v2026 = vsel %vm539, %v1963, 0
    %v2028 = vsel %vm539, %v1965, 0
    %v2030 = vsel %vm539, %v1967, 0
    %v2032 = vsel %vm539, %v1969, 0
    %v2034 = vsel %vm539, %v1971, 0
    %v2036 = vsel %vm539, %v1973, 0
    %v2038 = vsel %vm539, %v1975, 0
    %v2040 = vsel %vm539, %v1977, 0
    %v2042 = vsel %vm539, %v1979, 0
    %v2044 = vsel %vm539, %v1981, 0
    %v2046 = vsel %vm539, %v1983, 0
    %v2048 = vsel %vm539, %v1985, 0
    %2050 = vmatpush.xpose.msra.mxu0 %v2048
    %2051 = vmatpush.xpose.msra.mxu0 %v2046
    %2052 = vmatpush.xpose.msra.mxu0 %v2044
    %2053 = vmatpush.xpose.msra.mxu0 %v2042
    %2054 = vmatpush.xpose.msra.mxu0 %v2040
    %2055 = vmatpush.xpose.msra.mxu0 %v2038
    %2056 = vmatpush.xpose.msra.mxu0 %v2036
    %2057 = vmatpush.xpose.msra.mxu0 %v2034
    %2058 = vmatpush.xpose.msra.mxu0 %v2032
    %2059 = vmatpush.xpose.msra.mxu0 %v2030
    %2060 = vmatpush.xpose.msra.mxu0 %v2028
    %2061 = vmatpush.xpose.msra.mxu0 %v2026
    %2062 = vmatpush.xpose.msra.mxu0 %v2024
    %2063 = vmatpush.xpose.msra.mxu0 %v2022
    %2064 = vmatpush.xpose.msra.mxu0 %v2020
    %2065 = vmatpush.xpose.msra.mxu0 %v2018
    %2066 = vmatmul.f32.gmra.mxu0 %v1986
    %v2067 = vpop.f32.mrf.mxu0
    %v2068 = vadd.f32 %v1906, %v2067
    %2069 = vmatmul.f32.gmra.mxu0 %v1988
    %v2070 = vpop.f32.mrf.mxu0
    %v2071 = vadd.f32 %v1907, %v2070
    %2072 = vmatmul.f32.gmra.mxu0 %v1990
    %v2073 = vpop.f32.mrf.mxu0
    %v2074 = vadd.f32 %v1908, %v2073
    %2075 = vmatmul.f32.gmra.mxu0 %v1992
    %v2076 = vpop.f32.mrf.mxu0
    %v2077 = vadd.f32 %v1909, %v2076
    %2078 = vmatmul.f32.gmra.mxu0 %v1994
    %v2079 = vpop.f32.mrf.mxu0
    %v2080 = vadd.f32 %v1910, %v2079
    %2081 = vmatmul.f32.gmra.mxu0 %v1996
    %v2082 = vpop.f32.mrf.mxu0
    %v2083 = vadd.f32 %v1911, %v2082
    %2084 = vmatmul.f32.gmra.mxu0 %v1998
    %v2085 = vpop.f32.mrf.mxu0
    %v2086 = vadd.f32 %v1912, %v2085
    %2087 = vmatmul.f32.gmra.mxu0 %v2000
    %v2088 = vpop.f32.mrf.mxu0
    %v2089 = vadd.f32 %v1913, %v2088
    %2090 = vmatmul.f32.gmra.mxu0 %v2002
    %v2091 = vpop.f32.mrf.mxu0
    %v2092 = vadd.f32 %v1914, %v2091
    %2093 = vmatmul.f32.gmra.mxu0 %v2004
    %v2094 = vpop.f32.mrf.mxu0
    %v2095 = vadd.f32 %v1915, %v2094
    %2096 = vmatmul.f32.gmra.mxu0 %v2006
    %v2097 = vpop.f32.mrf.mxu0
    %v2098 = vadd.f32 %v1916, %v2097
    %2099 = vmatmul.f32.gmra.mxu0 %v2008
    %v2100 = vpop.f32.mrf.mxu0
    %v2101 = vadd.f32 %v1917, %v2100
    %2102 = vmatmul.f32.gmra.mxu0 %v2010
    %v2103 = vpop.f32.mrf.mxu0
    %v2104 = vadd.f32 %v1918, %v2103
    %2105 = vmatmul.f32.gmra.mxu0 %v2012
    %v2106 = vpop.f32.mrf.mxu0
    %v2107 = vadd.f32 %v1919, %v2106
    %2108 = vmatmul.f32.gmra.mxu0 %v2014
    %v2109 = vpop.f32.mrf.mxu0
    %v2110 = vadd.f32 %v1920, %v2109
    %2111 = vmatmul.f32.gmra.mxu0 %v2016
    %v2112 = vpop.f32.mrf.mxu0
    %v2113 = vadd.f32 %v1921, %v2112
    %2114 = vdwg.mxu0
    %2115 = vmax.xlane.f32.xlu0 %v2068
    %v2116 = vpop.xlane.xlu0 %2115
    %2117 = vmax.xlane.f32.xlu0 %v2071
    %v2118 = vpop.xlane.xlu0 %2117
    %2119 = vmax.xlane.f32.xlu0 %v2074
    %v2120 = vpop.xlane.xlu0 %2119
    %2121 = vmax.xlane.f32.xlu0 %v2077
    %v2122 = vpop.xlane.xlu0 %2121
    %2123 = vmax.xlane.f32.xlu0 %v2080
    %v2124 = vpop.xlane.xlu0 %2123
    %2125 = vmax.xlane.f32.xlu0 %v2083
    %v2126 = vpop.xlane.xlu0 %2125
    %2127 = vmax.xlane.f32.xlu0 %v2086
    %v2128 = vpop.xlane.xlu0 %2127
    %2129 = vmax.xlane.f32.xlu0 %v2089
    %v2130 = vpop.xlane.xlu0 %2129
    %2131 = vmax.xlane.f32.xlu0 %v2092
    %v2132 = vpop.xlane.xlu0 %2131
    %2133 = vmax.xlane.f32.xlu0 %v2095
    %v2134 = vpop.xlane.xlu0 %2133
    %2135 = vmax.xlane.f32.xlu0 %v2098
    %v2136 = vpop.xlane.xlu0 %2135
    %2137 = vmax.xlane.f32.xlu0 %v2101
    %v2138 = vpop.xlane.xlu0 %2137
    %2139 = vmax.xlane.f32.xlu0 %v2104
    %v2140 = vpop.xlane.xlu0 %2139
    %2141 = vmax.xlane.f32.xlu0 %v2107
    %v2142 = vpop.xlane.xlu0 %2141
    %2143 = vmax.xlane.f32.xlu0 %v2110
    %v2144 = vpop.xlane.xlu0 %2143
    %2145 = vmax.xlane.f32.xlu0 %v2113
    %v2146 = vpop.xlane.xlu0 %2145
    %v2147 = vsub.f32 %v2068, %v2116
    %v2148 = vsub.f32 %v2071, %v2118
    %v2149 = vsub.f32 %v2074, %v2120
    %v2150 = vsub.f32 %v2077, %v2122
    %v2151 = vsub.f32 %v2080, %v2124
    %v2152 = vsub.f32 %v2083, %v2126
    %v2153 = vsub.f32 %v2086, %v2128
    %v2154 = vsub.f32 %v2089, %v2130
    %v2155 = vsub.f32 %v2092, %v2132
    %v2156 = vsub.f32 %v2095, %v2134
    %v2157 = vsub.f32 %v2098, %v2136
    %v2158 = vsub.f32 %v2101, %v2138
    %v2159 = vsub.f32 %v2104, %v2140
    %v2160 = vsub.f32 %v2107, %v2142
    %v2161 = vsub.f32 %v2110, %v2144
    %v2162 = vsub.f32 %v2113, %v2146
    %v2163 = vmul.f32 %v2147, 1.442695
    %v2164 = vpow.pop %v2163
    %v2165 = vmul.f32 %v2148, 1.442695
    %v2166 = vpow.pop %v2165
    %v2167 = vmul.f32 %v2149, 1.442695
    %v2168 = vpow.pop %v2167
    %v2169 = vmul.f32 %v2150, 1.442695
    %v2170 = vpow.pop %v2169
    %v2171 = vmul.f32 %v2151, 1.442695
    %v2172 = vpow.pop %v2171
    %v2173 = vmul.f32 %v2152, 1.442695
    %v2174 = vpow.pop %v2173
    %v2175 = vmul.f32 %v2153, 1.442695
    %v2176 = vpow.pop %v2175
    %v2177 = vmul.f32 %v2154, 1.442695
    %v2178 = vpow.pop %v2177
    %v2179 = vmul.f32 %v2155, 1.442695
    %v2180 = vpow.pop %v2179
    %v2181 = vmul.f32 %v2156, 1.442695
    %v2182 = vpow.pop %v2181
    %v2183 = vmul.f32 %v2157, 1.442695
    %v2184 = vpow.pop %v2183
    %v2185 = vmul.f32 %v2158, 1.442695
    %v2186 = vpow.pop %v2185
    %v2187 = vmul.f32 %v2159, 1.442695
    %v2188 = vpow.pop %v2187
    %v2189 = vmul.f32 %v2160, 1.442695
    %v2190 = vpow.pop %v2189
    %v2191 = vmul.f32 %v2161, 1.442695
    %v2192 = vpow.pop %v2191
    %v2193 = vmul.f32 %v2162, 1.442695
    %v2194 = vpow.pop %v2193
    %2195 = vadd.xlane.f32.xlu0 %v2164
    %v2196 = vpop.xlane.xlu0 %2195
    %2197 = vadd.xlane.f32.xlu0 %v2166
    %v2198 = vpop.xlane.xlu0 %2197
    %2199 = vadd.xlane.f32.xlu0 %v2168
    %v2200 = vpop.xlane.xlu0 %2199
    %2201 = vadd.xlane.f32.xlu0 %v2170
    %v2202 = vpop.xlane.xlu0 %2201
    %2203 = vadd.xlane.f32.xlu0 %v2172
    %v2204 = vpop.xlane.xlu0 %2203
    %2205 = vadd.xlane.f32.xlu0 %v2174
    %v2206 = vpop.xlane.xlu0 %2205
    %2207 = vadd.xlane.f32.xlu0 %v2176
    %v2208 = vpop.xlane.xlu0 %2207
    %2209 = vadd.xlane.f32.xlu0 %v2178
    %v2210 = vpop.xlane.xlu0 %2209
    %2211 = vadd.xlane.f32.xlu0 %v2180
    %v2212 = vpop.xlane.xlu0 %2211
    %2213 = vadd.xlane.f32.xlu0 %v2182
    %v2214 = vpop.xlane.xlu0 %2213
    %2215 = vadd.xlane.f32.xlu0 %v2184
    %v2216 = vpop.xlane.xlu0 %2215
    %2217 = vadd.xlane.f32.xlu0 %v2186
    %v2218 = vpop.xlane.xlu0 %2217
    %2219 = vadd.xlane.f32.xlu0 %v2188
    %v2220 = vpop.xlane.xlu0 %2219
    %2221 = vadd.xlane.f32.xlu0 %v2190
    %v2222 = vpop.xlane.xlu0 %2221
    %2223 = vadd.xlane.f32.xlu0 %v2192
    %v2224 = vpop.xlane.xlu0 %2223
    %2225 = vadd.xlane.f32.xlu0 %v2194
    %v2226 = vpop.xlane.xlu0 %2225
    %v2227 = vrcp.pop %v2196
    %v2228 = vrcp.pop %v2198
    %v2229 = vrcp.pop %v2200
    %v2230 = vrcp.pop %v2202
    %v2231 = vrcp.pop %v2204
    %v2232 = vrcp.pop %v2206
    %v2233 = vrcp.pop %v2208
    %v2234 = vrcp.pop %v2210
    %v2235 = vrcp.pop %v2212
    %v2236 = vrcp.pop %v2214
    %v2237 = vrcp.pop %v2216
    %v2238 = vrcp.pop %v2218
    %v2239 = vrcp.pop %v2220
    %v2240 = vrcp.pop %v2222
    %v2241 = vrcp.pop %v2224
    %v2242 = vrcp.pop %v2226
    %v2243 = vmul.f32 %v2164, %v2227
    %v2244 = vmul.f32 %v2166, %v2228
    %v2245 = vmul.f32 %v2168, %v2229
    %v2246 = vmul.f32 %v2170, %v2230
    %v2247 = vmul.f32 %v2172, %v2231
    %v2248 = vmul.f32 %v2174, %v2232
    %v2249 = vmul.f32 %v2176, %v2233
    %v2250 = vmul.f32 %v2178, %v2234
    %v2251 = vmul.f32 %v2180, %v2235
    %v2252 = vmul.f32 %v2182, %v2236
    %v2253 = vmul.f32 %v2184, %v2237
    %v2254 = vmul.f32 %v2186, %v2238
    %v2255 = vmul.f32 %v2188, %v2239
    %v2256 = vmul.f32 %v2190, %v2240
    %v2257 = vmul.f32 %v2192, %v2241
    %v2258 = vmul.f32 %v2194, %v2242
    %v2259 = vld [vmem:[#allocation2] sm:$0xff]
    %v2260 = vld [vmem:[#allocation2 + $0x10] sm:$0xff]
    %v2261 = vld [vmem:[#allocation2 + $0x20] sm:$0xff]
    %v2262 = vld [vmem:[#allocation2 + $0x30] sm:$0xff]
    %v2263 = vld [vmem:[#allocation2 + $0x40] sm:$0xff]
    %v2264 = vld [vmem:[#allocation2 + $0x50] sm:$0xff]
    %v2265 = vld [vmem:[#allocation2 + $0x60] sm:$0xff]
    %v2266 = vld [vmem:[#allocation2 + $0x70] sm:$0xff]
    %v2267 = vld [vmem:[#allocation2 + $0x80] sm:$0xff]
    %v2268 = vld [vmem:[#allocation2 + $0x90] sm:$0xff]
    %v2269 = vld [vmem:[#allocation2 + $0xa0] sm:$0xff]
    %v2270 = vld [vmem:[#allocation2 + $0xb0] sm:$0xff]
    %v2271 = vld [vmem:[#allocation2 + $0xc0] sm:$0xff]
    %v2272 = vld [vmem:[#allocation2 + $0xd0] sm:$0xff]
    %v2273 = vld [vmem:[#allocation2 + $0xe0] sm:$0xff]
    %v2274 = vld [vmem:[#allocation2 + $0xf0] sm:$0xff]
    %2291 = vrot.lane.b32.xlu0 %v2259, 32
    %v2292 = vpop.permute.xlu0 %2291
    %2293 = vrot.lane.b32.xlu0 %v2260, 32
    %v2294 = vpop.permute.xlu0 %2293
    %2295 = vrot.lane.b32.xlu0 %v2261, 32
    %v2296 = vpop.permute.xlu0 %2295
    %2297 = vrot.lane.b32.xlu0 %v2262, 32
    %v2298 = vpop.permute.xlu0 %2297
    %2299 = vrot.lane.b32.xlu0 %v2263, 32
    %v2300 = vpop.permute.xlu0 %2299
    %2301 = vrot.lane.b32.xlu0 %v2264, 32
    %v2302 = vpop.permute.xlu0 %2301
    %2303 = vrot.lane.b32.xlu0 %v2265, 32
    %v2304 = vpop.permute.xlu0 %2303
    %2305 = vrot.lane.b32.xlu0 %v2266, 32
    %v2306 = vpop.permute.xlu0 %2305
    %2307 = vrot.lane.b32.xlu0 %v2267, 32
    %v2308 = vpop.permute.xlu0 %2307
    %2309 = vrot.lane.b32.xlu0 %v2268, 32
    %v2310 = vpop.permute.xlu0 %2309
    %2311 = vrot.lane.b32.xlu0 %v2269, 32
    %v2312 = vpop.permute.xlu0 %2311
    %2313 = vrot.lane.b32.xlu0 %v2270, 32
    %v2314 = vpop.permute.xlu0 %2313
    %2315 = vrot.lane.b32.xlu0 %v2271, 32
    %v2316 = vpop.permute.xlu0 %2315
    %2317 = vrot.lane.b32.xlu0 %v2272, 32
    %v2318 = vpop.permute.xlu0 %2317
    %2319 = vrot.lane.b32.xlu0 %v2273, 32
    %v2320 = vpop.permute.xlu0 %2319
    %2321 = vrot.lane.b32.xlu0 %v2274, 32
    %v2322 = vpop.permute.xlu0 %2321
    %2339 = vmatpush.msra.mxu0 %v2322
    %2340 = vmatpush.msra.mxu0 %v2320
    %2341 = vmatpush.msra.mxu0 %v2318
    %2342 = vmatpush.msra.mxu0 %v2316
    %2343 = vmatpush.msra.mxu0 %v2314
    %2344 = vmatpush.msra.mxu0 %v2312
    %2345 = vmatpush.msra.mxu0 %v2310
    %2346 = vmatpush.msra.mxu0 %v2308
    %2347 = vmatpush.msra.mxu0 %v2306
    %2348 = vmatpush.msra.mxu0 %v2304
    %2349 = vmatpush.msra.mxu0 %v2302
    %2350 = vmatpush.msra.mxu0 %v2300
    %2351 = vmatpush.msra.mxu0 %v2298
    %2352 = vmatpush.msra.mxu0 %v2296
    %2353 = vmatpush.msra.mxu0 %v2294
    %2354 = vmatpush.msra.mxu0 %v2292
    %2355 = vmatmul.f32.gmra.mxu0 %v2243
    %v2356 = vpop.f32.mrf.mxu0
    %v2357 = vadd.f32 0.0, %v2356
    %2358 = vmatmul.f32.gmra.mxu0 %v2244
    %v2359 = vpop.f32.mrf.mxu0
    %v2360 = vadd.f32 0.0, %v2359
    %2361 = vmatmul.f32.gmra.mxu0 %v2245
    %v2362 = vpop.f32.mrf.mxu0
    %v2363 = vadd.f32 0.0, %v2362
    %2364 = vmatmul.f32.gmra.mxu0 %v2246
    %v2365 = vpop.f32.mrf.mxu0
    %v2366 = vadd.f32 0.0, %v2365
    %2367 = vmatmul.f32.gmra.mxu0 %v2247
    %v2368 = vpop.f32.mrf.mxu0
    %v2369 = vadd.f32 0.0, %v2368
    %2370 = vmatmul.f32.gmra.mxu0 %v2248
    %v2371 = vpop.f32.mrf.mxu0
    %v2372 = vadd.f32 0.0, %v2371
    %2373 = vmatmul.f32.gmra.mxu0 %v2249
    %v2374 = vpop.f32.mrf.mxu0
    %v2375 = vadd.f32 0.0, %v2374
    %2376 = vmatmul.f32.gmra.mxu0 %v2250
    %v2377 = vpop.f32.mrf.mxu0
    %v2378 = vadd.f32 0.0, %v2377
    %2379 = vmatmul.f32.gmra.mxu0 %v2251
    %v2380 = vpop.f32.mrf.mxu0
    %v2381 = vadd.f32 0.0, %v2380
    %2382 = vmatmul.f32.gmra.mxu0 %v2252
    %v2383 = vpop.f32.mrf.mxu0
    %v2384 = vadd.f32 0.0, %v2383
    %2385 = vmatmul.f32.gmra.mxu0 %v2253
    %v2386 = vpop.f32.mrf.mxu0
    %v2387 = vadd.f32 0.0, %v2386
    %2388 = vmatmul.f32.gmra.mxu0 %v2254
    %v2389 = vpop.f32.mrf.mxu0
    %v2390 = vadd.f32 0.0, %v2389
    %2391 = vmatmul.f32.gmra.mxu0 %v2255
    %v2392 = vpop.f32.mrf.mxu0
    %v2393 = vadd.f32 0.0, %v2392
    %2394 = vmatmul.f32.gmra.mxu0 %v2256
    %v2395 = vpop.f32.mrf.mxu0
    %v2396 = vadd.f32 0.0, %v2395
    %2397 = vmatmul.f32.gmra.mxu0 %v2257
    %v2398 = vpop.f32.mrf.mxu0
    %v2399 = vadd.f32 0.0, %v2398
    %2400 = vmatmul.f32.gmra.mxu0 %v2258
    %v2401 = vpop.f32.mrf.mxu0
    %v2402 = vadd.f32 0.0, %v2401
    %2403 = vdwg.mxu0
    %v2404 = vadd.f32 %v1890, %v2357
    %v2405 = vadd.f32 %v1891, %v2360
    %v2406 = vadd.f32 %v1892, %v2363
    %v2407 = vadd.f32 %v1893, %v2366
    %v2408 = vadd.f32 %v1894, %v2369
    %v2409 = vadd.f32 %v1895, %v2372
    %v2410 = vadd.f32 %v1896, %v2375
    %v2411 = vadd.f32 %v1897, %v2378
    %v2412 = vadd.f32 %v1898, %v2381
    %v2413 = vadd.f32 %v1899, %v2384
    %v2414 = vadd.f32 %v1900, %v2387
    %v2415 = vadd.f32 %v1901, %v2390
    %v2416 = vadd.f32 %v1902, %v2393
    %v2417 = vadd.f32 %v1903, %v2396
    %v2418 = vadd.f32 %v1904, %v2399
    %v2419 = vadd.f32 %v1905, %v2402
    %v2420 = vld [vmem:[#allocation3] sm:$0xff]
    %v2421 = vld [vmem:[#allocation3 + $0x8] sm:$0xff]
    %v2422 = vld [vmem:[#allocation3 + $0x10] sm:$0xff]
    %v2423 = vld [vmem:[#allocation3 + $0x18] sm:$0xff]
    %v2424 = vld [vmem:[#allocation3 + $0x20] sm:$0xff]
    %v2425 = vld [vmem:[#allocation3 + $0x28] sm:$0xff]
    %v2426 = vld [vmem:[#allocation3 + $0x30] sm:$0xff]
    %v2427 = vld [vmem:[#allocation3 + $0x38] sm:$0xff]
    %v2428 = vld [vmem:[#allocation3 + $0x40] sm:$0xff]
    %v2429 = vld [vmem:[#allocation3 + $0x48] sm:$0xff]
    %v2430 = vld [vmem:[#allocation3 + $0x50] sm:$0xff]
    %v2431 = vld [vmem:[#allocation3 + $0x58] sm:$0xff]
    %v2432 = vld [vmem:[#allocation3 + $0x60] sm:$0xff]
    %v2433 = vld [vmem:[#allocation3 + $0x68] sm:$0xff]
    %v2434 = vld [vmem:[#allocation3 + $0x70] sm:$0xff]
    %v2435 = vld [vmem:[#allocation3 + $0x78] sm:$0xff]
    %2436 = vrot.lane.b32.xlu0 %v141, 112
    %v2437 = vpop.permute.xlu0 %2436
    %2438 = vrot.lane.b32.xlu0 %v144, 112
    %v2439 = vpop.permute.xlu0 %2438
    %2440 = vrot.lane.b32.xlu0 %v147, 112
    %v2441 = vpop.permute.xlu0 %2440
    %2442 = vrot.lane.b32.xlu0 %v150, 112
    %v2443 = vpop.permute.xlu0 %2442
    %2444 = vrot.lane.b32.xlu0 %v153, 112
    %v2445 = vpop.permute.xlu0 %2444
    %2446 = vrot.lane.b32.xlu0 %v156, 112
    %v2447 = vpop.permute.xlu0 %2446
    %2448 = vrot.lane.b32.xlu0 %v159, 112
    %v2449 = vpop.permute.xlu0 %2448
    %2450 = vrot.lane.b32.xlu0 %v162, 112
    %v2451 = vpop.permute.xlu0 %2450
    %2452 = vrot.lane.b32.xlu0 %v165, 112
    %v2453 = vpop.permute.xlu0 %2452
    %2454 = vrot.lane.b32.xlu0 %v168, 112
    %v2455 = vpop.permute.xlu0 %2454
    %2456 = vrot.lane.b32.xlu0 %v171, 112
    %v2457 = vpop.permute.xlu0 %2456
    %2458 = vrot.lane.b32.xlu0 %v174, 112
    %v2459 = vpop.permute.xlu0 %2458
    %2460 = vrot.lane.b32.xlu0 %v177, 112
    %v2461 = vpop.permute.xlu0 %2460
    %2462 = vrot.lane.b32.xlu0 %v180, 112
    %v2463 = vpop.permute.xlu0 %2462
    %2464 = vrot.lane.b32.xlu0 %v183, 112
    %v2465 = vpop.permute.xlu0 %2464
    %2466 = vrot.lane.b32.xlu0 %v186, 112
    %v2467 = vpop.permute.xlu0 %2466
    %2468 = vrot.lane.b32.xlu0 %v141, 80
    %v2469 = vpop.permute.xlu0 %2468
    %2470 = vrot.lane.b32.xlu0 %v144, 80
    %v2471 = vpop.permute.xlu0 %2470
    %2472 = vrot.lane.b32.xlu0 %v147, 80
    %v2473 = vpop.permute.xlu0 %2472
    %2474 = vrot.lane.b32.xlu0 %v150, 80
    %v2475 = vpop.permute.xlu0 %2474
    %2476 = vrot.lane.b32.xlu0 %v153, 80
    %v2477 = vpop.permute.xlu0 %2476
    %2478 = vrot.lane.b32.xlu0 %v156, 80
    %v2479 = vpop.permute.xlu0 %2478
    %2480 = vrot.lane.b32.xlu0 %v159, 80
    %v2481 = vpop.permute.xlu0 %2480
    %2482 = vrot.lane.b32.xlu0 %v162, 80
    %v2483 = vpop.permute.xlu0 %2482
    %2484 = vrot.lane.b32.xlu0 %v165, 80
    %v2485 = vpop.permute.xlu0 %2484
    %2486 = vrot.lane.b32.xlu0 %v168, 80
    %v2487 = vpop.permute.xlu0 %2486
    %2488 = vrot.lane.b32.xlu0 %v171, 80
    %v2489 = vpop.permute.xlu0 %2488
    %2490 = vrot.lane.b32.xlu0 %v174, 80
    %v2491 = vpop.permute.xlu0 %2490
    %2492 = vrot.lane.b32.xlu0 %v177, 80
    %v2493 = vpop.permute.xlu0 %2492
    %2494 = vrot.lane.b32.xlu0 %v180, 80
    %v2495 = vpop.permute.xlu0 %2494
    %2496 = vrot.lane.b32.xlu0 %v183, 80
    %v2497 = vpop.permute.xlu0 %2496
    %2498 = vrot.lane.b32.xlu0 %v186, 80
    %v2499 = vpop.permute.xlu0 %2498
    %v2500 = vsel %vm539, %v2437, 0
    %v2502 = vsel %vm539, %v2439, 0
    %v2504 = vsel %vm539, %v2441, 0
    %v2506 = vsel %vm539, %v2443, 0
    %v2508 = vsel %vm539, %v2445, 0
    %v2510 = vsel %vm539, %v2447, 0
    %v2512 = vsel %vm539, %v2449, 0
    %v2514 = vsel %vm539, %v2451, 0
    %v2516 = vsel %vm539, %v2453, 0
    %v2518 = vsel %vm539, %v2455, 0
    %v2520 = vsel %vm539, %v2457, 0
    %v2522 = vsel %vm539, %v2459, 0
    %v2524 = vsel %vm539, %v2461, 0
    %v2526 = vsel %vm539, %v2463, 0
    %v2528 = vsel %vm539, %v2465, 0
    %v2530 = vsel %vm539, %v2467, 0
    %v2532 = vsel %vm539, %v2469, 0
    %v2534 = vsel %vm539, %v2471, 0
    %v2536 = vsel %vm539, %v2473, 0
    %v2538 = vsel %vm539, %v2475, 0
    %v2540 = vsel %vm539, %v2477, 0
    %v2542 = vsel %vm539, %v2479, 0
    %v2544 = vsel %vm539, %v2481, 0
    %v2546 = vsel %vm539, %v2483, 0
    %v2548 = vsel %vm539, %v2485, 0
    %v2550 = vsel %vm539, %v2487, 0
    %v2552 = vsel %vm539, %v2489, 0
    %v2554 = vsel %vm539, %v2491, 0
    %v2556 = vsel %vm539, %v2493, 0
    %v2558 = vsel %vm539, %v2495, 0
    %v2560 = vsel %vm539, %v2497, 0
    %v2562 = vsel %vm539, %v2499, 0
    %2564 = vmatpush.xpose.msra.mxu0 %v2562
    %2565 = vmatpush.xpose.msra.mxu0 %v2560
    %2566 = vmatpush.xpose.msra.mxu0 %v2558
    %2567 = vmatpush.xpose.msra.mxu0 %v2556
    %2568 = vmatpush.xpose.msra.mxu0 %v2554
    %2569 = vmatpush.xpose.msra.mxu0 %v2552
    %2570 = vmatpush.xpose.msra.mxu0 %v2550
    %2571 = vmatpush.xpose.msra.mxu0 %v2548
    %2572 = vmatpush.xpose.msra.mxu0 %v2546
    %2573 = vmatpush.xpose.msra.mxu0 %v2544
    %2574 = vmatpush.xpose.msra.mxu0 %v2542
    %2575 = vmatpush.xpose.msra.mxu0 %v2540
    %2576 = vmatpush.xpose.msra.mxu0 %v2538
    %2577 = vmatpush.xpose.msra.mxu0 %v2536
    %2578 = vmatpush.xpose.msra.mxu0 %v2534
    %2579 = vmatpush.xpose.msra.mxu0 %v2532
    %2580 = vmatmul.f32.gmra.mxu0 %v2500
    %v2581 = vpop.f32.mrf.mxu0
    %v2582 = vadd.f32 %v2420, %v2581
    %2583 = vmatmul.f32.gmra.mxu0 %v2502
    %v2584 = vpop.f32.mrf.mxu0
    %v2585 = vadd.f32 %v2421, %v2584
    %2586 = vmatmul.f32.gmra.mxu0 %v2504
    %v2587 = vpop.f32.mrf.mxu0
    %v2588 = vadd.f32 %v2422, %v2587
    %2589 = vmatmul.f32.gmra.mxu0 %v2506
    %v2590 = vpop.f32.mrf.mxu0
    %v2591 = vadd.f32 %v2423, %v2590
    %2592 = vmatmul.f32.gmra.mxu0 %v2508
    %v2593 = vpop.f32.mrf.mxu0
    %v2594 = vadd.f32 %v2424, %v2593
    %2595 = vmatmul.f32.gmra.mxu0 %v2510
    %v2596 = vpop.f32.mrf.mxu0
    %v2597 = vadd.f32 %v2425, %v2596
    %2598 = vmatmul.f32.gmra.mxu0 %v2512
    %v2599 = vpop.f32.mrf.mxu0
    %v2600 = vadd.f32 %v2426, %v2599
    %2601 = vmatmul.f32.gmra.mxu0 %v2514
    %v2602 = vpop.f32.mrf.mxu0
    %v2603 = vadd.f32 %v2427, %v2602
    %2604 = vmatmul.f32.gmra.mxu0 %v2516
    %v2605 = vpop.f32.mrf.mxu0
    %v2606 = vadd.f32 %v2428, %v2605
    %2607 = vmatmul.f32.gmra.mxu0 %v2518
    %v2608 = vpop.f32.mrf.mxu0
    %v2609 = vadd.f32 %v2429, %v2608
    %2610 = vmatmul.f32.gmra.mxu0 %v2520
    %v2611 = vpop.f32.mrf.mxu0
    %v2612 = vadd.f32 %v2430, %v2611
    %2613 = vmatmul.f32.gmra.mxu0 %v2522
    %v2614 = vpop.f32.mrf.mxu0
    %v2615 = vadd.f32 %v2431, %v2614
    %2616 = vmatmul.f32.gmra.mxu0 %v2524
    %v2617 = vpop.f32.mrf.mxu0
    %v2618 = vadd.f32 %v2432, %v2617
    %2619 = vmatmul.f32.gmra.mxu0 %v2526
    %v2620 = vpop.f32.mrf.mxu0
    %v2621 = vadd.f32 %v2433, %v2620
    %2622 = vmatmul.f32.gmra.mxu0 %v2528
    %v2623 = vpop.f32.mrf.mxu0
    %v2624 = vadd.f32 %v2434, %v2623
    %2625 = vmatmul.f32.gmra.mxu0 %v2530
    %v2626 = vpop.f32.mrf.mxu0
    %v2627 = vadd.f32 %v2435, %v2626
    %2628 = vdwg.mxu0
    %2629 = vmax.xlane.f32.xlu0 %v2582
    %v2630 = vpop.xlane.xlu0 %2629
    %2631 = vmax.xlane.f32.xlu0 %v2585
    %v2632 = vpop.xlane.xlu0 %2631
    %2633 = vmax.xlane.f32.xlu0 %v2588
    %v2634 = vpop.xlane.xlu0 %2633
    %2635 = vmax.xlane.f32.xlu0 %v2591
    %v2636 = vpop.xlane.xlu0 %2635
    %2637 = vmax.xlane.f32.xlu0 %v2594
    %v2638 = vpop.xlane.xlu0 %2637
    %2639 = vmax.xlane.f32.xlu0 %v2597
    %v2640 = vpop.xlane.xlu0 %2639
    %2641 = vmax.xlane.f32.xlu0 %v2600
    %v2642 = vpop.xlane.xlu0 %2641
    %2643 = vmax.xlane.f32.xlu0 %v2603
    %v2644 = vpop.xlane.xlu0 %2643
    %2645 = vmax.xlane.f32.xlu0 %v2606
    %v2646 = vpop.xlane.xlu0 %2645
    %2647 = vmax.xlane.f32.xlu0 %v2609
    %v2648 = vpop.xlane.xlu0 %2647
    %2649 = vmax.xlane.f32.xlu0 %v2612
    %v2650 = vpop.xlane.xlu0 %2649
    %2651 = vmax.xlane.f32.xlu0 %v2615
    %v2652 = vpop.xlane.xlu0 %2651
    %2653 = vmax.xlane.f32.xlu0 %v2618
    %v2654 = vpop.xlane.xlu0 %2653
    %2655 = vmax.xlane.f32.xlu0 %v2621
    %v2656 = vpop.xlane.xlu0 %2655
    %2657 = vmax.xlane.f32.xlu0 %v2624
    %v2658 = vpop.xlane.xlu0 %2657
    %2659 = vmax.xlane.f32.xlu0 %v2627
    %v2660 = vpop.xlane.xlu0 %2659
    %v2661 = vsub.f32 %v2582, %v2630
    %v2662 = vsub.f32 %v2585, %v2632
    %v2663 = vsub.f32 %v2588, %v2634
    %v2664 = vsub.f32 %v2591, %v2636
    %v2665 = vsub.f32 %v2594, %v2638
    %v2666 = vsub.f32 %v2597, %v2640
    %v2667 = vsub.f32 %v2600, %v2642
    %v2668 = vsub.f32 %v2603, %v2644
    %v2669 = vsub.f32 %v2606, %v2646
    %v2670 = vsub.f32 %v2609, %v2648
    %v2671 = vsub.f32 %v2612, %v2650
    %v2672 = vsub.f32 %v2615, %v2652
    %v2673 = vsub.f32 %v2618, %v2654
    %v2674 = vsub.f32 %v2621, %v2656
    %v2675 = vsub.f32 %v2624, %v2658
    %v2676 = vsub.f32 %v2627, %v2660
    %v2677 = vmul.f32 %v2661, 1.442695
    %v2678 = vpow.pop %v2677
    %v2679 = vmul.f32 %v2662, 1.442695
    %v2680 = vpow.pop %v2679
    %v2681 = vmul.f32 %v2663, 1.442695
    %v2682 = vpow.pop %v2681
    %v2683 = vmul.f32 %v2664, 1.442695
    %v2684 = vpow.pop %v2683
    %v2685 = vmul.f32 %v2665, 1.442695
    %v2686 = vpow.pop %v2685
    %v2687 = vmul.f32 %v2666, 1.442695
    %v2688 = vpow.pop %v2687
    %v2689 = vmul.f32 %v2667, 1.442695
    %v2690 = vpow.pop %v2689
    %v2691 = vmul.f32 %v2668, 1.442695
    %v2692 = vpow.pop %v2691
    %v2693 = vmul.f32 %v2669, 1.442695
    %v2694 = vpow.pop %v2693
    %v2695 = vmul.f32 %v2670, 1.442695
    %v2696 = vpow.pop %v2695
    %v2697 = vmul.f32 %v2671, 1.442695
    %v2698 = vpow.pop %v2697
    %v2699 = vmul.f32 %v2672, 1.442695
    %v2700 = vpow.pop %v2699
    %v2701 = vmul.f32 %v2673, 1.442695
    %v2702 = vpow.pop %v2701
    %v2703 = vmul.f32 %v2674, 1.442695
    %v2704 = vpow.pop %v2703
    %v2705 = vmul.f32 %v2675, 1.442695
    %v2706 = vpow.pop %v2705
    %v2707 = vmul.f32 %v2676, 1.442695
    %v2708 = vpow.pop %v2707
    %2709 = vadd.xlane.f32.xlu0 %v2678
    %v2710 = vpop.xlane.xlu0 %2709
    %2711 = vadd.xlane.f32.xlu0 %v2680
    %v2712 = vpop.xlane.xlu0 %2711
    %2713 = vadd.xlane.f32.xlu0 %v2682
    %v2714 = vpop.xlane.xlu0 %2713
    %2715 = vadd.xlane.f32.xlu0 %v2684
    %v2716 = vpop.xlane.xlu0 %2715
    %2717 = vadd.xlane.f32.xlu0 %v2686
    %v2718 = vpop.xlane.xlu0 %2717
    %2719 = vadd.xlane.f32.xlu0 %v2688
    %v2720 = vpop.xlane.xlu0 %2719
    %2721 = vadd.xlane.f32.xlu0 %v2690
    %v2722 = vpop.xlane.xlu0 %2721
    %2723 = vadd.xlane.f32.xlu0 %v2692
    %v2724 = vpop.xlane.xlu0 %2723
    %2725 = vadd.xlane.f32.xlu0 %v2694
    %v2726 = vpop.xlane.xlu0 %2725
    %2727 = vadd.xlane.f32.xlu0 %v2696
    %v2728 = vpop.xlane.xlu0 %2727
    %2729 = vadd.xlane.f32.xlu0 %v2698
    %v2730 = vpop.xlane.xlu0 %2729
    %2731 = vadd.xlane.f32.xlu0 %v2700
    %v2732 = vpop.xlane.xlu0 %2731
    %2733 = vadd.xlane.f32.xlu0 %v2702
    %v2734 = vpop.xlane.xlu0 %2733
    %2735 = vadd.xlane.f32.xlu0 %v2704
    %v2736 = vpop.xlane.xlu0 %2735
    %2737 = vadd.xlane.f32.xlu0 %v2706
    %v2738 = vpop.xlane.xlu0 %2737
    %2739 = vadd.xlane.f32.xlu0 %v2708
    %v2740 = vpop.xlane.xlu0 %2739
    %v2741 = vrcp.pop %v2710
    %v2742 = vrcp.pop %v2712
    %v2743 = vrcp.pop %v2714
    %v2744 = vrcp.pop %v2716
    %v2745 = vrcp.pop %v2718
    %v2746 = vrcp.pop %v2720
    %v2747 = vrcp.pop %v2722
    %v2748 = vrcp.pop %v2724
    %v2749 = vrcp.pop %v2726
    %v2750 = vrcp.pop %v2728
    %v2751 = vrcp.pop %v2730
    %v2752 = vrcp.pop %v2732
    %v2753 = vrcp.pop %v2734
    %v2754 = vrcp.pop %v2736
    %v2755 = vrcp.pop %v2738
    %v2756 = vrcp.pop %v2740
    %v2757 = vmul.f32 %v2678, %v2741
    %v2758 = vmul.f32 %v2680, %v2742
    %v2759 = vmul.f32 %v2682, %v2743
    %v2760 = vmul.f32 %v2684, %v2744
    %v2761 = vmul.f32 %v2686, %v2745
    %v2762 = vmul.f32 %v2688, %v2746
    %v2763 = vmul.f32 %v2690, %v2747
    %v2764 = vmul.f32 %v2692, %v2748
    %v2765 = vmul.f32 %v2694, %v2749
    %v2766 = vmul.f32 %v2696, %v2750
    %v2767 = vmul.f32 %v2698, %v2751
    %v2768 = vmul.f32 %v2700, %v2752
    %v2769 = vmul.f32 %v2702, %v2753
    %v2770 = vmul.f32 %v2704, %v2754
    %v2771 = vmul.f32 %v2706, %v2755
    %v2772 = vmul.f32 %v2708, %v2756
    %v2773 = vld [vmem:[#allocation2 + $0x8] sm:$0xff]
    %v2774 = vld [vmem:[#allocation2 + $0x18] sm:$0xff]
    %v2775 = vld [vmem:[#allocation2 + $0x28] sm:$0xff]
    %v2776 = vld [vmem:[#allocation2 + $0x38] sm:$0xff]
    %v2777 = vld [vmem:[#allocation2 + $0x48] sm:$0xff]
    %v2778 = vld [vmem:[#allocation2 + $0x58] sm:$0xff]
    %v2779 = vld [vmem:[#allocation2 + $0x68] sm:$0xff]
    %v2780 = vld [vmem:[#allocation2 + $0x78] sm:$0xff]
    %v2781 = vld [vmem:[#allocation2 + $0x88] sm:$0xff]
    %v2782 = vld [vmem:[#allocation2 + $0x98] sm:$0xff]
    %v2783 = vld [vmem:[#allocation2 + $0xa8] sm:$0xff]
    %v2784 = vld [vmem:[#allocation2 + $0xb8] sm:$0xff]
    %v2785 = vld [vmem:[#allocation2 + $0xc8] sm:$0xff]
    %v2786 = vld [vmem:[#allocation2 + $0xd8] sm:$0xff]
    %v2787 = vld [vmem:[#allocation2 + $0xe8] sm:$0xff]
    %v2788 = vld [vmem:[#allocation2 + $0xf8] sm:$0xff]
    %2789 = vmatpush.msra.mxu0 %v2788
    %2790 = vmatpush.msra.mxu0 %v2787
    %2791 = vmatpush.msra.mxu0 %v2786
    %2792 = vmatpush.msra.mxu0 %v2785
    %2793 = vmatpush.msra.mxu0 %v2784
    %2794 = vmatpush.msra.mxu0 %v2783
    %2795 = vmatpush.msra.mxu0 %v2782
    %2796 = vmatpush.msra.mxu0 %v2781
    %2797 = vmatpush.msra.mxu0 %v2780
    %2798 = vmatpush.msra.mxu0 %v2779
    %2799 = vmatpush.msra.mxu0 %v2778
    %2800 = vmatpush.msra.mxu0 %v2777
    %2801 = vmatpush.msra.mxu0 %v2776
    %2802 = vmatpush.msra.mxu0 %v2775
    %2803 = vmatpush.msra.mxu0 %v2774
    %2804 = vmatpush.msra.mxu0 %v2773
    %2805 = vmatmul.f32.gmra.mxu0 %v2757
    %v2806 = vpop.f32.mrf.mxu0
    %v2807 = vadd.f32 0.0, %v2806
    %2808 = vmatmul.f32.gmra.mxu0 %v2758
    %v2809 = vpop.f32.mrf.mxu0
    %v2810 = vadd.f32 0.0, %v2809
    %2811 = vmatmul.f32.gmra.mxu0 %v2759
    %v2812 = vpop.f32.mrf.mxu0
    %v2813 = vadd.f32 0.0, %v2812
    %2814 = vmatmul.f32.gmra.mxu0 %v2760
    %v2815 = vpop.f32.mrf.mxu0
    %v2816 = vadd.f32 0.0, %v2815
    %2817 = vmatmul.f32.gmra.mxu0 %v2761
    %v2818 = vpop.f32.mrf.mxu0
    %v2819 = vadd.f32 0.0, %v2818
    %2820 = vmatmul.f32.gmra.mxu0 %v2762
    %v2821 = vpop.f32.mrf.mxu0
    %v2822 = vadd.f32 0.0, %v2821
    %2823 = vmatmul.f32.gmra.mxu0 %v2763
    %v2824 = vpop.f32.mrf.mxu0
    %v2825 = vadd.f32 0.0, %v2824
    %2826 = vmatmul.f32.gmra.mxu0 %v2764
    %v2827 = vpop.f32.mrf.mxu0
    %v2828 = vadd.f32 0.0, %v2827
    %2829 = vmatmul.f32.gmra.mxu0 %v2765
    %v2830 = vpop.f32.mrf.mxu0
    %v2831 = vadd.f32 0.0, %v2830
    %2832 = vmatmul.f32.gmra.mxu0 %v2766
    %v2833 = vpop.f32.mrf.mxu0
    %v2834 = vadd.f32 0.0, %v2833
    %2835 = vmatmul.f32.gmra.mxu0 %v2767
    %v2836 = vpop.f32.mrf.mxu0
    %v2837 = vadd.f32 0.0, %v2836
    %2838 = vmatmul.f32.gmra.mxu0 %v2768
    %v2839 = vpop.f32.mrf.mxu0
    %v2840 = vadd.f32 0.0, %v2839
    %2841 = vmatmul.f32.gmra.mxu0 %v2769
    %v2842 = vpop.f32.mrf.mxu0
    %v2843 = vadd.f32 0.0, %v2842
    %2844 = vmatmul.f32.gmra.mxu0 %v2770
    %v2845 = vpop.f32.mrf.mxu0
    %v2846 = vadd.f32 0.0, %v2845
    %2847 = vmatmul.f32.gmra.mxu0 %v2771
    %v2848 = vpop.f32.mrf.mxu0
    %v2849 = vadd.f32 0.0, %v2848
    %2850 = vmatmul.f32.gmra.mxu0 %v2772
    %v2851 = vpop.f32.mrf.mxu0
    %v2852 = vadd.f32 0.0, %v2851
    %2853 = vdwg.mxu0
    %v2854 = vadd.f32 %v2404, %v2807
    %v2855 = vadd.f32 %v2405, %v2810
    %v2856 = vadd.f32 %v2406, %v2813
    %v2857 = vadd.f32 %v2407, %v2816
    %v2858 = vadd.f32 %v2408, %v2819
    %v2859 = vadd.f32 %v2409, %v2822
    %v2860 = vadd.f32 %v2410, %v2825
    %v2861 = vadd.f32 %v2411, %v2828
    %v2862 = vadd.f32 %v2412, %v2831
    %v2863 = vadd.f32 %v2413, %v2834
    %v2864 = vadd.f32 %v2414, %v2837
    %v2865 = vadd.f32 %v2415, %v2840
    %v2866 = vadd.f32 %v2416, %v2843
    %v2867 = vadd.f32 %v2417, %v2846
    %v2868 = vadd.f32 %v2418, %v2849
    %v2869 = vadd.f32 %v2419, %v2852
    %v2870 = vld [vmem:[#allocation3] sm:$0xff]
    %v2871 = vld [vmem:[#allocation3 + $0x8] sm:$0xff]
    %v2872 = vld [vmem:[#allocation3 + $0x10] sm:$0xff]
    %v2873 = vld [vmem:[#allocation3 + $0x18] sm:$0xff]
    %v2874 = vld [vmem:[#allocation3 + $0x20] sm:$0xff]
    %v2875 = vld [vmem:[#allocation3 + $0x28] sm:$0xff]
    %v2876 = vld [vmem:[#allocation3 + $0x30] sm:$0xff]
    %v2877 = vld [vmem:[#allocation3 + $0x38] sm:$0xff]
    %v2878 = vld [vmem:[#allocation3 + $0x40] sm:$0xff]
    %v2879 = vld [vmem:[#allocation3 + $0x48] sm:$0xff]
    %v2880 = vld [vmem:[#allocation3 + $0x50] sm:$0xff]
    %v2881 = vld [vmem:[#allocation3 + $0x58] sm:$0xff]
    %v2882 = vld [vmem:[#allocation3 + $0x60] sm:$0xff]
    %v2883 = vld [vmem:[#allocation3 + $0x68] sm:$0xff]
    %v2884 = vld [vmem:[#allocation3 + $0x70] sm:$0xff]
    %v2885 = vld [vmem:[#allocation3 + $0x78] sm:$0xff]
    %2886 = vrot.lane.b32.xlu0 %v141, 108
    %v2887 = vpop.permute.xlu0 %2886
    %2888 = vrot.lane.b32.xlu0 %v144, 108
    %v2889 = vpop.permute.xlu0 %2888
    %2890 = vrot.lane.b32.xlu0 %v147, 108
    %v2891 = vpop.permute.xlu0 %2890
    %2892 = vrot.lane.b32.xlu0 %v150, 108
    %v2893 = vpop.permute.xlu0 %2892
    %2894 = vrot.lane.b32.xlu0 %v153, 108
    %v2895 = vpop.permute.xlu0 %2894
    %2896 = vrot.lane.b32.xlu0 %v156, 108
    %v2897 = vpop.permute.xlu0 %2896
    %2898 = vrot.lane.b32.xlu0 %v159, 108
    %v2899 = vpop.permute.xlu0 %2898
    %2900 = vrot.lane.b32.xlu0 %v162, 108
    %v2901 = vpop.permute.xlu0 %2900
    %2902 = vrot.lane.b32.xlu0 %v165, 108
    %v2903 = vpop.permute.xlu0 %2902
    %2904 = vrot.lane.b32.xlu0 %v168, 108
    %v2905 = vpop.permute.xlu0 %2904
    %2906 = vrot.lane.b32.xlu0 %v171, 108
    %v2907 = vpop.permute.xlu0 %2906
    %2908 = vrot.lane.b32.xlu0 %v174, 108
    %v2909 = vpop.permute.xlu0 %2908
    %2910 = vrot.lane.b32.xlu0 %v177, 108
    %v2911 = vpop.permute.xlu0 %2910
    %2912 = vrot.lane.b32.xlu0 %v180, 108
    %v2913 = vpop.permute.xlu0 %2912
    %2914 = vrot.lane.b32.xlu0 %v183, 108
    %v2915 = vpop.permute.xlu0 %2914
    %2916 = vrot.lane.b32.xlu0 %v186, 108
    %v2917 = vpop.permute.xlu0 %2916
    %2918 = vrot.lane.b32.xlu0 %v141, 76
    %v2919 = vpop.permute.xlu0 %2918
    %2920 = vrot.lane.b32.xlu0 %v144, 76
    %v2921 = vpop.permute.xlu0 %2920
    %2922 = vrot.lane.b32.xlu0 %v147, 76
    %v2923 = vpop.permute.xlu0 %2922
    %2924 = vrot.lane.b32.xlu0 %v150, 76
    %v2925 = vpop.permute.xlu0 %2924
    %2926 = vrot.lane.b32.xlu0 %v153, 76
    %v2927 = vpop.permute.xlu0 %2926
    %2928 = vrot.lane.b32.xlu0 %v156, 76
    %v2929 = vpop.permute.xlu0 %2928
    %2930 = vrot.lane.b32.xlu0 %v159, 76
    %v2931 = vpop.permute.xlu0 %2930
    %2932 = vrot.lane.b32.xlu0 %v162, 76
    %v2933 = vpop.permute.xlu0 %2932
    %2934 = vrot.lane.b32.xlu0 %v165, 76
    %v2935 = vpop.permute.xlu0 %2934
    %2936 = vrot.lane.b32.xlu0 %v168, 76
    %v2937 = vpop.permute.xlu0 %2936
    %2938 = vrot.lane.b32.xlu0 %v171, 76
    %v2939 = vpop.permute.xlu0 %2938
    %2940 = vrot.lane.b32.xlu0 %v174, 76
    %v2941 = vpop.permute.xlu0 %2940
    %2942 = vrot.lane.b32.xlu0 %v177, 76
    %v2943 = vpop.permute.xlu0 %2942
    %2944 = vrot.lane.b32.xlu0 %v180, 76
    %v2945 = vpop.permute.xlu0 %2944
    %2946 = vrot.lane.b32.xlu0 %v183, 76
    %v2947 = vpop.permute.xlu0 %2946
    %2948 = vrot.lane.b32.xlu0 %v186, 76
    %v2949 = vpop.permute.xlu0 %2948
    %v2950 = vsel %vm539, %v2887, 0
    %v2952 = vsel %vm539, %v2889, 0
    %v2954 = vsel %vm539, %v2891, 0
    %v2956 = vsel %vm539, %v2893, 0
    %v2958 = vsel %vm539, %v2895, 0
    %v2960 = vsel %vm539, %v2897, 0
    %v2962 = vsel %vm539, %v2899, 0
    %v2964 = vsel %vm539, %v2901, 0
    %v2966 = vsel %vm539, %v2903, 0
    %v2968 = vsel %vm539, %v2905, 0
    %v2970 = vsel %vm539, %v2907, 0
    %v2972 = vsel %vm539, %v2909, 0
    %v2974 = vsel %vm539, %v2911, 0
    %v2976 = vsel %vm539, %v2913, 0
    %v2978 = vsel %vm539, %v2915, 0
    %v2980 = vsel %vm539, %v2917, 0
    %v2982 = vsel %vm539, %v2919, 0
    %v2984 = vsel %vm539, %v2921, 0
    %v2986 = vsel %vm539, %v2923, 0
    %v2988 = vsel %vm539, %v2925, 0
    %v2990 = vsel %vm539, %v2927, 0
    %v2992 = vsel %vm539, %v2929, 0
    %v2994 = vsel %vm539, %v2931, 0
    %v2996 = vsel %vm539, %v2933, 0
    %v2998 = vsel %vm539, %v2935, 0
    %v3000 = vsel %vm539, %v2937, 0
    %v3002 = vsel %vm539, %v2939, 0
    %v3004 = vsel %vm539, %v2941, 0
    %v3006 = vsel %vm539, %v2943, 0
    %v3008 = vsel %vm539, %v2945, 0
    %v3010 = vsel %vm539, %v2947, 0
    %v3012 = vsel %vm539, %v2949, 0
    %3014 = vmatpush.xpose.msra.mxu0 %v3012
    %3015 = vmatpush.xpose.msra.mxu0 %v3010
    %3016 = vmatpush.xpose.msra.mxu0 %v3008
    %3017 = vmatpush.xpose.msra.mxu0 %v3006
    %3018 = vmatpush.xpose.msra.mxu0 %v3004
    %3019 = vmatpush.xpose.msra.mxu0 %v3002
    %3020 = vmatpush.xpose.msra.mxu0 %v3000
    %3021 = vmatpush.xpose.msra.mxu0 %v2998
    %3022 = vmatpush.xpose.msra.mxu0 %v2996
    %3023 = vmatpush.xpose.msra.mxu0 %v2994
    %3024 = vmatpush.xpose.msra.mxu0 %v2992
    %3025 = vmatpush.xpose.msra.mxu0 %v2990
    %3026 = vmatpush.xpose.msra.mxu0 %v2988
    %3027 = vmatpush.xpose.msra.mxu0 %v2986
    %3028 = vmatpush.xpose.msra.mxu0 %v2984
    %3029 = vmatpush.xpose.msra.mxu0 %v2982
    %3030 = vmatmul.f32.gmra.mxu0 %v2950
    %v3031 = vpop.f32.mrf.mxu0
    %v3032 = vadd.f32 %v2870, %v3031
    %3033 = vmatmul.f32.gmra.mxu0 %v2952
    %v3034 = vpop.f32.mrf.mxu0
    %v3035 = vadd.f32 %v2871, %v3034
    %3036 = vmatmul.f32.gmra.mxu0 %v2954
    %v3037 = vpop.f32.mrf.mxu0
    %v3038 = vadd.f32 %v2872, %v3037
    %3039 = vmatmul.f32.gmra.mxu0 %v2956
    %v3040 = vpop.f32.mrf.mxu0
    %v3041 = vadd.f32 %v2873, %v3040
    %3042 = vmatmul.f32.gmra.mxu0 %v2958
    %v3043 = vpop.f32.mrf.mxu0
    %v3044 = vadd.f32 %v2874, %v3043
    %3045 = vmatmul.f32.gmra.mxu0 %v2960
    %v3046 = vpop.f32.mrf.mxu0
    %v3047 = vadd.f32 %v2875, %v3046
    %3048 = vmatmul.f32.gmra.mxu0 %v2962
    %v3049 = vpop.f32.mrf.mxu0
    %v3050 = vadd.f32 %v2876, %v3049
    %3051 = vmatmul.f32.gmra.mxu0 %v2964
    %v3052 = vpop.f32.mrf.mxu0
    %v3053 = vadd.f32 %v2877, %v3052
    %3054 = vmatmul.f32.gmra.mxu0 %v2966
    %v3055 = vpop.f32.mrf.mxu0
    %v3056 = vadd.f32 %v2878, %v3055
    %3057 = vmatmul.f32.gmra.mxu0 %v2968
    %v3058 = vpop.f32.mrf.mxu0
    %v3059 = vadd.f32 %v2879, %v3058
    %3060 = vmatmul.f32.gmra.mxu0 %v2970
    %v3061 = vpop.f32.mrf.mxu0
    %v3062 = vadd.f32 %v2880, %v3061
    %3063 = vmatmul.f32.gmra.mxu0 %v2972
    %v3064 = vpop.f32.mrf.mxu0
    %v3065 = vadd.f32 %v2881, %v3064
    %3066 = vmatmul.f32.gmra.mxu0 %v2974
    %v3067 = vpop.f32.mrf.mxu0
    %v3068 = vadd.f32 %v2882, %v3067
    %3069 = vmatmul.f32.gmra.mxu0 %v2976
    %v3070 = vpop.f32.mrf.mxu0
    %v3071 = vadd.f32 %v2883, %v3070
    %3072 = vmatmul.f32.gmra.mxu0 %v2978
    %v3073 = vpop.f32.mrf.mxu0
    %v3074 = vadd.f32 %v2884, %v3073
    %3075 = vmatmul.f32.gmra.mxu0 %v2980
    %v3076 = vpop.f32.mrf.mxu0
    %v3077 = vadd.f32 %v2885, %v3076
    %3078 = vdwg.mxu0
    %3079 = vmax.xlane.f32.xlu0 %v3032
    %v3080 = vpop.xlane.xlu0 %3079
    %3081 = vmax.xlane.f32.xlu0 %v3035
    %v3082 = vpop.xlane.xlu0 %3081
    %3083 = vmax.xlane.f32.xlu0 %v3038
    %v3084 = vpop.xlane.xlu0 %3083
    %3085 = vmax.xlane.f32.xlu0 %v3041
    %v3086 = vpop.xlane.xlu0 %3085
    %3087 = vmax.xlane.f32.xlu0 %v3044
    %v3088 = vpop.xlane.xlu0 %3087
    %3089 = vmax.xlane.f32.xlu0 %v3047
    %v3090 = vpop.xlane.xlu0 %3089
    %3091 = vmax.xlane.f32.xlu0 %v3050
    %v3092 = vpop.xlane.xlu0 %3091
    %3093 = vmax.xlane.f32.xlu0 %v3053
    %v3094 = vpop.xlane.xlu0 %3093
    %3095 = vmax.xlane.f32.xlu0 %v3056
    %v3096 = vpop.xlane.xlu0 %3095
    %3097 = vmax.xlane.f32.xlu0 %v3059
    %v3098 = vpop.xlane.xlu0 %3097
    %3099 = vmax.xlane.f32.xlu0 %v3062
    %v3100 = vpop.xlane.xlu0 %3099
    %3101 = vmax.xlane.f32.xlu0 %v3065
    %v3102 = vpop.xlane.xlu0 %3101
    %3103 = vmax.xlane.f32.xlu0 %v3068
    %v3104 = vpop.xlane.xlu0 %3103
    %3105 = vmax.xlane.f32.xlu0 %v3071
    %v3106 = vpop.xlane.xlu0 %3105
    %3107 = vmax.xlane.f32.xlu0 %v3074
    %v3108 = vpop.xlane.xlu0 %3107
    %3109 = vmax.xlane.f32.xlu0 %v3077
    %v3110 = vpop.xlane.xlu0 %3109
    %v3111 = vsub.f32 %v3032, %v3080
    %v3112 = vsub.f32 %v3035, %v3082
    %v3113 = vsub.f32 %v3038, %v3084
    %v3114 = vsub.f32 %v3041, %v3086
    %v3115 = vsub.f32 %v3044, %v3088
    %v3116 = vsub.f32 %v3047, %v3090
    %v3117 = vsub.f32 %v3050, %v3092
    %v3118 = vsub.f32 %v3053, %v3094
    %v3119 = vsub.f32 %v3056, %v3096
    %v3120 = vsub.f32 %v3059, %v3098
    %v3121 = vsub.f32 %v3062, %v3100
    %v3122 = vsub.f32 %v3065, %v3102
    %v3123 = vsub.f32 %v3068, %v3104
    %v3124 = vsub.f32 %v3071, %v3106
    %v3125 = vsub.f32 %v3074, %v3108
    %v3126 = vsub.f32 %v3077, %v3110
    %v3127 = vmul.f32 %v3111, 1.442695
    %v3128 = vpow.pop %v3127
    %v3129 = vmul.f32 %v3112, 1.442695
    %v3130 = vpow.pop %v3129
    %v3131 = vmul.f32 %v3113, 1.442695
    %v3132 = vpow.pop %v3131
    %v3133 = vmul.f32 %v3114, 1.442695
    %v3134 = vpow.pop %v3133
    %v3135 = vmul.f32 %v3115, 1.442695
    %v3136 = vpow.pop %v3135
    %v3137 = vmul.f32 %v3116, 1.442695
    %v3138 = vpow.pop %v3137
    %v3139 = vmul.f32 %v3117, 1.442695
    %v3140 = vpow.pop %v3139
    %v3141 = vmul.f32 %v3118, 1.442695
    %v3142 = vpow.pop %v3141
    %v3143 = vmul.f32 %v3119, 1.442695
    %v3144 = vpow.pop %v3143
    %v3145 = vmul.f32 %v3120, 1.442695
    %v3146 = vpow.pop %v3145
    %v3147 = vmul.f32 %v3121, 1.442695
    %v3148 = vpow.pop %v3147
    %v3149 = vmul.f32 %v3122, 1.442695
    %v3150 = vpow.pop %v3149
    %v3151 = vmul.f32 %v3123, 1.442695
    %v3152 = vpow.pop %v3151
    %v3153 = vmul.f32 %v3124, 1.442695
    %v3154 = vpow.pop %v3153
    %v3155 = vmul.f32 %v3125, 1.442695
    %v3156 = vpow.pop %v3155
    %v3157 = vmul.f32 %v3126, 1.442695
    %v3158 = vpow.pop %v3157
    %3159 = vadd.xlane.f32.xlu0 %v3128
    %v3160 = vpop.xlane.xlu0 %3159
    %3161 = vadd.xlane.f32.xlu0 %v3130
    %v3162 = vpop.xlane.xlu0 %3161
    %3163 = vadd.xlane.f32.xlu0 %v3132
    %v3164 = vpop.xlane.xlu0 %3163
    %3165 = vadd.xlane.f32.xlu0 %v3134
    %v3166 = vpop.xlane.xlu0 %3165
    %3167 = vadd.xlane.f32.xlu0 %v3136
    %v3168 = vpop.xlane.xlu0 %3167
    %3169 = vadd.xlane.f32.xlu0 %v3138
    %v3170 = vpop.xlane.xlu0 %3169
    %3171 = vadd.xlane.f32.xlu0 %v3140
    %v3172 = vpop.xlane.xlu0 %3171
    %3173 = vadd.xlane.f32.xlu0 %v3142
    %v3174 = vpop.xlane.xlu0 %3173
    %3175 = vadd.xlane.f32.xlu0 %v3144
    %v3176 = vpop.xlane.xlu0 %3175
    %3177 = vadd.xlane.f32.xlu0 %v3146
    %v3178 = vpop.xlane.xlu0 %3177
    %3179 = vadd.xlane.f32.xlu0 %v3148
    %v3180 = vpop.xlane.xlu0 %3179
    %3181 = vadd.xlane.f32.xlu0 %v3150
    %v3182 = vpop.xlane.xlu0 %3181
    %3183 = vadd.xlane.f32.xlu0 %v3152
    %v3184 = vpop.xlane.xlu0 %3183
    %3185 = vadd.xlane.f32.xlu0 %v3154
    %v3186 = vpop.xlane.xlu0 %3185
    %3187 = vadd.xlane.f32.xlu0 %v3156
    %v3188 = vpop.xlane.xlu0 %3187
    %3189 = vadd.xlane.f32.xlu0 %v3158
    %v3190 = vpop.xlane.xlu0 %3189
    %v3191 = vrcp.pop %v3160
    %v3192 = vrcp.pop %v3162
    %v3193 = vrcp.pop %v3164
    %v3194 = vrcp.pop %v3166
    %v3195 = vrcp.pop %v3168
    %v3196 = vrcp.pop %v3170
    %v3197 = vrcp.pop %v3172
    %v3198 = vrcp.pop %v3174
    %v3199 = vrcp.pop %v3176
    %v3200 = vrcp.pop %v3178
    %v3201 = vrcp.pop %v3180
    %v3202 = vrcp.pop %v3182
    %v3203 = vrcp.pop %v3184
    %v3204 = vrcp.pop %v3186
    %v3205 = vrcp.pop %v3188
    %v3206 = vrcp.pop %v3190
    %v3207 = vmul.f32 %v3128, %v3191
    %v3208 = vmul.f32 %v3130, %v3192
    %v3209 = vmul.f32 %v3132, %v3193
    %v3210 = vmul.f32 %v3134, %v3194
    %v3211 = vmul.f32 %v3136, %v3195
    %v3212 = vmul.f32 %v3138, %v3196
    %v3213 = vmul.f32 %v3140, %v3197
    %v3214 = vmul.f32 %v3142, %v3198
    %v3215 = vmul.f32 %v3144, %v3199
    %v3216 = vmul.f32 %v3146, %v3200
    %v3217 = vmul.f32 %v3148, %v3201
    %v3218 = vmul.f32 %v3150, %v3202
    %v3219 = vmul.f32 %v3152, %v3203
    %v3220 = vmul.f32 %v3154, %v3204
    %v3221 = vmul.f32 %v3156, %v3205
    %v3222 = vmul.f32 %v3158, %v3206
    %v3223 = vld [vmem:[#allocation2 + $0x8] sm:$0xff]
    %v3224 = vld [vmem:[#allocation2 + $0x18] sm:$0xff]
    %v3225 = vld [vmem:[#allocation2 + $0x28] sm:$0xff]
    %v3226 = vld [vmem:[#allocation2 + $0x38] sm:$0xff]
    %v3227 = vld [vmem:[#allocation2 + $0x48] sm:$0xff]
    %v3228 = vld [vmem:[#allocation2 + $0x58] sm:$0xff]
    %v3229 = vld [vmem:[#allocation2 + $0x68] sm:$0xff]
    %v3230 = vld [vmem:[#allocation2 + $0x78] sm:$0xff]
    %v3231 = vld [vmem:[#allocation2 + $0x88] sm:$0xff]
    %v3232 = vld [vmem:[#allocation2 + $0x98] sm:$0xff]
    %v3233 = vld [vmem:[#allocation2 + $0xa8] sm:$0xff]
    %v3234 = vld [vmem:[#allocation2 + $0xb8] sm:$0xff]
    %v3235 = vld [vmem:[#allocation2 + $0xc8] sm:$0xff]
    %v3236 = vld [vmem:[#allocation2 + $0xd8] sm:$0xff]
    %v3237 = vld [vmem:[#allocation2 + $0xe8] sm:$0xff]
    %v3238 = vld [vmem:[#allocation2 + $0xf8] sm:$0xff]
    %3255 = vrot.lane.b32.xlu0 %v3223, 96
    %v3256 = vpop.permute.xlu0 %3255
    %3257 = vrot.lane.b32.xlu0 %v3224, 96
    %v3258 = vpop.permute.xlu0 %3257
    %3259 = vrot.lane.b32.xlu0 %v3225, 96
    %v3260 = vpop.permute.xlu0 %3259
    %3261 = vrot.lane.b32.xlu0 %v3226, 96
    %v3262 = vpop.permute.xlu0 %3261
    %3263 = vrot.lane.b32.xlu0 %v3227, 96
    %v3264 = vpop.permute.xlu0 %3263
    %3265 = vrot.lane.b32.xlu0 %v3228, 96
    %v3266 = vpop.permute.xlu0 %3265
    %3267 = vrot.lane.b32.xlu0 %v3229, 96
    %v3268 = vpop.permute.xlu0 %3267
    %3269 = vrot.lane.b32.xlu0 %v3230, 96
    %v3270 = vpop.permute.xlu0 %3269
    %3271 = vrot.lane.b32.xlu0 %v3231, 96
    %v3272 = vpop.permute.xlu0 %3271
    %3273 = vrot.lane.b32.xlu0 %v3232, 96
    %v3274 = vpop.permute.xlu0 %3273
    %3275 = vrot.lane.b32.xlu0 %v3233, 96
    %v3276 = vpop.permute.xlu0 %3275
    %3277 = vrot.lane.b32.xlu0 %v3234, 96
    %v3278 = vpop.permute.xlu0 %3277
    %3279 = vrot.lane.b32.xlu0 %v3235, 96
    %v3280 = vpop.permute.xlu0 %3279
    %3281 = vrot.lane.b32.xlu0 %v3236, 96
    %v3282 = vpop.permute.xlu0 %3281
    %3283 = vrot.lane.b32.xlu0 %v3237, 96
    %v3284 = vpop.permute.xlu0 %3283
    %3285 = vrot.lane.b32.xlu0 %v3238, 96
    %v3286 = vpop.permute.xlu0 %3285
    %3303 = vmatpush.msra.mxu0 %v3286
    %3304 = vmatpush.msra.mxu0 %v3284
    %3305 = vmatpush.msra.mxu0 %v3282
    %3306 = vmatpush.msra.mxu0 %v3280
    %3307 = vmatpush.msra.mxu0 %v3278
    %3308 = vmatpush.msra.mxu0 %v3276
    %3309 = vmatpush.msra.mxu0 %v3274
    %3310 = vmatpush.msra.mxu0 %v3272
    %3311 = vmatpush.msra.mxu0 %v3270
    %3312 = vmatpush.msra.mxu0 %v3268
    %3313 = vmatpush.msra.mxu0 %v3266
    %3314 = vmatpush.msra.mxu0 %v3264
    %3315 = vmatpush.msra.mxu0 %v3262
    %3316 = vmatpush.msra.mxu0 %v3260
    %3317 = vmatpush.msra.mxu0 %v3258
    %3318 = vmatpush.msra.mxu0 %v3256
    %3319 = vmatmul.f32.gmra.mxu0 %v3207
    %v3320 = vpop.f32.mrf.mxu0
    %v3321 = vadd.f32 0.0, %v3320
    %3322 = vmatmul.f32.gmra.mxu0 %v3208
    %v3323 = vpop.f32.mrf.mxu0
    %v3324 = vadd.f32 0.0, %v3323
    %3325 = vmatmul.f32.gmra.mxu0 %v3209
    %v3326 = vpop.f32.mrf.mxu0
    %v3327 = vadd.f32 0.0, %v3326
    %3328 = vmatmul.f32.gmra.mxu0 %v3210
    %v3329 = vpop.f32.mrf.mxu0
    %v3330 = vadd.f32 0.0, %v3329
    %3331 = vmatmul.f32.gmra.mxu0 %v3211
    %v3332 = vpop.f32.mrf.mxu0
    %v3333 = vadd.f32 0.0, %v3332
    %3334 = vmatmul.f32.gmra.mxu0 %v3212
    %v3335 = vpop.f32.mrf.mxu0
    %v3336 = vadd.f32 0.0, %v3335
    %3337 = vmatmul.f32.gmra.mxu0 %v3213
    %v3338 = vpop.f32.mrf.mxu0
    %v3339 = vadd.f32 0.0, %v3338
    %3340 = vmatmul.f32.gmra.mxu0 %v3214
    %v3341 = vpop.f32.mrf.mxu0
    %v3342 = vadd.f32 0.0, %v3341
    %3343 = vmatmul.f32.gmra.mxu0 %v3215
    %v3344 = vpop.f32.mrf.mxu0
    %v3345 = vadd.f32 0.0, %v3344
    %3346 = vmatmul.f32.gmra.mxu0 %v3216
    %v3347 = vpop.f32.mrf.mxu0
    %v3348 = vadd.f32 0.0, %v3347
    %3349 = vmatmul.f32.gmra.mxu0 %v3217
    %v3350 = vpop.f32.mrf.mxu0
    %v3351 = vadd.f32 0.0, %v3350
    %3352 = vmatmul.f32.gmra.mxu0 %v3218
    %v3353 = vpop.f32.mrf.mxu0
    %v3354 = vadd.f32 0.0, %v3353
    %3355 = vmatmul.f32.gmra.mxu0 %v3219
    %v3356 = vpop.f32.mrf.mxu0
    %v3357 = vadd.f32 0.0, %v3356
    %3358 = vmatmul.f32.gmra.mxu0 %v3220
    %v3359 = vpop.f32.mrf.mxu0
    %v3360 = vadd.f32 0.0, %v3359
    %3361 = vmatmul.f32.gmra.mxu0 %v3221
    %v3362 = vpop.f32.mrf.mxu0
    %v3363 = vadd.f32 0.0, %v3362
    %3364 = vmatmul.f32.gmra.mxu0 %v3222
    %v3365 = vpop.f32.mrf.mxu0
    %v3366 = vadd.f32 0.0, %v3365
    %3367 = vdwg.mxu0
    %v3368 = vadd.f32 %v2854, %v3321
    %v3369 = vadd.f32 %v2855, %v3324
    %v3370 = vadd.f32 %v2856, %v3327
    %v3371 = vadd.f32 %v2857, %v3330
    %v3372 = vadd.f32 %v2858, %v3333
    %v3373 = vadd.f32 %v2859, %v3336
    %v3374 = vadd.f32 %v2860, %v3339
    %v3375 = vadd.f32 %v2861, %v3342
    %v3376 = vadd.f32 %v2862, %v3345
    %v3377 = vadd.f32 %v2863, %v3348
    %v3378 = vadd.f32 %v2864, %v3351
    %v3379 = vadd.f32 %v2865, %v3354
    %v3380 = vadd.f32 %v2866, %v3357
    %v3381 = vadd.f32 %v2867, %v3360
    %v3382 = vadd.f32 %v2868, %v3363
    %v3383 = vadd.f32 %v2869, %v3366
    %v3384 = vld [vmem:[#allocation3] sm:$0xff]
    %v3385 = vld [vmem:[#allocation3 + $0x8] sm:$0xff]
    %v3386 = vld [vmem:[#allocation3 + $0x10] sm:$0xff]
    %v3387 = vld [vmem:[#allocation3 + $0x18] sm:$0xff]
    %v3388 = vld [vmem:[#allocation3 + $0x20] sm:$0xff]
    %v3389 = vld [vmem:[#allocation3 + $0x28] sm:$0xff]
    %v3390 = vld [vmem:[#allocation3 + $0x30] sm:$0xff]
    %v3391 = vld [vmem:[#allocation3 + $0x38] sm:$0xff]
    %v3392 = vld [vmem:[#allocation3 + $0x40] sm:$0xff]
    %v3393 = vld [vmem:[#allocation3 + $0x48] sm:$0xff]
    %v3394 = vld [vmem:[#allocation3 + $0x50] sm:$0xff]
    %v3395 = vld [vmem:[#allocation3 + $0x58] sm:$0xff]
    %v3396 = vld [vmem:[#allocation3 + $0x60] sm:$0xff]
    %v3397 = vld [vmem:[#allocation3 + $0x68] sm:$0xff]
    %v3398 = vld [vmem:[#allocation3 + $0x70] sm:$0xff]
    %v3399 = vld [vmem:[#allocation3 + $0x78] sm:$0xff]
    %3400 = vrot.lane.b32.xlu0 %v141, 104
    %v3401 = vpop.permute.xlu0 %3400
    %3402 = vrot.lane.b32.xlu0 %v144, 104
    %v3403 = vpop.permute.xlu0 %3402
    %3404 = vrot.lane.b32.xlu0 %v147, 104
    %v3405 = vpop.permute.xlu0 %3404
    %3406 = vrot.lane.b32.xlu0 %v150, 104
    %v3407 = vpop.permute.xlu0 %3406
    %3408 = vrot.lane.b32.xlu0 %v153, 104
    %v3409 = vpop.permute.xlu0 %3408
    %3410 = vrot.lane.b32.xlu0 %v156, 104
    %v3411 = vpop.permute.xlu0 %3410
    %3412 = vrot.lane.b32.xlu0 %v159, 104
    %v3413 = vpop.permute.xlu0 %3412
    %3414 = vrot.lane.b32.xlu0 %v162, 104
    %v3415 = vpop.permute.xlu0 %3414
    %3416 = vrot.lane.b32.xlu0 %v165, 104
    %v3417 = vpop.permute.xlu0 %3416
    %3418 = vrot.lane.b32.xlu0 %v168, 104
    %v3419 = vpop.permute.xlu0 %3418
    %3420 = vrot.lane.b32.xlu0 %v171, 104
    %v3421 = vpop.permute.xlu0 %3420
    %3422 = vrot.lane.b32.xlu0 %v174, 104
    %v3423 = vpop.permute.xlu0 %3422
    %3424 = vrot.lane.b32.xlu0 %v177, 104
    %v3425 = vpop.permute.xlu0 %3424
    %3426 = vrot.lane.b32.xlu0 %v180, 104
    %v3427 = vpop.permute.xlu0 %3426
    %3428 = vrot.lane.b32.xlu0 %v183, 104
    %v3429 = vpop.permute.xlu0 %3428
    %3430 = vrot.lane.b32.xlu0 %v186, 104
    %v3431 = vpop.permute.xlu0 %3430
    %3432 = vrot.lane.b32.xlu0 %v141, 72
    %v3433 = vpop.permute.xlu0 %3432
    %3434 = vrot.lane.b32.xlu0 %v144, 72
    %v3435 = vpop.permute.xlu0 %3434
    %3436 = vrot.lane.b32.xlu0 %v147, 72
    %v3437 = vpop.permute.xlu0 %3436
    %3438 = vrot.lane.b32.xlu0 %v150, 72
    %v3439 = vpop.permute.xlu0 %3438
    %3440 = vrot.lane.b32.xlu0 %v153, 72
    %v3441 = vpop.permute.xlu0 %3440
    %3442 = vrot.lane.b32.xlu0 %v156, 72
    %v3443 = vpop.permute.xlu0 %3442
    %3444 = vrot.lane.b32.xlu0 %v159, 72
    %v3445 = vpop.permute.xlu0 %3444
    %3446 = vrot.lane.b32.xlu0 %v162, 72
    %v3447 = vpop.permute.xlu0 %3446
    %3448 = vrot.lane.b32.xlu0 %v165, 72
    %v3449 = vpop.permute.xlu0 %3448
    %3450 = vrot.lane.b32.xlu0 %v168, 72
    %v3451 = vpop.permute.xlu0 %3450
    %3452 = vrot.lane.b32.xlu0 %v171, 72
    %v3453 = vpop.permute.xlu0 %3452
    %3454 = vrot.lane.b32.xlu0 %v174, 72
    %v3455 = vpop.permute.xlu0 %3454
    %3456 = vrot.lane.b32.xlu0 %v177, 72
    %v3457 = vpop.permute.xlu0 %3456
    %3458 = vrot.lane.b32.xlu0 %v180, 72
    %v3459 = vpop.permute.xlu0 %3458
    %3460 = vrot.lane.b32.xlu0 %v183, 72
    %v3461 = vpop.permute.xlu0 %3460
    %3462 = vrot.lane.b32.xlu0 %v186, 72
    %v3463 = vpop.permute.xlu0 %3462
    %v3464 = vsel %vm539, %v3401, 0
    %v3466 = vsel %vm539, %v3403, 0
    %v3468 = vsel %vm539, %v3405, 0
    %v3470 = vsel %vm539, %v3407, 0
    %v3472 = vsel %vm539, %v3409, 0
    %v3474 = vsel %vm539, %v3411, 0
    %v3476 = vsel %vm539, %v3413, 0
    %v3478 = vsel %vm539, %v3415, 0
    %v3480 = vsel %vm539, %v3417, 0
    %v3482 = vsel %vm539, %v3419, 0
    %v3484 = vsel %vm539, %v3421, 0
    %v3486 = vsel %vm539, %v3423, 0
    %v3488 = vsel %vm539, %v3425, 0
    %v3490 = vsel %vm539, %v3427, 0
    %v3492 = vsel %vm539, %v3429, 0
    %v3494 = vsel %vm539, %v3431, 0
    %v3496 = vsel %vm539, %v3433, 0
    %v3498 = vsel %vm539, %v3435, 0
    %v3500 = vsel %vm539, %v3437, 0
    %v3502 = vsel %vm539, %v3439, 0
    %v3504 = vsel %vm539, %v3441, 0
    %v3506 = vsel %vm539, %v3443, 0
    %v3508 = vsel %vm539, %v3445, 0
    %v3510 = vsel %vm539, %v3447, 0
    %v3512 = vsel %vm539, %v3449, 0
    %v3514 = vsel %vm539, %v3451, 0
    %v3516 = vsel %vm539, %v3453, 0
    %v3518 = vsel %vm539, %v3455, 0
    %v3520 = vsel %vm539, %v3457, 0
    %v3522 = vsel %vm539, %v3459, 0
    %v3524 = vsel %vm539, %v3461, 0
    %v3526 = vsel %vm539, %v3463, 0
    %3528 = vmatpush.xpose.msra.mxu0 %v3526
    %3529 = vmatpush.xpose.msra.mxu0 %v3524
    %3530 = vmatpush.xpose.msra.mxu0 %v3522
    %3531 = vmatpush.xpose.msra.mxu0 %v3520
    %3532 = vmatpush.xpose.msra.mxu0 %v3518
    %3533 = vmatpush.xpose.msra.mxu0 %v3516
    %3534 = vmatpush.xpose.msra.mxu0 %v3514
    %3535 = vmatpush.xpose.msra.mxu0 %v3512
    %3536 = vmatpush.xpose.msra.mxu0 %v3510
    %3537 = vmatpush.xpose.msra.mxu0 %v3508
    %3538 = vmatpush.xpose.msra.mxu0 %v3506
    %3539 = vmatpush.xpose.msra.mxu0 %v3504
    %3540 = vmatpush.xpose.msra.mxu0 %v3502
    %3541 = vmatpush.xpose.msra.mxu0 %v3500
    %3542 = vmatpush.xpose.msra.mxu0 %v3498
    %3543 = vmatpush.xpose.msra.mxu0 %v3496
    %3544 = vmatmul.f32.gmra.mxu0 %v3464
    %v3545 = vpop.f32.mrf.mxu0
    %v3546 = vadd.f32 %v3384, %v3545
    %3547 = vmatmul.f32.gmra.mxu0 %v3466
    %v3548 = vpop.f32.mrf.mxu0
    %v3549 = vadd.f32 %v3385, %v3548
    %3550 = vmatmul.f32.gmra.mxu0 %v3468
    %v3551 = vpop.f32.mrf.mxu0
    %v3552 = vadd.f32 %v3386, %v3551
    %3553 = vmatmul.f32.gmra.mxu0 %v3470
    %v3554 = vpop.f32.mrf.mxu0
    %v3555 = vadd.f32 %v3387, %v3554
    %3556 = vmatmul.f32.gmra.mxu0 %v3472
    %v3557 = vpop.f32.mrf.mxu0
    %v3558 = vadd.f32 %v3388, %v3557
    %3559 = vmatmul.f32.gmra.mxu0 %v3474
    %v3560 = vpop.f32.mrf.mxu0
    %v3561 = vadd.f32 %v3389, %v3560
    %3562 = vmatmul.f32.gmra.mxu0 %v3476
    %v3563 = vpop.f32.mrf.mxu0
    %v3564 = vadd.f32 %v3390, %v3563
    %3565 = vmatmul.f32.gmra.mxu0 %v3478
    %v3566 = vpop.f32.mrf.mxu0
    %v3567 = vadd.f32 %v3391, %v3566
    %3568 = vmatmul.f32.gmra.mxu0 %v3480
    %v3569 = vpop.f32.mrf.mxu0
    %v3570 = vadd.f32 %v3392, %v3569
    %3571 = vmatmul.f32.gmra.mxu0 %v3482
    %v3572 = vpop.f32.mrf.mxu0
    %v3573 = vadd.f32 %v3393, %v3572
    %3574 = vmatmul.f32.gmra.mxu0 %v3484
    %v3575 = vpop.f32.mrf.mxu0
    %v3576 = vadd.f32 %v3394, %v3575
    %3577 = vmatmul.f32.gmra.mxu0 %v3486
    %v3578 = vpop.f32.mrf.mxu0
    %v3579 = vadd.f32 %v3395, %v3578
    %3580 = vmatmul.f32.gmra.mxu0 %v3488
    %v3581 = vpop.f32.mrf.mxu0
    %v3582 = vadd.f32 %v3396, %v3581
    %3583 = vmatmul.f32.gmra.mxu0 %v3490
    %v3584 = vpop.f32.mrf.mxu0
    %v3585 = vadd.f32 %v3397, %v3584
    %3586 = vmatmul.f32.gmra.mxu0 %v3492
    %v3587 = vpop.f32.mrf.mxu0
    %v3588 = vadd.f32 %v3398, %v3587
    %3589 = vmatmul.f32.gmra.mxu0 %v3494
    %v3590 = vpop.f32.mrf.mxu0
    %v3591 = vadd.f32 %v3399, %v3590
    %3592 = vdwg.mxu0
    %3593 = vmax.xlane.f32.xlu0 %v3546
    %v3594 = vpop.xlane.xlu0 %3593
    %3595 = vmax.xlane.f32.xlu0 %v3549
    %v3596 = vpop.xlane.xlu0 %3595
    %3597 = vmax.xlane.f32.xlu0 %v3552
    %v3598 = vpop.xlane.xlu0 %3597
    %3599 = vmax.xlane.f32.xlu0 %v3555
    %v3600 = vpop.xlane.xlu0 %3599
    %3601 = vmax.xlane.f32.xlu0 %v3558
    %v3602 = vpop.xlane.xlu0 %3601
    %3603 = vmax.xlane.f32.xlu0 %v3561
    %v3604 = vpop.xlane.xlu0 %3603
    %3605 = vmax.xlane.f32.xlu0 %v3564
    %v3606 = vpop.xlane.xlu0 %3605
    %3607 = vmax.xlane.f32.xlu0 %v3567
    %v3608 = vpop.xlane.xlu0 %3607
    %3609 = vmax.xlane.f32.xlu0 %v3570
    %v3610 = vpop.xlane.xlu0 %3609
    %3611 = vmax.xlane.f32.xlu0 %v3573
    %v3612 = vpop.xlane.xlu0 %3611
    %3613 = vmax.xlane.f32.xlu0 %v3576
    %v3614 = vpop.xlane.xlu0 %3613
    %3615 = vmax.xlane.f32.xlu0 %v3579
    %v3616 = vpop.xlane.xlu0 %3615
    %3617 = vmax.xlane.f32.xlu0 %v3582
    %v3618 = vpop.xlane.xlu0 %3617
    %3619 = vmax.xlane.f32.xlu0 %v3585
    %v3620 = vpop.xlane.xlu0 %3619
    %3621 = vmax.xlane.f32.xlu0 %v3588
    %v3622 = vpop.xlane.xlu0 %3621
    %3623 = vmax.xlane.f32.xlu0 %v3591
    %v3624 = vpop.xlane.xlu0 %3623
    %v3625 = vsub.f32 %v3546, %v3594
    %v3626 = vsub.f32 %v3549, %v3596
    %v3627 = vsub.f32 %v3552, %v3598
    %v3628 = vsub.f32 %v3555, %v3600
    %v3629 = vsub.f32 %v3558, %v3602
    %v3630 = vsub.f32 %v3561, %v3604
    %v3631 = vsub.f32 %v3564, %v3606
    %v3632 = vsub.f32 %v3567, %v3608
    %v3633 = vsub.f32 %v3570, %v3610
    %v3634 = vsub.f32 %v3573, %v3612
    %v3635 = vsub.f32 %v3576, %v3614
    %v3636 = vsub.f32 %v3579, %v3616
    %v3637 = vsub.f32 %v3582, %v3618
    %v3638 = vsub.f32 %v3585, %v3620
    %v3639 = vsub.f32 %v3588, %v3622
    %v3640 = vsub.f32 %v3591, %v3624
    %v3641 = vmul.f32 %v3625, 1.442695
    %v3642 = vpow.pop %v3641
    %v3643 = vmul.f32 %v3626, 1.442695
    %v3644 = vpow.pop %v3643
    %v3645 = vmul.f32 %v3627, 1.442695
    %v3646 = vpow.pop %v3645
    %v3647 = vmul.f32 %v3628, 1.442695
    %v3648 = vpow.pop %v3647
    %v3649 = vmul.f32 %v3629, 1.442695
    %v3650 = vpow.pop %v3649
    %v3651 = vmul.f32 %v3630, 1.442695
    %v3652 = vpow.pop %v3651
    %v3653 = vmul.f32 %v3631, 1.442695
    %v3654 = vpow.pop %v3653
    %v3655 = vmul.f32 %v3632, 1.442695
    %v3656 = vpow.pop %v3655
    %v3657 = vmul.f32 %v3633, 1.442695
    %v3658 = vpow.pop %v3657
    %v3659 = vmul.f32 %v3634, 1.442695
    %v3660 = vpow.pop %v3659
    %v3661 = vmul.f32 %v3635, 1.442695
    %v3662 = vpow.pop %v3661
    %v3663 = vmul.f32 %v3636, 1.442695
    %v3664 = vpow.pop %v3663
    %v3665 = vmul.f32 %v3637, 1.442695
    %v3666 = vpow.pop %v3665
    %v3667 = vmul.f32 %v3638, 1.442695
    %v3668 = vpow.pop %v3667
    %v3669 = vmul.f32 %v3639, 1.442695
    %v3670 = vpow.pop %v3669
    %v3671 = vmul.f32 %v3640, 1.442695
    %v3672 = vpow.pop %v3671
    %3673 = vadd.xlane.f32.xlu0 %v3642
    %v3674 = vpop.xlane.xlu0 %3673
    %3675 = vadd.xlane.f32.xlu0 %v3644
    %v3676 = vpop.xlane.xlu0 %3675
    %3677 = vadd.xlane.f32.xlu0 %v3646
    %v3678 = vpop.xlane.xlu0 %3677
    %3679 = vadd.xlane.f32.xlu0 %v3648
    %v3680 = vpop.xlane.xlu0 %3679
    %3681 = vadd.xlane.f32.xlu0 %v3650
    %v3682 = vpop.xlane.xlu0 %3681
    %3683 = vadd.xlane.f32.xlu0 %v3652
    %v3684 = vpop.xlane.xlu0 %3683
    %3685 = vadd.xlane.f32.xlu0 %v3654
    %v3686 = vpop.xlane.xlu0 %3685
    %3687 = vadd.xlane.f32.xlu0 %v3656
    %v3688 = vpop.xlane.xlu0 %3687
    %3689 = vadd.xlane.f32.xlu0 %v3658
    %v3690 = vpop.xlane.xlu0 %3689
    %3691 = vadd.xlane.f32.xlu0 %v3660
    %v3692 = vpop.xlane.xlu0 %3691
    %3693 = vadd.xlane.f32.xlu0 %v3662
    %v3694 = vpop.xlane.xlu0 %3693
    %3695 = vadd.xlane.f32.xlu0 %v3664
    %v3696 = vpop.xlane.xlu0 %3695
    %3697 = vadd.xlane.f32.xlu0 %v3666
    %v3698 = vpop.xlane.xlu0 %3697
    %3699 = vadd.xlane.f32.xlu0 %v3668
    %v3700 = vpop.xlane.xlu0 %3699
    %3701 = vadd.xlane.f32.xlu0 %v3670
    %v3702 = vpop.xlane.xlu0 %3701
    %3703 = vadd.xlane.f32.xlu0 %v3672
    %v3704 = vpop.xlane.xlu0 %3703
    %v3705 = vrcp.pop %v3674
    %v3706 = vrcp.pop %v3676
    %v3707 = vrcp.pop %v3678
    %v3708 = vrcp.pop %v3680
    %v3709 = vrcp.pop %v3682
    %v3710 = vrcp.pop %v3684
    %v3711 = vrcp.pop %v3686
    %v3712 = vrcp.pop %v3688
    %v3713 = vrcp.pop %v3690
    %v3714 = vrcp.pop %v3692
    %v3715 = vrcp.pop %v3694
    %v3716 = vrcp.pop %v3696
    %v3717 = vrcp.pop %v3698
    %v3718 = vrcp.pop %v3700
    %v3719 = vrcp.pop %v3702
    %v3720 = vrcp.pop %v3704
    %v3721 = vmul.f32 %v3642, %v3705
    %v3722 = vmul.f32 %v3644, %v3706
    %v3723 = vmul.f32 %v3646, %v3707
    %v3724 = vmul.f32 %v3648, %v3708
    %v3725 = vmul.f32 %v3650, %v3709
    %v3726 = vmul.f32 %v3652, %v3710
    %v3727 = vmul.f32 %v3654, %v3711
    %v3728 = vmul.f32 %v3656, %v3712
    %v3729 = vmul.f32 %v3658, %v3713
    %v3730 = vmul.f32 %v3660, %v3714
    %v3731 = vmul.f32 %v3662, %v3715
    %v3732 = vmul.f32 %v3664, %v3716
    %v3733 = vmul.f32 %v3666, %v3717
    %v3734 = vmul.f32 %v3668, %v3718
    %v3735 = vmul.f32 %v3670, %v3719
    %v3736 = vmul.f32 %v3672, %v3720
    %v3737 = vld [vmem:[#allocation2 + $0x8] sm:$0xff]
    %v3738 = vld [vmem:[#allocation2 + $0x18] sm:$0xff]
    %v3739 = vld [vmem:[#allocation2 + $0x28] sm:$0xff]
    %v3740 = vld [vmem:[#allocation2 + $0x38] sm:$0xff]
    %v3741 = vld [vmem:[#allocation2 + $0x48] sm:$0xff]
    %v3742 = vld [vmem:[#allocation2 + $0x58] sm:$0xff]
    %v3743 = vld [vmem:[#allocation2 + $0x68] sm:$0xff]
    %v3744 = vld [vmem:[#allocation2 + $0x78] sm:$0xff]
    %v3745 = vld [vmem:[#allocation2 + $0x88] sm:$0xff]
    %v3746 = vld [vmem:[#allocation2 + $0x98] sm:$0xff]
    %v3747 = vld [vmem:[#allocation2 + $0xa8] sm:$0xff]
    %v3748 = vld [vmem:[#allocation2 + $0xb8] sm:$0xff]
    %v3749 = vld [vmem:[#allocation2 + $0xc8] sm:$0xff]
    %v3750 = vld [vmem:[#allocation2 + $0xd8] sm:$0xff]
    %v3751 = vld [vmem:[#allocation2 + $0xe8] sm:$0xff]
    %v3752 = vld [vmem:[#allocation2 + $0xf8] sm:$0xff]
    %3769 = vrot.lane.b32.xlu0 %v3737, 64
    %v3770 = vpop.permute.xlu0 %3769
    %3771 = vrot.lane.b32.xlu0 %v3738, 64
    %v3772 = vpop.permute.xlu0 %3771
    %3773 = vrot.lane.b32.xlu0 %v3739, 64
    %v3774 = vpop.permute.xlu0 %3773
    %3775 = vrot.lane.b32.xlu0 %v3740, 64
    %v3776 = vpop.permute.xlu0 %3775
    %3777 = vrot.lane.b32.xlu0 %v3741, 64
    %v3778 = vpop.permute.xlu0 %3777
    %3779 = vrot.lane.b32.xlu0 %v3742, 64
    %v3780 = vpop.permute.xlu0 %3779
    %3781 = vrot.lane.b32.xlu0 %v3743, 64
    %v3782 = vpop.permute.xlu0 %3781
    %3783 = vrot.lane.b32.xlu0 %v3744, 64
    %v3784 = vpop.permute.xlu0 %3783
    %3785 = vrot.lane.b32.xlu0 %v3745, 64
    %v3786 = vpop.permute.xlu0 %3785
    %3787 = vrot.lane.b32.xlu0 %v3746, 64
    %v3788 = vpop.permute.xlu0 %3787
    %3789 = vrot.lane.b32.xlu0 %v3747, 64
    %v3790 = vpop.permute.xlu0 %3789
    %3791 = vrot.lane.b32.xlu0 %v3748, 64
    %v3792 = vpop.permute.xlu0 %3791
    %3793 = vrot.lane.b32.xlu0 %v3749, 64
    %v3794 = vpop.permute.xlu0 %3793
    %3795 = vrot.lane.b32.xlu0 %v3750, 64
    %v3796 = vpop.permute.xlu0 %3795
    %3797 = vrot.lane.b32.xlu0 %v3751, 64
    %v3798 = vpop.permute.xlu0 %3797
    %3799 = vrot.lane.b32.xlu0 %v3752, 64
    %v3800 = vpop.permute.xlu0 %3799
    %3817 = vmatpush.msra.mxu0 %v3800
    %3818 = vmatpush.msra.mxu0 %v3798
    %3819 = vmatpush.msra.mxu0 %v3796
    %3820 = vmatpush.msra.mxu0 %v3794
    %3821 = vmatpush.msra.mxu0 %v3792
    %3822 = vmatpush.msra.mxu0 %v3790
    %3823 = vmatpush.msra.mxu0 %v3788
    %3824 = vmatpush.msra.mxu0 %v3786
    %3825 = vmatpush.msra.mxu0 %v3784
    %3826 = vmatpush.msra.mxu0 %v3782
    %3827 = vmatpush.msra.mxu0 %v3780
    %3828 = vmatpush.msra.mxu0 %v3778
    %3829 = vmatpush.msra.mxu0 %v3776
    %3830 = vmatpush.msra.mxu0 %v3774
    %3831 = vmatpush.msra.mxu0 %v3772
    %3832 = vmatpush.msra.mxu0 %v3770
    %3833 = vmatmul.f32.gmra.mxu0 %v3721
    %v3834 = vpop.f32.mrf.mxu0
    %v3835 = vadd.f32 0.0, %v3834
    %3836 = vmatmul.f32.gmra.mxu0 %v3722
    %v3837 = vpop.f32.mrf.mxu0
    %v3838 = vadd.f32 0.0, %v3837
    %3839 = vmatmul.f32.gmra.mxu0 %v3723
    %v3840 = vpop.f32.mrf.mxu0
    %v3841 = vadd.f32 0.0, %v3840
    %3842 = vmatmul.f32.gmra.mxu0 %v3724
    %v3843 = vpop.f32.mrf.mxu0
    %v3844 = vadd.f32 0.0, %v3843
    %3845 = vmatmul.f32.gmra.mxu0 %v3725
    %v3846 = vpop.f32.mrf.mxu0
    %v3847 = vadd.f32 0.0, %v3846
    %3848 = vmatmul.f32.gmra.mxu0 %v3726
    %v3849 = vpop.f32.mrf.mxu0
    %v3850 = vadd.f32 0.0, %v3849
    %3851 = vmatmul.f32.gmra.mxu0 %v3727
    %v3852 = vpop.f32.mrf.mxu0
    %v3853 = vadd.f32 0.0, %v3852
    %3854 = vmatmul.f32.gmra.mxu0 %v3728
    %v3855 = vpop.f32.mrf.mxu0
    %v3856 = vadd.f32 0.0, %v3855
    %3857 = vmatmul.f32.gmra.mxu0 %v3729
    %v3858 = vpop.f32.mrf.mxu0
    %v3859 = vadd.f32 0.0, %v3858
    %3860 = vmatmul.f32.gmra.mxu0 %v3730
    %v3861 = vpop.f32.mrf.mxu0
    %v3862 = vadd.f32 0.0, %v3861
    %3863 = vmatmul.f32.gmra.mxu0 %v3731
    %v3864 = vpop.f32.mrf.mxu0
    %v3865 = vadd.f32 0.0, %v3864
    %3866 = vmatmul.f32.gmra.mxu0 %v3732
    %v3867 = vpop.f32.mrf.mxu0
    %v3868 = vadd.f32 0.0, %v3867
    %3869 = vmatmul.f32.gmra.mxu0 %v3733
    %v3870 = vpop.f32.mrf.mxu0
    %v3871 = vadd.f32 0.0, %v3870
    %3872 = vmatmul.f32.gmra.mxu0 %v3734
    %v3873 = vpop.f32.mrf.mxu0
    %v3874 = vadd.f32 0.0, %v3873
    %3875 = vmatmul.f32.gmra.mxu0 %v3735
    %v3876 = vpop.f32.mrf.mxu0
    %v3877 = vadd.f32 0.0, %v3876
    %3878 = vmatmul.f32.gmra.mxu0 %v3736
    %v3879 = vpop.f32.mrf.mxu0
    %v3880 = vadd.f32 0.0, %v3879
    %3881 = vdwg.mxu0
    %v3882 = vadd.f32 %v3368, %v3835
    %v3883 = vadd.f32 %v3369, %v3838
    %v3884 = vadd.f32 %v3370, %v3841
    %v3885 = vadd.f32 %v3371, %v3844
    %v3886 = vadd.f32 %v3372, %v3847
    %v3887 = vadd.f32 %v3373, %v3850
    %v3888 = vadd.f32 %v3374, %v3853
    %v3889 = vadd.f32 %v3375, %v3856
    %v3890 = vadd.f32 %v3376, %v3859
    %v3891 = vadd.f32 %v3377, %v3862
    %v3892 = vadd.f32 %v3378, %v3865
    %v3893 = vadd.f32 %v3379, %v3868
    %v3894 = vadd.f32 %v3380, %v3871
    %v3895 = vadd.f32 %v3381, %v3874
    %v3896 = vadd.f32 %v3382, %v3877
    %v3897 = vadd.f32 %v3383, %v3880
    %v3898 = vld [vmem:[#allocation3] sm:$0xff]
    %v3899 = vld [vmem:[#allocation3 + $0x8] sm:$0xff]
    %v3900 = vld [vmem:[#allocation3 + $0x10] sm:$0xff]
    %v3901 = vld [vmem:[#allocation3 + $0x18] sm:$0xff]
    %v3902 = vld [vmem:[#allocation3 + $0x20] sm:$0xff]
    %v3903 = vld [vmem:[#allocation3 + $0x28] sm:$0xff]
    %v3904 = vld [vmem:[#allocation3 + $0x30] sm:$0xff]
    %v3905 = vld [vmem:[#allocation3 + $0x38] sm:$0xff]
    %v3906 = vld [vmem:[#allocation3 + $0x40] sm:$0xff]
    %v3907 = vld [vmem:[#allocation3 + $0x48] sm:$0xff]
    %v3908 = vld [vmem:[#allocation3 + $0x50] sm:$0xff]
    %v3909 = vld [vmem:[#allocation3 + $0x58] sm:$0xff]
    %v3910 = vld [vmem:[#allocation3 + $0x60] sm:$0xff]
    %v3911 = vld [vmem:[#allocation3 + $0x68] sm:$0xff]
    %v3912 = vld [vmem:[#allocation3 + $0x70] sm:$0xff]
    %v3913 = vld [vmem:[#allocation3 + $0x78] sm:$0xff]
    %3914 = vrot.lane.b32.xlu0 %v141, 100
    %v3915 = vpop.permute.xlu0 %3914
    %3916 = vrot.lane.b32.xlu0 %v144, 100
    %v3917 = vpop.permute.xlu0 %3916
    %3918 = vrot.lane.b32.xlu0 %v147, 100
    %v3919 = vpop.permute.xlu0 %3918
    %3920 = vrot.lane.b32.xlu0 %v150, 100
    %v3921 = vpop.permute.xlu0 %3920
    %3922 = vrot.lane.b32.xlu0 %v153, 100
    %v3923 = vpop.permute.xlu0 %3922
    %3924 = vrot.lane.b32.xlu0 %v156, 100
    %v3925 = vpop.permute.xlu0 %3924
    %3926 = vrot.lane.b32.xlu0 %v159, 100
    %v3927 = vpop.permute.xlu0 %3926
    %3928 = vrot.lane.b32.xlu0 %v162, 100
    %v3929 = vpop.permute.xlu0 %3928
    %3930 = vrot.lane.b32.xlu0 %v165, 100
    %v3931 = vpop.permute.xlu0 %3930
    %3932 = vrot.lane.b32.xlu0 %v168, 100
    %v3933 = vpop.permute.xlu0 %3932
    %3934 = vrot.lane.b32.xlu0 %v171, 100
    %v3935 = vpop.permute.xlu0 %3934
    %3936 = vrot.lane.b32.xlu0 %v174, 100
    %v3937 = vpop.permute.xlu0 %3936
    %3938 = vrot.lane.b32.xlu0 %v177, 100
    %v3939 = vpop.permute.xlu0 %3938
    %3940 = vrot.lane.b32.xlu0 %v180, 100
    %v3941 = vpop.permute.xlu0 %3940
    %3942 = vrot.lane.b32.xlu0 %v183, 100
    %v3943 = vpop.permute.xlu0 %3942
    %3944 = vrot.lane.b32.xlu0 %v186, 100
    %v3945 = vpop.permute.xlu0 %3944
    %3946 = vrot.lane.b32.xlu0 %v141, 68
    %v3947 = vpop.permute.xlu0 %3946
    %3948 = vrot.lane.b32.xlu0 %v144, 68
    %v3949 = vpop.permute.xlu0 %3948
    %3950 = vrot.lane.b32.xlu0 %v147, 68
    %v3951 = vpop.permute.xlu0 %3950
    %3952 = vrot.lane.b32.xlu0 %v150, 68
    %v3953 = vpop.permute.xlu0 %3952
    %3954 = vrot.lane.b32.xlu0 %v153, 68
    %v3955 = vpop.permute.xlu0 %3954
    %3956 = vrot.lane.b32.xlu0 %v156, 68
    %v3957 = vpop.permute.xlu0 %3956
    %3958 = vrot.lane.b32.xlu0 %v159, 68
    %v3959 = vpop.permute.xlu0 %3958
    %3960 = vrot.lane.b32.xlu0 %v162, 68
    %v3961 = vpop.permute.xlu0 %3960
    %3962 = vrot.lane.b32.xlu0 %v165, 68
    %v3963 = vpop.permute.xlu0 %3962
    %3964 = vrot.lane.b32.xlu0 %v168, 68
    %v3965 = vpop.permute.xlu0 %3964
    %3966 = vrot.lane.b32.xlu0 %v171, 68
    %v3967 = vpop.permute.xlu0 %3966
    %3968 = vrot.lane.b32.xlu0 %v174, 68
    %v3969 = vpop.permute.xlu0 %3968
    %3970 = vrot.lane.b32.xlu0 %v177, 68
    %v3971 = vpop.permute.xlu0 %3970
    %3972 = vrot.lane.b32.xlu0 %v180, 68
    %v3973 = vpop.permute.xlu0 %3972
    %3974 = vrot.lane.b32.xlu0 %v183, 68
    %v3975 = vpop.permute.xlu0 %3974
    %3976 = vrot.lane.b32.xlu0 %v186, 68
    %v3977 = vpop.permute.xlu0 %3976
    %v3978 = vsel %vm539, %v3915, 0
    %v3980 = vsel %vm539, %v3917, 0
    %v3982 = vsel %vm539, %v3919, 0
    %v3984 = vsel %vm539, %v3921, 0
    %v3986 = vsel %vm539, %v3923, 0
    %v3988 = vsel %vm539, %v3925, 0
    %v3990 = vsel %vm539, %v3927, 0
    %v3992 = vsel %vm539, %v3929, 0
    %v3994 = vsel %vm539, %v3931, 0
    %v3996 = vsel %vm539, %v3933, 0
    %v3998 = vsel %vm539, %v3935, 0
    %v4000 = vsel %vm539, %v3937, 0
    %v4002 = vsel %vm539, %v3939, 0
    %v4004 = vsel %vm539, %v3941, 0
    %v4006 = vsel %vm539, %v3943, 0
    %v4008 = vsel %vm539, %v3945, 0
    %v4010 = vsel %vm539, %v3947, 0
    %v4012 = vsel %vm539, %v3949, 0
    %v4014 = vsel %vm539, %v3951, 0
    %v4016 = vsel %vm539, %v3953, 0
    %v4018 = vsel %vm539, %v3955, 0
    %v4020 = vsel %vm539, %v3957, 0
    %v4022 = vsel %vm539, %v3959, 0
    %v4024 = vsel %vm539, %v3961, 0
    %v4026 = vsel %vm539, %v3963, 0
    %v4028 = vsel %vm539, %v3965, 0
    %v4030 = vsel %vm539, %v3967, 0
    %v4032 = vsel %vm539, %v3969, 0
    %v4034 = vsel %vm539, %v3971, 0
    %v4036 = vsel %vm539, %v3973, 0
    %v4038 = vsel %vm539, %v3975, 0
    %v4040 = vsel %vm539, %v3977, 0
    %4042 = vmatpush.xpose.msra.mxu0 %v4040
    %4043 = vmatpush.xpose.msra.mxu0 %v4038
    %4044 = vmatpush.xpose.msra.mxu0 %v4036
    %4045 = vmatpush.xpose.msra.mxu0 %v4034
    %4046 = vmatpush.xpose.msra.mxu0 %v4032
    %4047 = vmatpush.xpose.msra.mxu0 %v4030
    %4048 = vmatpush.xpose.msra.mxu0 %v4028
    %4049 = vmatpush.xpose.msra.mxu0 %v4026
    %4050 = vmatpush.xpose.msra.mxu0 %v4024
    %4051 = vmatpush.xpose.msra.mxu0 %v4022
    %4052 = vmatpush.xpose.msra.mxu0 %v4020
    %4053 = vmatpush.xpose.msra.mxu0 %v4018
    %4054 = vmatpush.xpose.msra.mxu0 %v4016
    %4055 = vmatpush.xpose.msra.mxu0 %v4014
    %4056 = vmatpush.xpose.msra.mxu0 %v4012
    %4057 = vmatpush.xpose.msra.mxu0 %v4010
    %4058 = vmatmul.f32.gmra.mxu0 %v3978
    %v4059 = vpop.f32.mrf.mxu0
    %v4060 = vadd.f32 %v3898, %v4059
    %4061 = vmatmul.f32.gmra.mxu0 %v3980
    %v4062 = vpop.f32.mrf.mxu0
    %v4063 = vadd.f32 %v3899, %v4062
    %4064 = vmatmul.f32.gmra.mxu0 %v3982
    %v4065 = vpop.f32.mrf.mxu0
    %v4066 = vadd.f32 %v3900, %v4065
    %4067 = vmatmul.f32.gmra.mxu0 %v3984
    %v4068 = vpop.f32.mrf.mxu0
    %v4069 = vadd.f32 %v3901, %v4068
    %4070 = vmatmul.f32.gmra.mxu0 %v3986
    %v4071 = vpop.f32.mrf.mxu0
    %v4072 = vadd.f32 %v3902, %v4071
    %4073 = vmatmul.f32.gmra.mxu0 %v3988
    %v4074 = vpop.f32.mrf.mxu0
    %v4075 = vadd.f32 %v3903, %v4074
    %4076 = vmatmul.f32.gmra.mxu0 %v3990
    %v4077 = vpop.f32.mrf.mxu0
    %v4078 = vadd.f32 %v3904, %v4077
    %4079 = vmatmul.f32.gmra.mxu0 %v3992
    %v4080 = vpop.f32.mrf.mxu0
    %v4081 = vadd.f32 %v3905, %v4080
    %4082 = vmatmul.f32.gmra.mxu0 %v3994
    %v4083 = vpop.f32.mrf.mxu0
    %v4084 = vadd.f32 %v3906, %v4083
    %4085 = vmatmul.f32.gmra.mxu0 %v3996
    %v4086 = vpop.f32.mrf.mxu0
    %v4087 = vadd.f32 %v3907, %v4086
    %4088 = vmatmul.f32.gmra.mxu0 %v3998
    %v4089 = vpop.f32.mrf.mxu0
    %v4090 = vadd.f32 %v3908, %v4089
    %4091 = vmatmul.f32.gmra.mxu0 %v4000
    %v4092 = vpop.f32.mrf.mxu0
    %v4093 = vadd.f32 %v3909, %v4092
    %4094 = vmatmul.f32.gmra.mxu0 %v4002
    %v4095 = vpop.f32.mrf.mxu0
    %v4096 = vadd.f32 %v3910, %v4095
    %4097 = vmatmul.f32.gmra.mxu0 %v4004
    %v4098 = vpop.f32.mrf.mxu0
    %v4099 = vadd.f32 %v3911, %v4098
    %4100 = vmatmul.f32.gmra.mxu0 %v4006
    %v4101 = vpop.f32.mrf.mxu0
    %v4102 = vadd.f32 %v3912, %v4101
    %4103 = vmatmul.f32.gmra.mxu0 %v4008
    %v4104 = vpop.f32.mrf.mxu0
    %v4105 = vadd.f32 %v3913, %v4104
    %4106 = vdwg.mxu0
    %4107 = vmax.xlane.f32.xlu0 %v4060
    %v4108 = vpop.xlane.xlu0 %4107
    %4109 = vmax.xlane.f32.xlu0 %v4063
    %v4110 = vpop.xlane.xlu0 %4109
    %4111 = vmax.xlane.f32.xlu0 %v4066
    %v4112 = vpop.xlane.xlu0 %4111
    %4113 = vmax.xlane.f32.xlu0 %v4069
    %v4114 = vpop.xlane.xlu0 %4113
    %4115 = vmax.xlane.f32.xlu0 %v4072
    %v4116 = vpop.xlane.xlu0 %4115
    %4117 = vmax.xlane.f32.xlu0 %v4075
    %v4118 = vpop.xlane.xlu0 %4117
    %4119 = vmax.xlane.f32.xlu0 %v4078
    %v4120 = vpop.xlane.xlu0 %4119
    %4121 = vmax.xlane.f32.xlu0 %v4081
    %v4122 = vpop.xlane.xlu0 %4121
    %4123 = vmax.xlane.f32.xlu0 %v4084
    %v4124 = vpop.xlane.xlu0 %4123
    %4125 = vmax.xlane.f32.xlu0 %v4087
    %v4126 = vpop.xlane.xlu0 %4125
    %4127 = vmax.xlane.f32.xlu0 %v4090
    %v4128 = vpop.xlane.xlu0 %4127
    %4129 = vmax.xlane.f32.xlu0 %v4093
    %v4130 = vpop.xlane.xlu0 %4129
    %4131 = vmax.xlane.f32.xlu0 %v4096
    %v4132 = vpop.xlane.xlu0 %4131
    %4133 = vmax.xlane.f32.xlu0 %v4099
    %v4134 = vpop.xlane.xlu0 %4133
    %4135 = vmax.xlane.f32.xlu0 %v4102
    %v4136 = vpop.xlane.xlu0 %4135
    %4137 = vmax.xlane.f32.xlu0 %v4105
    %v4138 = vpop.xlane.xlu0 %4137
    %v4139 = vsub.f32 %v4060, %v4108
    %v4140 = vsub.f32 %v4063, %v4110
    %v4141 = vsub.f32 %v4066, %v4112
    %v4142 = vsub.f32 %v4069, %v4114
    %v4143 = vsub.f32 %v4072, %v4116
    %v4144 = vsub.f32 %v4075, %v4118
    %v4145 = vsub.f32 %v4078, %v4120
    %v4146 = vsub.f32 %v4081, %v4122
    %v4147 = vsub.f32 %v4084, %v4124
    %v4148 = vsub.f32 %v4087, %v4126
    %v4149 = vsub.f32 %v4090, %v4128
    %v4150 = vsub.f32 %v4093, %v4130
    %v4151 = vsub.f32 %v4096, %v4132
    %v4152 = vsub.f32 %v4099, %v4134
    %v4153 = vsub.f32 %v4102, %v4136
    %v4154 = vsub.f32 %v4105, %v4138
    %v4155 = vmul.f32 %v4139, 1.442695
    %v4156 = vpow.pop %v4155
    %v4157 = vmul.f32 %v4140, 1.442695
    %v4158 = vpow.pop %v4157
    %v4159 = vmul.f32 %v4141, 1.442695
    %v4160 = vpow.pop %v4159
    %v4161 = vmul.f32 %v4142, 1.442695
    %v4162 = vpow.pop %v4161
    %v4163 = vmul.f32 %v4143, 1.442695
    %v4164 = vpow.pop %v4163
    %v4165 = vmul.f32 %v4144, 1.442695
    %v4166 = vpow.pop %v4165
    %v4167 = vmul.f32 %v4145, 1.442695
    %v4168 = vpow.pop %v4167
    %v4169 = vmul.f32 %v4146, 1.442695
    %v4170 = vpow.pop %v4169
    %v4171 = vmul.f32 %v4147, 1.442695
    %v4172 = vpow.pop %v4171
    %v4173 = vmul.f32 %v4148, 1.442695
    %v4174 = vpow.pop %v4173
    %v4175 = vmul.f32 %v4149, 1.442695
    %v4176 = vpow.pop %v4175
    %v4177 = vmul.f32 %v4150, 1.442695
    %v4178 = vpow.pop %v4177
    %v4179 = vmul.f32 %v4151, 1.442695
    %v4180 = vpow.pop %v4179
    %v4181 = vmul.f32 %v4152, 1.442695
    %v4182 = vpow.pop %v4181
    %v4183 = vmul.f32 %v4153, 1.442695
    %v4184 = vpow.pop %v4183
    %v4185 = vmul.f32 %v4154, 1.442695
    %v4186 = vpow.pop %v4185
    %4187 = vadd.xlane.f32.xlu0 %v4156
    %v4188 = vpop.xlane.xlu0 %4187
    %4189 = vadd.xlane.f32.xlu0 %v4158
    %v4190 = vpop.xlane.xlu0 %4189
    %4191 = vadd.xlane.f32.xlu0 %v4160
    %v4192 = vpop.xlane.xlu0 %4191
    %4193 = vadd.xlane.f32.xlu0 %v4162
    %v4194 = vpop.xlane.xlu0 %4193
    %4195 = vadd.xlane.f32.xlu0 %v4164
    %v4196 = vpop.xlane.xlu0 %4195
    %4197 = vadd.xlane.f32.xlu0 %v4166
    %v4198 = vpop.xlane.xlu0 %4197
    %4199 = vadd.xlane.f32.xlu0 %v4168
    %v4200 = vpop.xlane.xlu0 %4199
    %4201 = vadd.xlane.f32.xlu0 %v4170
    %v4202 = vpop.xlane.xlu0 %4201
    %4203 = vadd.xlane.f32.xlu0 %v4172
    %v4204 = vpop.xlane.xlu0 %4203
    %4205 = vadd.xlane.f32.xlu0 %v4174
    %v4206 = vpop.xlane.xlu0 %4205
    %4207 = vadd.xlane.f32.xlu0 %v4176
    %v4208 = vpop.xlane.xlu0 %4207
    %4209 = vadd.xlane.f32.xlu0 %v4178
    %v4210 = vpop.xlane.xlu0 %4209
    %4211 = vadd.xlane.f32.xlu0 %v4180
    %v4212 = vpop.xlane.xlu0 %4211
    %4213 = vadd.xlane.f32.xlu0 %v4182
    %v4214 = vpop.xlane.xlu0 %4213
    %4215 = vadd.xlane.f32.xlu0 %v4184
    %v4216 = vpop.xlane.xlu0 %4215
    %4217 = vadd.xlane.f32.xlu0 %v4186
    %v4218 = vpop.xlane.xlu0 %4217
    %v4219 = vrcp.pop %v4188
    %v4220 = vrcp.pop %v4190
    %v4221 = vrcp.pop %v4192
    %v4222 = vrcp.pop %v4194
    %v4223 = vrcp.pop %v4196
    %v4224 = vrcp.pop %v4198
    %v4225 = vrcp.pop %v4200
    %v4226 = vrcp.pop %v4202
    %v4227 = vrcp.pop %v4204
    %v4228 = vrcp.pop %v4206
    %v4229 = vrcp.pop %v4208
    %v4230 = vrcp.pop %v4210
    %v4231 = vrcp.pop %v4212
    %v4232 = vrcp.pop %v4214
    %v4233 = vrcp.pop %v4216
    %v4234 = vrcp.pop %v4218
    %v4235 = vmul.f32 %v4156, %v4219
    %v4236 = vmul.f32 %v4158, %v4220
    %v4237 = vmul.f32 %v4160, %v4221
    %v4238 = vmul.f32 %v4162, %v4222
    %v4239 = vmul.f32 %v4164, %v4223
    %v4240 = vmul.f32 %v4166, %v4224
    %v4241 = vmul.f32 %v4168, %v4225
    %v4242 = vmul.f32 %v4170, %v4226
    %v4243 = vmul.f32 %v4172, %v4227
    %v4244 = vmul.f32 %v4174, %v4228
    %v4245 = vmul.f32 %v4176, %v4229
    %v4246 = vmul.f32 %v4178, %v4230
    %v4247 = vmul.f32 %v4180, %v4231
    %v4248 = vmul.f32 %v4182, %v4232
    %v4249 = vmul.f32 %v4184, %v4233
    %v4250 = vmul.f32 %v4186, %v4234
    %v4251 = vld [vmem:[#allocation2 + $0x8] sm:$0xff]
    %v4252 = vld [vmem:[#allocation2 + $0x18] sm:$0xff]
    %v4253 = vld [vmem:[#allocation2 + $0x28] sm:$0xff]
    %v4254 = vld [vmem:[#allocation2 + $0x38] sm:$0xff]
    %v4255 = vld [vmem:[#allocation2 + $0x48] sm:$0xff]
    %v4256 = vld [vmem:[#allocation2 + $0x58] sm:$0xff]
    %v4257 = vld [vmem:[#allocation2 + $0x68] sm:$0xff]
    %v4258 = vld [vmem:[#allocation2 + $0x78] sm:$0xff]
    %v4259 = vld [vmem:[#allocation2 + $0x88] sm:$0xff]
    %v4260 = vld [vmem:[#allocation2 + $0x98] sm:$0xff]
    %v4261 = vld [vmem:[#allocation2 + $0xa8] sm:$0xff]
    %v4262 = vld [vmem:[#allocation2 + $0xb8] sm:$0xff]
    %v4263 = vld [vmem:[#allocation2 + $0xc8] sm:$0xff]
    %v4264 = vld [vmem:[#allocation2 + $0xd8] sm:$0xff]
    %v4265 = vld [vmem:[#allocation2 + $0xe8] sm:$0xff]
    %v4266 = vld [vmem:[#allocation2 + $0xf8] sm:$0xff]
    %4283 = vrot.lane.b32.xlu0 %v4251, 32
    %v4284 = vpop.permute.xlu0 %4283
    %4285 = vrot.lane.b32.xlu0 %v4252, 32
    %v4286 = vpop.permute.xlu0 %4285
    %4287 = vrot.lane.b32.xlu0 %v4253, 32
    %v4288 = vpop.permute.xlu0 %4287
    %4289 = vrot.lane.b32.xlu0 %v4254, 32
    %v4290 = vpop.permute.xlu0 %4289
    %4291 = vrot.lane.b32.xlu0 %v4255, 32
    %v4292 = vpop.permute.xlu0 %4291
    %4293 = vrot.lane.b32.xlu0 %v4256, 32
    %v4294 = vpop.permute.xlu0 %4293
    %4295 = vrot.lane.b32.xlu0 %v4257, 32
    %v4296 = vpop.permute.xlu0 %4295
    %4297 = vrot.lane.b32.xlu0 %v4258, 32
    %v4298 = vpop.permute.xlu0 %4297
    %4299 = vrot.lane.b32.xlu0 %v4259, 32
    %v4300 = vpop.permute.xlu0 %4299
    %4301 = vrot.lane.b32.xlu0 %v4260, 32
    %v4302 = vpop.permute.xlu0 %4301
    %4303 = vrot.lane.b32.xlu0 %v4261, 32
    %v4304 = vpop.permute.xlu0 %4303
    %4305 = vrot.lane.b32.xlu0 %v4262, 32
    %v4306 = vpop.permute.xlu0 %4305
    %4307 = vrot.lane.b32.xlu0 %v4263, 32
    %v4308 = vpop.permute.xlu0 %4307
    %4309 = vrot.lane.b32.xlu0 %v4264, 32
    %v4310 = vpop.permute.xlu0 %4309
    %4311 = vrot.lane.b32.xlu0 %v4265, 32
    %v4312 = vpop.permute.xlu0 %4311
    %4313 = vrot.lane.b32.xlu0 %v4266, 32
    %v4314 = vpop.permute.xlu0 %4313
    %4331 = vmatpush.msra.mxu0 %v4314
    %4332 = vmatpush.msra.mxu0 %v4312
    %4333 = vmatpush.msra.mxu0 %v4310
    %4334 = vmatpush.msra.mxu0 %v4308
    %4335 = vmatpush.msra.mxu0 %v4306
    %4336 = vmatpush.msra.mxu0 %v4304
    %4337 = vmatpush.msra.mxu0 %v4302
    %4338 = vmatpush.msra.mxu0 %v4300
    %4339 = vmatpush.msra.mxu0 %v4298
    %4340 = vmatpush.msra.mxu0 %v4296
    %4341 = vmatpush.msra.mxu0 %v4294
    %4342 = vmatpush.msra.mxu0 %v4292
    %4343 = vmatpush.msra.mxu0 %v4290
    %4344 = vmatpush.msra.mxu0 %v4288
    %4345 = vmatpush.msra.mxu0 %v4286
    %4346 = vmatpush.msra.mxu0 %v4284
    %4347 = vmatmul.f32.gmra.mxu0 %v4235
    %v4348 = vpop.f32.mrf.mxu0
    %v4349 = vadd.f32 0.0, %v4348
    %4350 = vmatmul.f32.gmra.mxu0 %v4236
    %v4351 = vpop.f32.mrf.mxu0
    %v4352 = vadd.f32 0.0, %v4351
    %4353 = vmatmul.f32.gmra.mxu0 %v4237
    %v4354 = vpop.f32.mrf.mxu0
    %v4355 = vadd.f32 0.0, %v4354
    %4356 = vmatmul.f32.gmra.mxu0 %v4238
    %v4357 = vpop.f32.mrf.mxu0
    %v4358 = vadd.f32 0.0, %v4357
    %4359 = vmatmul.f32.gmra.mxu0 %v4239
    %v4360 = vpop.f32.mrf.mxu0
    %v4361 = vadd.f32 0.0, %v4360
    %4362 = vmatmul.f32.gmra.mxu0 %v4240
    %v4363 = vpop.f32.mrf.mxu0
    %v4364 = vadd.f32 0.0, %v4363
    %4365 = vmatmul.f32.gmra.mxu0 %v4241
    %v4366 = vpop.f32.mrf.mxu0
    %v4367 = vadd.f32 0.0, %v4366
    %4368 = vmatmul.f32.gmra.mxu0 %v4242
    %v4369 = vpop.f32.mrf.mxu0
    %v4370 = vadd.f32 0.0, %v4369
    %4371 = vmatmul.f32.gmra.mxu0 %v4243
    %v4372 = vpop.f32.mrf.mxu0
    %v4373 = vadd.f32 0.0, %v4372
    %4374 = vmatmul.f32.gmra.mxu0 %v4244
    %v4375 = vpop.f32.mrf.mxu0
    %v4376 = vadd.f32 0.0, %v4375
    %4377 = vmatmul.f32.gmra.mxu0 %v4245
    %v4378 = vpop.f32.mrf.mxu0
    %v4379 = vadd.f32 0.0, %v4378
    %4380 = vmatmul.f32.gmra.mxu0 %v4246
    %v4381 = vpop.f32.mrf.mxu0
    %v4382 = vadd.f32 0.0, %v4381
    %4383 = vmatmul.f32.gmra.mxu0 %v4247
    %v4384 = vpop.f32.mrf.mxu0
    %v4385 = vadd.f32 0.0, %v4384
    %4386 = vmatmul.f32.gmra.mxu0 %v4248
    %v4387 = vpop.f32.mrf.mxu0
    %v4388 = vadd.f32 0.0, %v4387
    %4389 = vmatmul.f32.gmra.mxu0 %v4249
    %v4390 = vpop.f32.mrf.mxu0
    %v4391 = vadd.f32 0.0, %v4390
    %4392 = vmatmul.f32.gmra.mxu0 %v4250
    %v4393 = vpop.f32.mrf.mxu0
    %v4394 = vadd.f32 0.0, %v4393
    %4395 = vdwg.mxu0
    %v4396 = vadd.f32 %v3882, %v4349
    %v4397 = vadd.f32 %v3883, %v4352
    %v4398 = vadd.f32 %v3884, %v4355
    %v4399 = vadd.f32 %v3885, %v4358
    %v4400 = vadd.f32 %v3886, %v4361
    %v4401 = vadd.f32 %v3887, %v4364
    %v4402 = vadd.f32 %v3888, %v4367
    %v4403 = vadd.f32 %v3889, %v4370
    %v4404 = vadd.f32 %v3890, %v4373
    %v4405 = vadd.f32 %v3891, %v4376
    %v4406 = vadd.f32 %v3892, %v4379
    %v4407 = vadd.f32 %v3893, %v4382
    %v4408 = vadd.f32 %v3894, %v4385
    %v4409 = vadd.f32 %v3895, %v4388
    %v4410 = vadd.f32 %v3896, %v4391
    %v4411 = vadd.f32 %v3897, %v4394
    %v4412 = vld [vmem:[%s6] sm:$0x1]
    %v4414 = vperm.slane %v4412, 0
    %v4416 = vadd.f32 %v4396, %v4414
    %v4417 = vadd.f32 %v4397, %v4414
    %v4418 = vadd.f32 %v4398, %v4414
    %v4419 = vadd.f32 %v4399, %v4414
    %v4420 = vadd.f32 %v4400, %v4414
    %v4421 = vadd.f32 %v4401, %v4414
    %v4422 = vadd.f32 %v4402, %v4414
    %v4423 = vadd.f32 %v4403, %v4414
    %v4424 = vadd.f32 %v4404, %v4414
    %v4425 = vadd.f32 %v4405, %v4414
    %v4426 = vadd.f32 %v4406, %v4414
    %v4427 = vadd.f32 %v4407, %v4414
    %v4428 = vadd.f32 %v4408, %v4414
    %v4429 = vadd.f32 %v4409, %v4414
    %v4430 = vadd.f32 %v4410, %v4414
    %v4431 = vadd.f32 %v4411, %v4414
    %4432 = vst.msk [vmem:[%s7] sm:$0xff] %vm244, %v4416
    %4433 = vst.msk [vmem:[%s7 + $0x8] sm:$0xff] %vm244, %v4417
    %4434 = vst.msk [vmem:[%s7 + $0x10] sm:$0xff] %vm244, %v4418
    %4435 = vst.msk [vmem:[%s7 + $0x18] sm:$0xff] %vm244, %v4419
    %4436 = vst.msk [vmem:[%s7 + $0x20] sm:$0xff] %vm244, %v4420
    %4437 = vst.msk [vmem:[%s7 + $0x28] sm:$0xff] %vm244, %v4421
    %4438 = vst.msk [vmem:[%s7 + $0x30] sm:$0xff] %vm244, %v4422
    %4439 = vst.msk [vmem:[%s7 + $0x38] sm:$0xff] %vm244, %v4423
    %4440 = vst.msk [vmem:[%s7 + $0x40] sm:$0xff] %vm244, %v4424
    %4441 = vst.msk [vmem:[%s7 + $0x48] sm:$0xff] %vm244, %v4425
    %4442 = vst.msk [vmem:[%s7 + $0x50] sm:$0xff] %vm244, %v4426
    %4443 = vst.msk [vmem:[%s7 + $0x58] sm:$0xff] %vm244, %v4427
    %4444 = vst.msk [vmem:[%s7 + $0x60] sm:$0xff] %vm244, %v4428
    %4445 = vst.msk [vmem:[%s7 + $0x68] sm:$0xff] %vm244, %v4429
    %4446 = vst.msk [vmem:[%s7 + $0x70] sm:$0xff] %vm244, %v4430
    %4447 = vst.msk [vmem:[%s7 + $0x78] sm:$0xff] %vm244, %v4431
    // Predicated region
    $region34: #{tpu_custom_call.1} parent=1 // pred_check
      _
    $region35: #{tpu_custom_call.1} parent=1 // pred_check_branch
      %4449 = sbr.rel (0) target = $region37
    $region36: #{tpu_custom_call.1} parent=1 // pred_region
      _
    $region37: #{tpu_custom_call.1} parent=1 // pred_fallthru
      _
    // Predicated region
    $region38: #{tpu_custom_call.1} parent=1 // pred_check
      _
    $region39: #{tpu_custom_call.1} parent=1 // pred_check_branch
      %4451 = sbr.rel (0) target = $region41
    $region40: #{tpu_custom_call.1} parent=1 // pred_region
      _
    $region41: #{tpu_custom_call.1} parent=1 // pred_fallthru
      _
    %4452 = vsyncpa [#allocation5], 1

</llo_original>
